<compile_context>
chip_gen: v7x
topology: tpu7x:2x2x1
jax: 0.10.0
libtpu: 0.0.40
codegen_flags: <defaults>
</compile_context>

<pallas_src>
import functools

import jax
import jax.numpy as jnp
from jax.experimental import pallas as pl
from jax.experimental.pallas import tpu as pltpu

LANE = 128             # channel axis is padded to a multiple of the lane width
MAX_TM = 512           # GEMM row-tile cap
MAX_TN = 256           # GEMM column-tile cap (fills the 256-wide MXU on v6e/v7x)
MAX_TK = 1024          # GEMM reduction-tile cap (full-K resident when K <= 1024)
MAX_TM_ELTWISE = 2048  # elementwise row-tile cap
BN_EPS = 1e-5


# ------------------------------ small helpers -------------------------------

def _round_up(x, m):
    return (x + m - 1) // m * m


def _pick_tile(dim, max_tile, mult):
    """Largest t <= max_tile with t % mult == 0 and dim % t == 0, else None."""
    best = None
    t = mult
    limit = min(dim, max_tile)
    while t <= limit:
        if dim % t == 0:
            best = t
        t += mult
    return best


def _pad_axis(a, axis, target):
    if a.shape[axis] == target:
        return a
    pad = [(0, 0)] * a.ndim
    pad[axis] = (0, target - a.shape[axis])
    return jnp.pad(a, pad)


# --------------------------- direct (halo) 3x3x3 conv ------------------------

def _direct_conv_kernel(x0_ref, x1_ref, x2_ref, w_ref, z_ref, st_ref, *, H, W):
    """One (batch, output-depth) step of a stride-1, pad-1 3x3x3 conv.

    x*_ref : ((H+2)*W, 3*C) bf16  kw-folded input plane at depth d+kd
    w_ref  : (9, 3*C, Cout) bf16  row kd*3+kh, columns ordered kw-major x Cin
    z_ref  : (H*W, Cout)    bf16  conv output plane
    st_ref : (2, Cout)      f32   column sums of z and z*z (for BatchNorm)
    """
    HW = H * W
    acc = jnp.zeros((HW, z_ref.shape[-1]), jnp.float32)
    for kd, x_ref in enumerate((x0_ref, x1_ref, x2_ref)):
        for kh in range(3):
            lhs = x_ref[kh * W: kh * W + HW, :]          # contiguous row window
            acc = acc + jnp.dot(lhs, w_ref[kd * 3 + kh],
                                preferred_element_type=jnp.float32)
    z_ref[...] = acc.astype(z_ref.dtype)
    st_ref[0:1, :] = jnp.sum(acc, axis=0, keepdims=True)
    st_ref[1:2, :] = jnp.sum(acc * acc, axis=0, keepdims=True)


def direct_conv3d(x, wfold):
    """Stride-1 3x3x3 conv as a halo kernel (no 27x im2col matrix in HBM).

    x     : (N, D, H, W, C) bf16, C a multiple of 128
    wfold : (9, 3*C, Cout) bf16
    Returns z: (N*D*H*W, Cout) bf16 and stats: (2, Cout) f32 column sums.
    """
    N, D, H, W, C = x.shape
    Cout = wfold.shape[-1]
    # Halo pad + fold the kw taps into channels (3x duplication, vs 27x for
    # full im2col).  kd is handled by three depth-shifted views, kh by
    # contiguous row windows inside the kernel.
    xp = jnp.pad(x, ((0, 0), (1, 1), (1, 1), (1, 1), (0, 0)))
    xw = jnp.concatenate([xp[:, :, :, kw:kw + W, :] for kw in range(3)], axis=-1)
    xw = xw.reshape(N, D + 2, (H + 2) * W, 3 * C)

    kernel = functools.partial(_direct_conv_kernel, H=H, W=W)
    slab = ((H + 2) * W, 3 * C)
    z, stats = pl.pallas_call(
        kernel,
        out_shape=(jax.ShapeDtypeStruct((N, D, H * W, Cout), jnp.bfloat16),
                   jax.ShapeDtypeStruct((N, D, 2, Cout), jnp.float32)),
        grid_spec=pltpu.PrefetchScalarGridSpec(
            num_scalar_prefetch=0,
            grid=(N, D),
            in_specs=[
                pl.BlockSpec((None, None) + slab, lambda n, d: (n, d, 0, 0)),
                pl.BlockSpec((None, None) + slab, lambda n, d: (n, d + 1, 0, 0)),
                pl.BlockSpec((None, None) + slab, lambda n, d: (n, d + 2, 0, 0)),
                pl.BlockSpec(wfold.shape, lambda n, d: (0, 0, 0)),
            ],
            out_specs=[
                pl.BlockSpec((None, None, H * W, Cout), lambda n, d: (n, d, 0, 0)),
                pl.BlockSpec((None, None, 2, Cout), lambda n, d: (n, d, 0, 0)),
            ],
        ),
        compiler_params=pltpu.CompilerParams(
            dimension_semantics=("parallel", "parallel"),
            vmem_limit_bytes=40 * 1024 * 1024),   # headroom on v7x's 64 MiB VMEM
    )(xw, xw, xw, wfold)
    stats = jnp.sum(stats, axis=(0, 1))           # (2, Cout), tiny reduction
    return z.reshape(N * D * H * W, Cout), stats


# --------------------- im2col GEMM (stride!=1 conv1 + skip) ------------------

def _conv_gemm_kernel(a_ref, w_ref, b_ref, o_ref, st_ref, acc_ref):
    """Tiled GEMM with f32 accumulator, bias folded in place and BN statistics
    taken from the f32 accumulator in the epilogue; bf16 output store."""
    @pl.when(pl.program_id(2) == 0)
    def _():
        acc_ref[...] = jnp.zeros_like(acc_ref)

    acc_ref[...] += jnp.dot(a_ref[...], w_ref[...],
                            preferred_element_type=jnp.float32)

    @pl.when(pl.program_id(2) == pl.num_programs(2) - 1)
    def _():
        acc_ref[...] += b_ref[...]
        z = acc_ref[...]
        o_ref[...] = z.astype(o_ref.dtype)
        st_ref[0:1, :] = jnp.sum(z, axis=0, keepdims=True)
        st_ref[1:2, :] = jnp.sum(z * z, axis=0, keepdims=True)


def conv_gemm(patches, w2d, bias_row):
    """im2col conv as a tiled GEMM with bf16 output and fused BN statistics.

    patches : (M, K) bf16    w2d : (K, n_cols) bf16    bias_row : (1, n_cols) f32
    Returns (out (Mp, n_cols) bf16, stats (2, n_cols) f32, Mp).

    BN statistics over padded rows stay exact because the bias of every
    BN-normalized column group is identically zero (it cancels against the
    batch mean), so padded rows contribute exactly 0 to both sums.
    """
    M, K = patches.shape
    n_cols = w2d.shape[1]

    # Pad the contraction axis to a lane multiple: aligned loads, full MXU rows.
    Kp = _round_up(K, LANE)
    if Kp != K:
        patches = jnp.pad(patches, ((0, 0), (0, Kp - K)))
        w2d = jnp.pad(w2d, ((0, Kp - K), (0, 0)))

    # Pad rows to a tile-friendly multiple instead of hoping for exact divisors.
    Mp = _round_up(M, 256) if M >= 512 else _round_up(M, 8)
    if Mp != M:
        patches = jnp.pad(patches, ((0, Mp - M), (0, 0)))

    tm = _pick_tile(Mp, MAX_TM, 8)
    if Mp // tm < 2:                             # keep both v7x TensorCores busy
        t2 = _pick_tile(Mp, max(Mp // 2, 8), 8)
        if t2 is not None:
            tm = t2
    tn = _pick_tile(n_cols, MAX_TN, LANE)        # spans the fused groups (gn=1)
    tk = _pick_tile(Kp, MAX_TK, LANE)            # full-K resident when K <= 1024
    gm, gn, gk = Mp // tm, n_cols // tn, Kp // tk

    out, stats = pl.pallas_call(
        _conv_gemm_kernel,
        out_shape=(jax.ShapeDtypeStruct((Mp, n_cols), jnp.bfloat16),
                   jax.ShapeDtypeStruct((gm, 2, n_cols), jnp.float32)),
        grid_spec=pltpu.PrefetchScalarGridSpec(
            num_scalar_prefetch=0,
            grid=(gm, gn, gk),
            in_specs=[
                pl.BlockSpec((tm, tk), lambda i, j, k: (i, k)),
                pl.BlockSpec((tk, tn), lambda i, j, k: (k, j)),
                pl.BlockSpec((1, tn), lambda i, j, k: (0, j)),
            ],
            out_specs=[
                pl.BlockSpec((tm, tn), lambda i, j, k: (i, j)),
                pl.BlockSpec((None, 2, tn), lambda i, j, k: (i, 0, j)),
            ],
            scratch_shapes=[pltpu.VMEM((tm, tn), jnp.float32)],
        ),
        compiler_params=pltpu.CompilerParams(
            dimension_semantics=("parallel", "parallel", "arbitrary")),
    )(patches, w2d, bias_row)

    return out, jnp.sum(stats, axis=0), Mp


# ------------------------ BatchNorm + ReLU (+ residual) ----------------------

def _bn_relu_kernel(z_ref, sc_ref, sh_ref, o_ref):
    y = z_ref[...].astype(jnp.float32) * sc_ref[...] + sh_ref[...]
    o_ref[...] = jnp.maximum(y, 0.0).astype(o_ref.dtype)


def _bn_relu_res_kernel(z_ref, sc_ref, sh_ref, r_ref, o_ref):
    y = z_ref[...].astype(jnp.float32) * sc_ref[...] + sh_ref[...]
    y = jnp.maximum(y, 0.0) + r_ref[...].astype(jnp.float32)
    o_ref[...] = y.astype(o_ref.dtype)


def batchnorm_relu(z, z_col, s1, s2, count, gamma, beta, out_rows, cp,
                   residual=None, res_col=0):
    """Training-mode BN (batch stats, biased var) + ReLU [+ residual add].

    `z` (and the optional `residual`) may be wider/taller arrays: the kernel
    reads column block `*_col` (width cp) of the first `out_rows` rows, so the
    fused conv1+skip GEMM output never needs to be sliced in XLA.
    Returns a bf16 (out_rows, cp) array.
    """
    # TODO(synk): E[z^2]-E[z]^2 in f32 can cancel for very large M; switch to a
    # per-tile-centered (two-level) stats accumulation if that regime matters.
    mean = s1 / count
    var = jnp.maximum(s2 / count - mean * mean, 0.0)
    inv = gamma / jnp.sqrt(var + BN_EPS)
    scale = inv.reshape(1, -1).astype(jnp.float32)
    shift = (beta - mean * inv).reshape(1, -1).astype(jnp.float32)

    M = out_rows
    if M % 8 != 0:
        # Awkward row counts: materialize exact-size slices so one full block is legal.
        z = z[:M, z_col * cp:(z_col + 1) * cp]
        z_col = 0
        if residual is not None:
            residual = residual[:M, res_col * cp:(res_col + 1) * cp]
            res_col = 0
        tm = M
    else:
        tm = _pick_tile(M, MAX_TM_ELTWISE, 8)
        if tm == M and M % 16 == 0:
            tm = M // 2                        # >=2 parallel blocks for v7x
    grid = (M // tm,)

    z_spec = pl.BlockSpec((tm, cp), lambda i: (i, z_col))
    vec_spec = pl.BlockSpec((1, cp), lambda i: (0, 0))
    out_spec = pl.BlockSpec((tm, cp), lambda i: (i, 0))
    out_shape = jax.ShapeDtypeStruct((M, cp), jnp.bfloat16)
    cparams = pltpu.CompilerParams(dimension_semantics=("parallel",))

    if residual is None:
        return pl.pallas_call(
            _bn_relu_kernel,
            out_shape=out_shape,
            grid_spec=pltpu.PrefetchScalarGridSpec(
                num_scalar_prefetch=0, grid=grid,
                in_specs=[z_spec, vec_spec, vec_spec],
                out_specs=out_spec),
            compiler_params=cparams,
        )(z, scale, shift)

    res_spec = pl.BlockSpec((tm, cp), lambda i: (i, res_col))
    return pl.pallas_call(
        _bn_relu_res_kernel,
        out_shape=out_shape,
        grid_spec=pltpu.PrefetchScalarGridSpec(
            num_scalar_prefetch=0, grid=grid,
            in_specs=[z_spec, vec_spec, vec_spec, res_spec],
            out_specs=out_spec),
        compiler_params=cparams,
    )(z, scale, shift, residual)


# ----------------------------- glue (im2col etc.) ----------------------------

def im2col_3d(x, ksize=3, pad=1, stride=1):
    """x: (N, D, H, W, C) -> ((N*Do*Ho*Wo, ksize^3*C), (N, Do, Ho, Wo))."""
    N, D, H, W, C = x.shape
    xp = jnp.pad(x, ((0, 0), (pad, pad), (pad, pad), (pad, pad), (0, 0)))
    Do = (D + 2 * pad - ksize) // stride + 1
    Ho = (H + 2 * pad - ksize) // stride + 1
    Wo = (W + 2 * pad - ksize) // stride + 1
    cols = []
    for kd in range(ksize):
        for kh in range(ksize):
            for kw in range(ksize):
                cols.append(xp[:, kd: kd + stride * Do: stride,
                               kh: kh + stride * Ho: stride,
                               kw: kw + stride * Wo: stride, :])
    cols = jnp.stack(cols, axis=4)              # (N, Do, Ho, Wo, k^3, C)
    return cols.reshape(N * Do * Ho * Wo, ksize ** 3 * C), (N, Do, Ho, Wo)


# -------------------------------- parameters ---------------------------------

def init_layer_params(key, in_channels, out_channels, stride):
    ks = jax.random.split(key, 10)

    def conv_w(k, cin, cout):
        # stored as (kd, kh, kw, Cin, Cout); equivalent to the PyTorch weight
        # (Cout, Cin, kd, kh, kw) transposed to (2, 3, 4, 1, 0).
        return jax.random.normal(k, (3, 3, 3, cin, cout), jnp.float32) * 0.05

    p = {
        "w1": conv_w(ks[0], in_channels, out_channels),
        # b1/b2 exist in the PyTorch module but a per-channel bias applied
        # immediately before training-mode BatchNorm cancels exactly.
        "b1": jax.random.normal(ks[1], (out_channels,), jnp.float32) * 0.01,
        "g1": 1.0 + 0.01 * jax.random.normal(ks[2], (out_channels,), jnp.float32),
        "be1": 0.01 * jax.random.normal(ks[3], (out_channels,), jnp.float32),
        "w2": conv_w(ks[4], out_channels, out_channels),
        "b2": jax.random.normal(ks[5], (out_channels,), jnp.float32) * 0.01,
        "g2": 1.0 + 0.01 * jax.random.normal(ks[6], (out_channels,), jnp.float32),
        "be2": 0.01 * jax.random.normal(ks[7], (out_channels,), jnp.float32),
    }
    if stride != 1:
        p["ws"] = conv_w(ks[8], in_channels, out_channels)
        p["bs"] = jax.random.normal(ks[9], (out_channels,), jnp.float32) * 0.01
    return p


def _fold_w(w, cin_pad, cout_pad):
    """(3,3,3,Cin,Cout) -> (9, 3*cin_pad, cout_pad) bf16 for the direct conv
    (row = kd*3+kh, columns ordered kw-major then input channel)."""
    w = _pad_axis(w, 3, cin_pad)
    w = _pad_axis(w, 4, cout_pad)
    return w.reshape(9, 3 * cin_pad, cout_pad).astype(jnp.bfloat16)


def _im2col_w(w, cout_pad):
    """(3,3,3,Cin,Cout) -> (27*Cin, cout_pad) bf16, matching im2col_3d columns."""
    w = _pad_axis(w, 4, cout_pad)
    return w.reshape(-1, cout_pad).astype(jnp.bfloat16)


def prepare_layer_params(raw, cp, stride):
    """Pre-pad / pre-reshape weights once (outside the jitted forward)."""
    p = {"w2f": _fold_w(raw["w2"], cp, cp),
         "g1": _pad_axis(raw["g1"], 0, cp), "be1": _pad_axis(raw["be1"], 0, cp),
         "g2": _pad_axis(raw["g2"], 0, cp), "be2": _pad_axis(raw["be2"], 0, cp)}
    if stride == 1:
        p["w1f"] = _fold_w(raw["w1"], cp, cp)
    else:
        # conv1 and the (3x3x3, pad 1, same-stride) skip conv share im2col
        # patches -> fuse into one GEMM with columns [conv1 | skip].
        p["wg"] = jnp.concatenate(
            [_im2col_w(raw["w1"], cp), _im2col_w(raw["ws"], cp)], axis=1)
        p["bg"] = jnp.concatenate(
            [jnp.zeros((cp,), jnp.float32), _pad_axis(raw["bs"], 0, cp)]
        ).reshape(1, 2 * cp)
    return p


def init_resblock_params(key, nums_layers, in_channels, out_channels, stride=2):
    cp = _round_up(out_channels, LANE)
    if stride == 1:
        assert in_channels == out_channels, "identity skip needs Cin == Cout"
    keys = jax.random.split(key, nums_layers + 1)
    params = [prepare_layer_params(
        init_layer_params(keys[0], in_channels, out_channels, stride), cp, stride)]
    strides = [stride]
    for i in range(nums_layers):
        params.append(prepare_layer_params(
            init_layer_params(keys[i + 1], out_channels, out_channels, 1), cp, 1))
        strides.append(1)
    return params, tuple(strides)


# --------------------------- module: Layer / ResBlock ------------------------

def layer_forward(x, lp, stride):
    """x: (N, D, H, W, Cx) bf16 -> (N, Do, Ho, Wo, cp) bf16.

    out = skip + relu(bn2(conv2(relu(bn1(conv1(x)))))), matching PyTorch `Layer`.
    """
    cp = lp["w2f"].shape[-1]
    N, D, H, W, _ = x.shape

    if stride == 1:
        Do, Ho, Wo = D, H, W
        M = N * Do * Ho * Wo
        z1, st1 = direct_conv3d(x, lp["w1f"])                    # (M, cp) bf16
        h1 = batchnorm_relu(z1, 0, st1[0], st1[1], M,
                            lp["g1"], lp["be1"], M, cp)
        res_arr, res_col = x.reshape(M, cp), 0                   # identity skip
    else:
        patches, (_, Do, Ho, Wo) = im2col_3d(x, stride=stride)
        M = N * Do * Ho * Wo
        # fused conv1+skip GEMM: columns [0:cp] = conv1 (bias-free), [cp:2cp] = skip
        zwide, stw, _ = conv_gemm(patches, lp["wg"], lp["bg"])
        h1 = batchnorm_relu(zwide, 0, stw[0, :cp], stw[1, :cp], M,
                            lp["g1"], lp["be1"], M, cp)
        res_arr, res_col = zwide, 1

    # conv2 (stride 1) as a direct halo conv
    z2, st2 = direct_conv3d(h1.reshape(N, Do, Ho, Wo, cp), lp["w2f"])
    # out = skip + relu(bn2(conv2(...)))
    y = batchnorm_relu(z2, 0, st2[0], st2[1], M, lp["g2"], lp["be2"], M, cp,
                       residual=res_arr, res_col=res_col)
    return y.reshape(N, Do, Ho, Wo, cp)


def resblock_forward(x_ncdhw, params, strides, out_channels):
    # PyTorch NCDHW -> kernel NDHWC, bf16 activations (f32 GEMM accumulation)
    x = jnp.transpose(x_ncdhw, (0, 2, 3, 4, 1)).astype(jnp.bfloat16)
    cp = params[0]["w2f"].shape[-1]
    if strides[0] == 1 and x.shape[-1] != cp:
        x = _pad_axis(x, 4, cp)   # identity-skip path needs lane-padded channels
    for lp, s in zip(params, strides):
        x = layer_forward(x, lp, s)
    # drop the lane padding once, at the very end, and go back to NCDHW / f32
    y = x[..., :out_channels].astype(jnp.float32)
    return jnp.transpose(y, (0, 4, 1, 2, 3))


# ------------------------------------ main -----------------------------------

if __name__ == "__main__":
    key = jax.random.PRNGKey(0)
    k_x, k_p = jax.random.split(key)

    # small shapes: N=2, Cin=4, D=H=W=8, Cout=8, stride=2, nums_layers=1 (2 Layers)
    N, Cin, D, H, W = 2, 4, 8, 8, 8
    Cout, stride, nums_layers = 8, 2, 1

    x = jax.random.normal(k_x, (N, Cin, D, H, W), jnp.float32)
    params, strides = init_resblock_params(k_p, nums_layers, Cin, Cout, stride)

    fwd = jax.jit(functools.partial(resblock_forward,
                                    strides=strides, out_channels=Cout))
    y = fwd(x, params)
    jax.block_until_ready(y)

    expected_shape = (N, Cout, D // stride, H // stride, W // stride)
    assert y.shape == expected_shape, (y.shape, expected_shape)
    assert bool(jnp.all(jnp.isfinite(y)))
    print("KERNEL_OK")
</pallas_src>

<mosaic_0001>
module attributes {stable_mosaic.version = 11 : i64} {
  func.func @_conv_gemm_kernel(%arg0: i32, %arg1: i32, %arg2: i32, %arg3: memref<64x128xbf16, #tpu.memory_space<vmem>>, %arg4: memref<128x256xbf16, #tpu.memory_space<vmem>>, %arg5: memref<1x256xf32, #tpu.memory_space<vmem>>, %arg6: memref<64x256xbf16, #tpu.memory_space<vmem>>, %arg7: memref<1x2x256xf32, #tpu.memory_space<vmem>>, %arg8: memref<64x256xf32, #tpu.memory_space<vmem>>) attributes {dimension_semantics = [#tpu.dimension_semantics<parallel>, #tpu.dimension_semantics<parallel>, #tpu.dimension_semantics<arbitrary>], iteration_bounds = array<i64: 2, 1, 1>, scalar_prefetch = 0 : i64, scratch_operands = 1 : i64, tpu.core_type = #tpu.core_type<tc>, window_params = [{transform_indices = @transform_0, window_bounds = array<i64: 64, 128>}, {transform_indices = @transform_1, window_bounds = array<i64: 128, 256>}, {transform_indices = @transform_2, window_bounds = array<i64: 1, 256>}, {transform_indices = @transform_3, window_bounds = array<i64: 64, 256>}, {transform_indices = @transform_4, window_bounds = array<i64: 1, 2, 256>}]} {
    %c0_i32 = arith.constant 0 : i32
    %0 = arith.cmpi eq, %arg2, %c0_i32 : i32
    %1 = arith.extui %0 : i1 to i32
    %c0_i32_0 = arith.constant 0 : i32
    %2 = arith.cmpi ne, %1, %c0_i32_0 : i32
    scf.if %2 {
      %cst_10 = arith.constant 0.000000e+00 : f32
      %12 = vector.broadcast %cst_10 : f32 to vector<64x256xf32>
      %c0_11 = arith.constant 0 : index
      %c0_12 = arith.constant 0 : index
      %13 = vector.load %arg8[%c0_11, %c0_12] : memref<64x256xf32, #tpu.memory_space<vmem>>, vector<64x256xf32>
      tpu.vector_store %arg8[%c0_11, %c0_12], %12 {strides = array<i32>} : memref<64x256xf32, #tpu.memory_space<vmem>>, vector<64x256xf32>,
    } else {
    }
    %c0 = arith.constant 0 : index
    %c0_1 = arith.constant 0 : index
    %3 = vector.load %arg8[%c0, %c0_1] : memref<64x256xf32, #tpu.memory_space<vmem>>, vector<64x256xf32>
    %c0_2 = arith.constant 0 : index
    %c0_3 = arith.constant 0 : index
    %4 = vector.load %arg3[%c0_2, %c0_3] : memref<64x128xbf16, #tpu.memory_space<vmem>>, vector<64x128xbf16>
    %c0_4 = arith.constant 0 : index
    %c0_5 = arith.constant 0 : index
    %5 = vector.load %arg4[%c0_4, %c0_5] : memref<128x256xbf16, #tpu.memory_space<vmem>>, vector<128x256xbf16>
    %cst = arith.constant dense<0.000000e+00> : vector<64x256xf32>
    %6 = tpu.matmul %4, %5, %cst {dimension_numbers = #tpu.dot_dimension_numbers<[1], [0], [0], [1], [0, 0, 1, 1], [], []>} : vector<64x128xbf16>, vector<128x256xbf16>, vector<64x256xf32> -> vector<64x256xf32>
    %7 = arith.addf %3, %6 : vector<64x256xf32>
    %c0_6 = arith.constant 0 : index
    %c0_7 = arith.constant 0 : index
    %8 = vector.load %arg8[%c0_6, %c0_7] : memref<64x256xf32, #tpu.memory_space<vmem>>, vector<64x256xf32>
    tpu.vector_store %arg8[%c0_6, %c0_7], %7 {strides = array<i32>} : memref<64x256xf32, #tpu.memory_space<vmem>>, vector<64x256xf32>,
    %c0_i32_8 = arith.constant 0 : i32
    %9 = arith.cmpi eq, %arg2, %c0_i32_8 : i32
    %10 = arith.extui %9 : i1 to i32
    %c0_i32_9 = arith.constant 0 : i32
    %11 = arith.cmpi ne, %10, %c0_i32_9 : i32
    scf.if %11 {
      %c0_10 = arith.constant 0 : index
      %c0_11 = arith.constant 0 : index
      %12 = vector.load %arg8[%c0_10, %c0_11] : memref<64x256xf32, #tpu.memory_space<vmem>>, vector<64x256xf32>
      %c0_12 = arith.constant 0 : index
      %c0_13 = arith.constant 0 : index
      %13 = vector.load %arg5[%c0_12, %c0_13] : memref<1x256xf32, #tpu.memory_space<vmem>>, vector<1x256xf32>
      %14 = vector.broadcast %13 : vector<1x256xf32> to vector<64x256xf32>
      %15 = arith.addf %12, %14 : vector<64x256xf32>
      %c0_14 = arith.constant 0 : index
      %c0_15 = arith.constant 0 : index
      %16 = vector.load %arg8[%c0_14, %c0_15] : memref<64x256xf32, #tpu.memory_space<vmem>>, vector<64x256xf32>
      tpu.vector_store %arg8[%c0_14, %c0_15], %15 {strides = array<i32>} : memref<64x256xf32, #tpu.memory_space<vmem>>, vector<64x256xf32>,
      %c0_16 = arith.constant 0 : index
      %c0_17 = arith.constant 0 : index
      %17 = vector.load %arg8[%c0_16, %c0_17] : memref<64x256xf32, #tpu.memory_space<vmem>>, vector<64x256xf32>
      %18 = arith.truncf %17 : vector<64x256xf32> to vector<64x256xbf16>
      %c0_18 = arith.constant 0 : index
      %c0_19 = arith.constant 0 : index
      %19 = vector.load %arg6[%c0_18, %c0_19] : memref<64x256xbf16, #tpu.memory_space<vmem>>, vector<64x256xbf16>
      tpu.vector_store %arg6[%c0_18, %c0_19], %18 {strides = array<i32>} : memref<64x256xbf16, #tpu.memory_space<vmem>>, vector<64x256xbf16>,
      %cst_20 = arith.constant dense<0.000000e+00> : vector<256xf32>
      %20 = vector.multi_reduction <add>, %17, %cst_20 [0] : vector<64x256xf32> to vector<256xf32>
      %21 = vector.shape_cast %20 : vector<256xf32> to vector<1x256xf32>
      %c0_21 = arith.constant 0 : index
      %c0_22 = arith.constant 0 : index
      %c0_23 = arith.constant 0 : index
      %22 = vector.load %arg7[%c0_21, %c0_22, %c0_23] : memref<1x2x256xf32, #tpu.memory_space<vmem>>, vector<1x1x256xf32>
      %23 = vector.shape_cast %22 : vector<1x1x256xf32> to vector<1x256xf32>
      %24 = vector.shape_cast %21 : vector<1x256xf32> to vector<1x1x256xf32>
      tpu.vector_store %arg7[%c0_21, %c0_22, %c0_23], %24 {strides = array<i32>} : memref<1x2x256xf32, #tpu.memory_space<vmem>>, vector<1x1x256xf32>,
      %25 = arith.mulf %17, %17 : vector<64x256xf32>
      %cst_24 = arith.constant dense<0.000000e+00> : vector<256xf32>
      %26 = vector.multi_reduction <add>, %25, %cst_24 [0] : vector<64x256xf32> to vector<256xf32>
      %27 = vector.shape_cast %26 : vector<256xf32> to vector<1x256xf32>
      %c0_25 = arith.constant 0 : index
      %c1 = arith.constant 1 : index
      %c0_26 = arith.constant 0 : index
      %28 = vector.load %arg7[%c0_25, %c1, %c0_26] : memref<1x2x256xf32, #tpu.memory_space<vmem>>, vector<1x1x256xf32>
      %29 = vector.shape_cast %28 : vector<1x1x256xf32> to vector<1x256xf32>
      %30 = vector.shape_cast %27 : vector<1x256xf32> to vector<1x1x256xf32>
      tpu.vector_store %arg7[%c0_25, %c1, %c0_26], %30 {strides = array<i32>} : memref<1x2x256xf32, #tpu.memory_space<vmem>>, vector<1x1x256xf32>,
    } else {
    }
    return
  }
  func.func @transform_0(%arg0: i32, %arg1: i32, %arg2: i32) -> (i32, i32) {
    %c0_i32 = arith.constant 0 : i32
    return %arg0, %arg2 : i32, i32
  }
  func.func @transform_1(%arg0: i32, %arg1: i32, %arg2: i32) -> (i32, i32) {
    %c0_i32 = arith.constant 0 : i32
    return %arg2, %arg1 : i32, i32
  }
  func.func @transform_2(%arg0: i32, %arg1: i32, %arg2: i32) -> (i32, i32) {
    %c0_i32 = arith.constant 0 : i32
    %c0_i32_0 = arith.constant 0 : i32
    return %c0_i32, %arg1 : i32, i32
  }
  func.func @transform_3(%arg0: i32, %arg1: i32, %arg2: i32) -> (i32, i32) {
    %c0_i32 = arith.constant 0 : i32
    return %arg0, %arg1 : i32, i32
  }
  func.func @transform_4(%arg0: i32, %arg1: i32, %arg2: i32) -> (i32, i32, i32) {
    %c0_i32 = arith.constant 0 : i32
    %c0_i32_0 = arith.constant 0 : i32
    return %arg0, %c0_i32, %arg1 : i32, i32, i32
  }
}

module attributes {stable_mosaic.version = 11 : i64} {
  func.func @_bn_relu_kernel(%arg0: i32, %arg1: memref<64x128xbf16, #tpu.memory_space<vmem>>, %arg2: memref<1x128xf32, #tpu.memory_space<vmem>>, %arg3: memref<1x128xf32, #tpu.memory_space<vmem>>, %arg4: memref<64x128xbf16, #tpu.memory_space<vmem>>) attributes {dimension_semantics = [#tpu.dimension_semantics<parallel>], iteration_bounds = array<i64: 2>, scalar_prefetch = 0 : i64, scratch_operands = 0 : i64, tpu.core_type = #tpu.core_type<tc>, window_params = [{transform_indices = @transform_0, window_bounds = array<i64: 64, 128>}, {pipeline_mode = #tpu.pipeline_mode<synchronous>, transform_indices = @transform_1, window_bounds = array<i64: 1, 128>}, {pipeline_mode = #tpu.pipeline_mode<synchronous>, transform_indices = @transform_2, window_bounds = array<i64: 1, 128>}, {transform_indices = @transform_3, window_bounds = array<i64: 64, 128>}]} {
    %c0 = arith.constant 0 : index
    %c0_0 = arith.constant 0 : index
    %0 = vector.load %arg1[%c0, %c0_0] : memref<64x128xbf16, #tpu.memory_space<vmem>>, vector<64x128xbf16>
    %1 = arith.extf %0 : vector<64x128xbf16> to vector<64x128xf32>
    %c0_1 = arith.constant 0 : index
    %c0_2 = arith.constant 0 : index
    %2 = vector.load %arg2[%c0_1, %c0_2] : memref<1x128xf32, #tpu.memory_space<vmem>>, vector<1x128xf32>
    %3 = vector.broadcast %2 : vector<1x128xf32> to vector<64x128xf32>
    %4 = arith.mulf %1, %3 : vector<64x128xf32>
    %c0_3 = arith.constant 0 : index
    %c0_4 = arith.constant 0 : index
    %5 = vector.load %arg3[%c0_3, %c0_4] : memref<1x128xf32, #tpu.memory_space<vmem>>, vector<1x128xf32>
    %6 = vector.broadcast %5 : vector<1x128xf32> to vector<64x128xf32>
    %7 = arith.addf %4, %6 : vector<64x128xf32>
    %cst = arith.constant 0.000000e+00 : f32
    %8 = vector.broadcast %cst : f32 to vector<64x128xf32>
    %9 = arith.maximumf %7, %8 : vector<64x128xf32>
    %10 = arith.truncf %9 : vector<64x128xf32> to vector<64x128xbf16>
    %c0_5 = arith.constant 0 : index
    %c0_6 = arith.constant 0 : index
    %11 = vector.load %arg4[%c0_5, %c0_6] : memref<64x128xbf16, #tpu.memory_space<vmem>>, vector<64x128xbf16>
    tpu.vector_store %arg4[%c0_5, %c0_6], %10 {strides = array<i32>} : memref<64x128xbf16, #tpu.memory_space<vmem>>, vector<64x128xbf16>,
    return
  }
  func.func @transform_0(%arg0: i32) -> (i32, i32) {
    %c0_i32 = arith.constant 0 : i32
    %c0_i32_0 = arith.constant 0 : i32
    return %arg0, %c0_i32 : i32, i32
  }
  func.func @transform_1(%arg0: i32) -> (i32, i32) {
    %c0_i32 = arith.constant 0 : i32
    %c0_i32_0 = arith.constant 0 : i32
    %c0_i32_1 = arith.constant 0 : i32
    return %c0_i32, %c0_i32_0 : i32, i32
  }
  func.func @transform_2(%arg0: i32) -> (i32, i32) {
    %c0_i32 = arith.constant 0 : i32
    %c0_i32_0 = arith.constant 0 : i32
    %c0_i32_1 = arith.constant 0 : i32
    return %c0_i32, %c0_i32_0 : i32, i32
  }
  func.func @transform_3(%arg0: i32) -> (i32, i32) {
    %c0_i32 = arith.constant 0 : i32
    %c0_i32_0 = arith.constant 0 : i32
    return %arg0, %c0_i32 : i32, i32
  }
}

module attributes {stable_mosaic.version = 11 : i64} {
  func.func @_direct_conv_kernel(%arg0: i32, %arg1: i32, %arg2: memref<1x1x24x384xbf16, #tpu.memory_space<vmem>>, %arg3: memref<1x1x24x384xbf16, #tpu.memory_space<vmem>>, %arg4: memref<1x1x24x384xbf16, #tpu.memory_space<vmem>>, %arg5: memref<9x384x128xbf16, #tpu.memory_space<vmem>>, %arg6: memref<1x1x16x128xbf16, #tpu.memory_space<vmem>>, %arg7: memref<1x1x2x128xf32, #tpu.memory_space<vmem>>) attributes {dimension_semantics = [#tpu.dimension_semantics<parallel>, #tpu.dimension_semantics<parallel>], iteration_bounds = array<i64: 2, 4>, scalar_prefetch = 0 : i64, scratch_operands = 0 : i64, tpu.core_type = #tpu.core_type<tc>, window_params = [{transform_indices = @transform_0, window_bounds = array<i64: 1, 1, 24, 384>}, {transform_indices = @transform_1, window_bounds = array<i64: 1, 1, 24, 384>}, {transform_indices = @transform_2, window_bounds = array<i64: 1, 1, 24, 384>}, {pipeline_mode = #tpu.pipeline_mode<synchronous>, transform_indices = @transform_3, window_bounds = array<i64: 9, 384, 128>}, {transform_indices = @transform_4, window_bounds = array<i64: 1, 1, 16, 128>}, {transform_indices = @transform_5, window_bounds = array<i64: 1, 1, 2, 128>}]} {
    %cst = arith.constant 0.000000e+00 : f32
    %0 = vector.broadcast %cst : f32 to vector<16x128xf32>
    %c0 = arith.constant 0 : index
    %c0_0 = arith.constant 0 : index
    %c0_1 = arith.constant 0 : index
    %c0_2 = arith.constant 0 : index
    %1 = vector.load %arg2[%c0, %c0_0, %c0_1, %c0_2] : memref<1x1x24x384xbf16, #tpu.memory_space<vmem>>, vector<1x1x16x384xbf16>
    %2 = vector.shape_cast %1 : vector<1x1x16x384xbf16> to vector<16x384xbf16>
    %c0_3 = arith.constant 0 : index
    %c0_4 = arith.constant 0 : index
    %c0_5 = arith.constant 0 : index
    %3 = vector.load %arg5[%c0_3, %c0_4, %c0_5] : memref<9x384x128xbf16, #tpu.memory_space<vmem>>, vector<1x384x128xbf16>
    %4 = vector.shape_cast %3 : vector<1x384x128xbf16> to vector<384x128xbf16>
    %cst_6 = arith.constant dense<0.000000e+00> : vector<16x128xf32>
    %5 = tpu.matmul %2, %4, %cst_6 {dimension_numbers = #tpu.dot_dimension_numbers<[1], [0], [0], [1], [0, 0, 1, 1], [], []>} : vector<16x384xbf16>, vector<384x128xbf16>, vector<16x128xf32> -> vector<16x128xf32>
    %6 = arith.addf %0, %5 : vector<16x128xf32>
    %c0_7 = arith.constant 0 : index
    %c0_8 = arith.constant 0 : index
    %c4 = arith.constant 4 : index
    %c0_9 = arith.constant 0 : index
    %7 = vector.load %arg2[%c0_7, %c0_8, %c4, %c0_9] : memref<1x1x24x384xbf16, #tpu.memory_space<vmem>>, vector<1x1x16x384xbf16>
    %8 = vector.shape_cast %7 : vector<1x1x16x384xbf16> to vector<16x384xbf16>
    %c1 = arith.constant 1 : index
    %c0_10 = arith.constant 0 : index
    %c0_11 = arith.constant 0 : index
    %9 = vector.load %arg5[%c1, %c0_10, %c0_11] : memref<9x384x128xbf16, #tpu.memory_space<vmem>>, vector<1x384x128xbf16>
    %10 = vector.shape_cast %9 : vector<1x384x128xbf16> to vector<384x128xbf16>
    %cst_12 = arith.constant dense<0.000000e+00> : vector<16x128xf32>
    %11 = tpu.matmul %8, %10, %cst_12 {dimension_numbers = #tpu.dot_dimension_numbers<[1], [0], [0], [1], [0, 0, 1, 1], [], []>} : vector<16x384xbf16>, vector<384x128xbf16>, vector<16x128xf32> -> vector<16x128xf32>
    %12 = arith.addf %6, %11 : vector<16x128xf32>
    %c0_13 = arith.constant 0 : index
    %c0_14 = arith.constant 0 : index
    %c8 = arith.constant 8 : index
    %c0_15 = arith.constant 0 : index
    %13 = vector.load %arg2[%c0_13, %c0_14, %c8, %c0_15] : memref<1x1x24x384xbf16, #tpu.memory_space<vmem>>, vector<1x1x16x384xbf16>
    %14 = vector.shape_cast %13 : vector<1x1x16x384xbf16> to vector<16x384xbf16>
    %c2 = arith.constant 2 : index
    %c0_16 = arith.constant 0 : index
    %c0_17 = arith.constant 0 : index
    %15 = vector.load %arg5[%c2, %c0_16, %c0_17] : memref<9x384x128xbf16, #tpu.memory_space<vmem>>, vector<1x384x128xbf16>
    %16 = vector.shape_cast %15 : vector<1x384x128xbf16> to vector<384x128xbf16>
    %cst_18 = arith.constant dense<0.000000e+00> : vector<16x128xf32>
    %17 = tpu.matmul %14, %16, %cst_18 {dimension_numbers = #tpu.dot_dimension_numbers<[1], [0], [0], [1], [0, 0, 1, 1], [], []>} : vector<16x384xbf16>, vector<384x128xbf16>, vector<16x128xf32> -> vector<16x128xf32>
    %18 = arith.addf %12, %17 : vector<16x128xf32>
    %c0_19 = arith.constant 0 : index
    %c0_20 = arith.constant 0 : index
    %c0_21 = arith.constant 0 : index
    %c0_22 = arith.constant 0 : index
    %19 = vector.load %arg3[%c0_19, %c0_20, %c0_21, %c0_22] : memref<1x1x24x384xbf16, #tpu.memory_space<vmem>>, vector<1x1x16x384xbf16>
    %20 = vector.shape_cast %19 : vector<1x1x16x384xbf16> to vector<16x384xbf16>
    %c3 = arith.constant 3 : index
    %c0_23 = arith.constant 0 : index
    %c0_24 = arith.constant 0 : index
    %21 = vector.load %arg5[%c3, %c0_23, %c0_24] : memref<9x384x128xbf16, #tpu.memory_space<vmem>>, vector<1x384x128xbf16>
    %22 = vector.shape_cast %21 : vector<1x384x128xbf16> to vector<384x128xbf16>
    %cst_25 = arith.constant dense<0.000000e+00> : vector<16x128xf32>
    %23 = tpu.matmul %20, %22, %cst_25 {dimension_numbers = #tpu.dot_dimension_numbers<[1], [0], [0], [1], [0, 0, 1, 1], [], []>} : vector<16x384xbf16>, vector<384x128xbf16>, vector<16x128xf32> -> vector<16x128xf32>
    %24 = arith.addf %18, %23 : vector<16x128xf32>
    %c0_26 = arith.constant 0 : index
    %c0_27 = arith.constant 0 : index
    %c4_28 = arith.constant 4 : index
    %c0_29 = arith.constant 0 : index
    %25 = vector.load %arg3[%c0_26, %c0_27, %c4_28, %c0_29] : memref<1x1x24x384xbf16, #tpu.memory_space<vmem>>, vector<1x1x16x384xbf16>
    %26 = vector.shape_cast %25 : vector<1x1x16x384xbf16> to vector<16x384xbf16>
    %c4_30 = arith.constant 4 : index
    %c0_31 = arith.constant 0 : index
    %c0_32 = arith.constant 0 : index
    %27 = vector.load %arg5[%c4_30, %c0_31, %c0_32] : memref<9x384x128xbf16, #tpu.memory_space<vmem>>, vector<1x384x128xbf16>
    %28 = vector.shape_cast %27 : vector<1x384x128xbf16> to vector<384x128xbf16>
    %cst_33 = arith.constant dense<0.000000e+00> : vector<16x128xf32>
    %29 = tpu.matmul %26, %28, %cst_33 {dimension_numbers = #tpu.dot_dimension_numbers<[1], [0], [0], [1], [0, 0, 1, 1], [], []>} : vector<16x384xbf16>, vector<384x128xbf16>, vector<16x128xf32> -> vector<16x128xf32>
    %30 = arith.addf %24, %29 : vector<16x128xf32>
    %c0_34 = arith.constant 0 : index
    %c0_35 = arith.constant 0 : index
    %c8_36 = arith.constant 8 : index
    %c0_37 = arith.constant 0 : index
    %31 = vector.load %arg3[%c0_34, %c0_35, %c8_36, %c0_37] : memref<1x1x24x384xbf16, #tpu.memory_space<vmem>>, vector<1x1x16x384xbf16>
    %32 = vector.shape_cast %31 : vector<1x1x16x384xbf16> to vector<16x384xbf16>
    %c5 = arith.constant 5 : index
    %c0_38 = arith.constant 0 : index
    %c0_39 = arith.constant 0 : index
    %33 = vector.load %arg5[%c5, %c0_38, %c0_39] : memref<9x384x128xbf16, #tpu.memory_space<vmem>>, vector<1x384x128xbf16>
    %34 = vector.shape_cast %33 : vector<1x384x128xbf16> to vector<384x128xbf16>
    %cst_40 = arith.constant dense<0.000000e+00> : vector<16x128xf32>
    %35 = tpu.matmul %32, %34, %cst_40 {dimension_numbers = #tpu.dot_dimension_numbers<[1], [0], [0], [1], [0, 0, 1, 1], [], []>} : vector<16x384xbf16>, vector<384x128xbf16>, vector<16x128xf32> -> vector<16x128xf32>
    %36 = arith.addf %30, %35 : vector<16x128xf32>
    %c0_41 = arith.constant 0 : index
    %c0_42 = arith.constant 0 : index
    %c0_43 = arith.constant 0 : index
    %c0_44 = arith.constant 0 : index
    %37 = vector.load %arg4[%c0_41, %c0_42, %c0_43, %c0_44] : memref<1x1x24x384xbf16, #tpu.memory_space<vmem>>, vector<1x1x16x384xbf16>
    %38 = vector.shape_cast %37 : vector<1x1x16x384xbf16> to vector<16x384xbf16>
    %c6 = arith.constant 6 : index
    %c0_45 = arith.constant 0 : index
    %c0_46 = arith.constant 0 : index
    %39 = vector.load %arg5[%c6, %c0_45, %c0_46] : memref<9x384x128xbf16, #tpu.memory_space<vmem>>, vector<1x384x128xbf16>
    %40 = vector.shape_cast %39 : vector<1x384x128xbf16> to vector<384x128xbf16>
    %cst_47 = arith.constant dense<0.000000e+00> : vector<16x128xf32>
    %41 = tpu.matmul %38, %40, %cst_47 {dimension_numbers = #tpu.dot_dimension_numbers<[1], [0], [0], [1], [0, 0, 1, 1], [], []>} : vector<16x384xbf16>, vector<384x128xbf16>, vector<16x128xf32> -> vector<16x128xf32>
    %42 = arith.addf %36, %41 : vector<16x128xf32>
    %c0_48 = arith.constant 0 : index
    %c0_49 = arith.constant 0 : index
    %c4_50 = arith.constant 4 : index
    %c0_51 = arith.constant 0 : index
    %43 = vector.load %arg4[%c0_48, %c0_49, %c4_50, %c0_51] : memref<1x1x24x384xbf16, #tpu.memory_space<vmem>>, vector<1x1x16x384xbf16>
    %44 = vector.shape_cast %43 : vector<1x1x16x384xbf16> to vector<16x384xbf16>
    %c7 = arith.constant 7 : index
    %c0_52 = arith.constant 0 : index
    %c0_53 = arith.constant 0 : index
    %45 = vector.load %arg5[%c7, %c0_52, %c0_53] : memref<9x384x128xbf16, #tpu.memory_space<vmem>>, vector<1x384x128xbf16>
    %46 = vector.shape_cast %45 : vector<1x384x128xbf16> to vector<384x128xbf16>
    %cst_54 = arith.constant dense<0.000000e+00> : vector<16x128xf32>
    %47 = tpu.matmul %44, %46, %cst_54 {dimension_numbers = #tpu.dot_dimension_numbers<[1], [0], [0], [1], [0, 0, 1, 1], [], []>} : vector<16x384xbf16>, vector<384x128xbf16>, vector<16x128xf32> -> vector<16x128xf32>
    %48 = arith.addf %42, %47 : vector<16x128xf32>
    %c0_55 = arith.constant 0 : index
    %c0_56 = arith.constant 0 : index
    %c8_57 = arith.constant 8 : index
    %c0_58 = arith.constant 0 : index
    %49 = vector.load %arg4[%c0_55, %c0_56, %c8_57, %c0_58] : memref<1x1x24x384xbf16, #tpu.memory_space<vmem>>, vector<1x1x16x384xbf16>
    %50 = vector.shape_cast %49 : vector<1x1x16x384xbf16> to vector<16x384xbf16>
    %c8_59 = arith.constant 8 : index
    %c0_60 = arith.constant 0 : index
    %c0_61 = arith.constant 0 : index
    %51 = vector.load %arg5[%c8_59, %c0_60, %c0_61] : memref<9x384x128xbf16, #tpu.memory_space<vmem>>, vector<1x384x128xbf16>
    %52 = vector.shape_cast %51 : vector<1x384x128xbf16> to vector<384x128xbf16>
    %cst_62 = arith.constant dense<0.000000e+00> : vector<16x128xf32>
    %53 = tpu.matmul %50, %52, %cst_62 {dimension_numbers = #tpu.dot_dimension_numbers<[1], [0], [0], [1], [0, 0, 1, 1], [], []>} : vector<16x384xbf16>, vector<384x128xbf16>, vector<16x128xf32> -> vector<16x128xf32>
    %54 = arith.addf %48, %53 : vector<16x128xf32>
    %55 = arith.truncf %54 : vector<16x128xf32> to vector<16x128xbf16>
    %c0_63 = arith.constant 0 : index
    %c0_64 = arith.constant 0 : index
    %c0_65 = arith.constant 0 : index
    %c0_66 = arith.constant 0 : index
    %56 = vector.load %arg6[%c0_63, %c0_64, %c0_65, %c0_66] : memref<1x1x16x128xbf16, #tpu.memory_space<vmem>>, vector<1x1x16x128xbf16>
    %57 = vector.shape_cast %56 : vector<1x1x16x128xbf16> to vector<16x128xbf16>
    %58 = vector.shape_cast %55 : vector<16x128xbf16> to vector<1x1x16x128xbf16>
    tpu.vector_store %arg6[%c0_63, %c0_64, %c0_65, %c0_66], %58 {strides = array<i32>} : memref<1x1x16x128xbf16, #tpu.memory_space<vmem>>, vector<1x1x16x128xbf16>,
    %cst_67 = arith.constant dense<0.000000e+00> : vector<128xf32>
    %59 = vector.multi_reduction <add>, %54, %cst_67 [0] : vector<16x128xf32> to vector<128xf32>
    %60 = vector.shape_cast %59 : vector<128xf32> to vector<1x128xf32>
    %c0_68 = arith.constant 0 : index
    %c0_69 = arith.constant 0 : index
    %c0_70 = arith.constant 0 : index
    %c0_71 = arith.constant 0 : index
    %61 = vector.load %arg7[%c0_68, %c0_69, %c0_70, %c0_71] : memref<1x1x2x128xf32, #tpu.memory_space<vmem>>, vector<1x1x1x128xf32>
    %62 = vector.shape_cast %61 : vector<1x1x1x128xf32> to vector<1x128xf32>
    %63 = vector.shape_cast %60 : vector<1x128xf32> to vector<1x1x1x128xf32>
    tpu.vector_store %arg7[%c0_68, %c0_69, %c0_70, %c0_71], %63 {strides = array<i32>} : memref<1x1x2x128xf32, #tpu.memory_space<vmem>>, vector<1x1x1x128xf32>,
    %64 = arith.mulf %54, %54 : vector<16x128xf32>
    %cst_72 = arith.constant dense<0.000000e+00> : vector<128xf32>
    %65 = vector.multi_reduction <add>, %64, %cst_72 [0] : vector<16x128xf32> to vector<128xf32>
    %66 = vector.shape_cast %65 : vector<128xf32> to vector<1x128xf32>
    %c0_73 = arith.constant 0 : index
    %c0_74 = arith.constant 0 : index
    %c1_75 = arith.constant 1 : index
    %c0_76 = arith.constant 0 : index
    %67 = vector.load %arg7[%c0_73, %c0_74, %c1_75, %c0_76] : memref<1x1x2x128xf32, #tpu.memory_space<vmem>>, vector<1x1x1x128xf32>
    %68 = vector.shape_cast %67 : vector<1x1x1x128xf32> to vector<1x128xf32>
    %69 = vector.shape_cast %66 : vector<1x128xf32> to vector<1x1x1x128xf32>
    tpu.vector_store %arg7[%c0_73, %c0_74, %c1_75, %c0_76], %69 {strides = array<i32>} : memref<1x1x2x128xf32, #tpu.memory_space<vmem>>, vector<1x1x1x128xf32>,
    return
  }
  func.func @transform_0(%arg0: i32, %arg1: i32) -> (i32, i32, i32, i32) {
    %c0_i32 = arith.constant 0 : i32
    %c0_i32_0 = arith.constant 0 : i32
    %c0_i32_1 = arith.constant 0 : i32
    return %arg0, %arg1, %c0_i32, %c0_i32_0 : i32, i32, i32, i32
  }
  func.func @transform_1(%arg0: i32, %arg1: i32) -> (i32, i32, i32, i32) {
    %c1_i32 = arith.constant 1 : i32
    %0 = arith.addi %arg1, %c1_i32 : i32
    %c0_i32 = arith.constant 0 : i32
    %c0_i32_0 = arith.constant 0 : i32
    %c0_i32_1 = arith.constant 0 : i32
    return %arg0, %0, %c0_i32, %c0_i32_0 : i32, i32, i32, i32
  }
  func.func @transform_2(%arg0: i32, %arg1: i32) -> (i32, i32, i32, i32) {
    %c2_i32 = arith.constant 2 : i32
    %0 = arith.addi %arg1, %c2_i32 : i32
    %c0_i32 = arith.constant 0 : i32
    %c0_i32_0 = arith.constant 0 : i32
    %c0_i32_1 = arith.constant 0 : i32
    return %arg0, %0, %c0_i32, %c0_i32_0 : i32, i32, i32, i32
  }
  func.func @transform_3(%arg0: i32, %arg1: i32) -> (i32, i32, i32) {
    %c0_i32 = arith.constant 0 : i32
    %c0_i32_0 = arith.constant 0 : i32
    %c0_i32_1 = arith.constant 0 : i32
    %c0_i32_2 = arith.constant 0 : i32
    return %c0_i32, %c0_i32_0, %c0_i32_1 : i32, i32, i32
  }
  func.func @transform_4(%arg0: i32, %arg1: i32) -> (i32, i32, i32, i32) {
    %c0_i32 = arith.constant 0 : i32
    %c0_i32_0 = arith.constant 0 : i32
    %c0_i32_1 = arith.constant 0 : i32
    return %arg0, %arg1, %c0_i32, %c0_i32_0 : i32, i32, i32, i32
  }
  func.func @transform_5(%arg0: i32, %arg1: i32) -> (i32, i32, i32, i32) {
    %c0_i32 = arith.constant 0 : i32
    %c0_i32_0 = arith.constant 0 : i32
    %c0_i32_1 = arith.constant 0 : i32
    return %arg0, %arg1, %c0_i32, %c0_i32_0 : i32, i32, i32, i32
  }
}

module attributes {stable_mosaic.version = 11 : i64} {
  func.func @_bn_relu_res_kernel(%arg0: i32, %arg1: memref<64x128xbf16, #tpu.memory_space<vmem>>, %arg2: memref<1x128xf32, #tpu.memory_space<vmem>>, %arg3: memref<1x128xf32, #tpu.memory_space<vmem>>, %arg4: memref<64x128xbf16, #tpu.memory_space<vmem>>, %arg5: memref<64x128xbf16, #tpu.memory_space<vmem>>) attributes {dimension_semantics = [#tpu.dimension_semantics<parallel>], iteration_bounds = array<i64: 2>, scalar_prefetch = 0 : i64, scratch_operands = 0 : i64, tpu.core_type = #tpu.core_type<tc>, window_params = [{transform_indices = @transform_0, window_bounds = array<i64: 64, 128>}, {pipeline_mode = #tpu.pipeline_mode<synchronous>, transform_indices = @transform_1, window_bounds = array<i64: 1, 128>}, {pipeline_mode = #tpu.pipeline_mode<synchronous>, transform_indices = @transform_2, window_bounds = array<i64: 1, 128>}, {transform_indices = @transform_3, window_bounds = array<i64: 64, 128>}, {transform_indices = @transform_4, window_bounds = array<i64: 64, 128>}]} {
    %c0 = arith.constant 0 : index
    %c0_0 = arith.constant 0 : index
    %0 = vector.load %arg1[%c0, %c0_0] : memref<64x128xbf16, #tpu.memory_space<vmem>>, vector<64x128xbf16>
    %1 = arith.extf %0 : vector<64x128xbf16> to vector<64x128xf32>
    %c0_1 = arith.constant 0 : index
    %c0_2 = arith.constant 0 : index
    %2 = vector.load %arg2[%c0_1, %c0_2] : memref<1x128xf32, #tpu.memory_space<vmem>>, vector<1x128xf32>
    %3 = vector.broadcast %2 : vector<1x128xf32> to vector<64x128xf32>
    %4 = arith.mulf %1, %3 : vector<64x128xf32>
    %c0_3 = arith.constant 0 : index
    %c0_4 = arith.constant 0 : index
    %5 = vector.load %arg3[%c0_3, %c0_4] : memref<1x128xf32, #tpu.memory_space<vmem>>, vector<1x128xf32>
    %6 = vector.broadcast %5 : vector<1x128xf32> to vector<64x128xf32>
    %7 = arith.addf %4, %6 : vector<64x128xf32>
    %cst = arith.constant 0.000000e+00 : f32
    %8 = vector.broadcast %cst : f32 to vector<64x128xf32>
    %9 = arith.maximumf %7, %8 : vector<64x128xf32>
    %c0_5 = arith.constant 0 : index
    %c0_6 = arith.constant 0 : index
    %10 = vector.load %arg4[%c0_5, %c0_6] : memref<64x128xbf16, #tpu.memory_space<vmem>>, vector<64x128xbf16>
    %11 = arith.extf %10 : vector<64x128xbf16> to vector<64x128xf32>
    %12 = arith.addf %9, %11 : vector<64x128xf32>
    %13 = arith.truncf %12 : vector<64x128xf32> to vector<64x128xbf16>
    %c0_7 = arith.constant 0 : index
    %c0_8 = arith.constant 0 : index
    %14 = vector.load %arg5[%c0_7, %c0_8] : memref<64x128xbf16, #tpu.memory_space<vmem>>, vector<64x128xbf16>
    tpu.vector_store %arg5[%c0_7, %c0_8], %13 {strides = array<i32>} : memref<64x128xbf16, #tpu.memory_space<vmem>>, vector<64x128xbf16>,
    return
  }
  func.func @transform_0(%arg0: i32) -> (i32, i32) {
    %c0_i32 = arith.constant 0 : i32
    %c0_i32_0 = arith.constant 0 : i32
    return %arg0, %c0_i32 : i32, i32
  }
  func.func @transform_1(%arg0: i32) -> (i32, i32) {
    %c0_i32 = arith.constant 0 : i32
    %c0_i32_0 = arith.constant 0 : i32
    %c0_i32_1 = arith.constant 0 : i32
    return %c0_i32, %c0_i32_0 : i32, i32
  }
  func.func @transform_2(%arg0: i32) -> (i32, i32) {
    %c0_i32 = arith.constant 0 : i32
    %c0_i32_0 = arith.constant 0 : i32
    %c0_i32_1 = arith.constant 0 : i32
    return %c0_i32, %c0_i32_0 : i32, i32
  }
  func.func @transform_3(%arg0: i32) -> (i32, i32) {
    %c1_i32 = arith.constant 1 : i32
    %c0_i32 = arith.constant 0 : i32
    return %arg0, %c1_i32 : i32, i32
  }
  func.func @transform_4(%arg0: i32) -> (i32, i32) {
    %c0_i32 = arith.constant 0 : i32
    %c0_i32_0 = arith.constant 0 : i32
    return %arg0, %c0_i32 : i32, i32
  }
}

module attributes {stable_mosaic.version = 11 : i64} {
  func.func @_bn_relu_kernel(%arg0: i32, %arg1: memref<64x128xbf16, #tpu.memory_space<vmem>>, %arg2: memref<1x128xf32, #tpu.memory_space<vmem>>, %arg3: memref<1x128xf32, #tpu.memory_space<vmem>>, %arg4: memref<64x128xbf16, #tpu.memory_space<vmem>>) attributes {dimension_semantics = [#tpu.dimension_semantics<parallel>], iteration_bounds = array<i64: 2>, scalar_prefetch = 0 : i64, scratch_operands = 0 : i64, tpu.core_type = #tpu.core_type<tc>, window_params = [{transform_indices = @transform_0, window_bounds = array<i64: 64, 128>}, {pipeline_mode = #tpu.pipeline_mode<synchronous>, transform_indices = @transform_1, window_bounds = array<i64: 1, 128>}, {pipeline_mode = #tpu.pipeline_mode<synchronous>, transform_indices = @transform_2, window_bounds = array<i64: 1, 128>}, {transform_indices = @transform_3, window_bounds = array<i64: 64, 128>}]} {
    %c0 = arith.constant 0 : index
    %c0_0 = arith.constant 0 : index
    %0 = vector.load %arg1[%c0, %c0_0] : memref<64x128xbf16, #tpu.memory_space<vmem>>, vector<64x128xbf16>
    %1 = arith.extf %0 : vector<64x128xbf16> to vector<64x128xf32>
    %c0_1 = arith.constant 0 : index
    %c0_2 = arith.constant 0 : index
    %2 = vector.load %arg2[%c0_1, %c0_2] : memref<1x128xf32, #tpu.memory_space<vmem>>, vector<1x128xf32>
    %3 = vector.broadcast %2 : vector<1x128xf32> to vector<64x128xf32>
    %4 = arith.mulf %1, %3 : vector<64x128xf32>
    %c0_3 = arith.constant 0 : index
    %c0_4 = arith.constant 0 : index
    %5 = vector.load %arg3[%c0_3, %c0_4] : memref<1x128xf32, #tpu.memory_space<vmem>>, vector<1x128xf32>
    %6 = vector.broadcast %5 : vector<1x128xf32> to vector<64x128xf32>
    %7 = arith.addf %4, %6 : vector<64x128xf32>
    %cst = arith.constant 0.000000e+00 : f32
    %8 = vector.broadcast %cst : f32 to vector<64x128xf32>
    %9 = arith.maximumf %7, %8 : vector<64x128xf32>
    %10 = arith.truncf %9 : vector<64x128xf32> to vector<64x128xbf16>
    %c0_5 = arith.constant 0 : index
    %c0_6 = arith.constant 0 : index
    %11 = vector.load %arg4[%c0_5, %c0_6] : memref<64x128xbf16, #tpu.memory_space<vmem>>, vector<64x128xbf16>
    tpu.vector_store %arg4[%c0_5, %c0_6], %10 {strides = array<i32>} : memref<64x128xbf16, #tpu.memory_space<vmem>>, vector<64x128xbf16>,
    return
  }
  func.func @transform_0(%arg0: i32) -> (i32, i32) {
    %c0_i32 = arith.constant 0 : i32
    %c0_i32_0 = arith.constant 0 : i32
    return %arg0, %c0_i32 : i32, i32
  }
  func.func @transform_1(%arg0: i32) -> (i32, i32) {
    %c0_i32 = arith.constant 0 : i32
    %c0_i32_0 = arith.constant 0 : i32
    %c0_i32_1 = arith.constant 0 : i32
    return %c0_i32, %c0_i32_0 : i32, i32
  }
  func.func @transform_2(%arg0: i32) -> (i32, i32) {
    %c0_i32 = arith.constant 0 : i32
    %c0_i32_0 = arith.constant 0 : i32
    %c0_i32_1 = arith.constant 0 : i32
    return %c0_i32, %c0_i32_0 : i32, i32
  }
  func.func @transform_3(%arg0: i32) -> (i32, i32) {
    %c0_i32 = arith.constant 0 : i32
    %c0_i32_0 = arith.constant 0 : i32
    return %arg0, %c0_i32 : i32, i32
  }
}

module attributes {stable_mosaic.version = 11 : i64} {
  func.func @_bn_relu_res_kernel(%arg0: i32, %arg1: memref<64x128xbf16, #tpu.memory_space<vmem>>, %arg2: memref<1x128xf32, #tpu.memory_space<vmem>>, %arg3: memref<1x128xf32, #tpu.memory_space<vmem>>, %arg4: memref<64x128xbf16, #tpu.memory_space<vmem>>, %arg5: memref<64x128xbf16, #tpu.memory_space<vmem>>) attributes {dimension_semantics = [#tpu.dimension_semantics<parallel>], iteration_bounds = array<i64: 2>, scalar_prefetch = 0 : i64, scratch_operands = 0 : i64, tpu.core_type = #tpu.core_type<tc>, window_params = [{transform_indices = @transform_0, window_bounds = array<i64: 64, 128>}, {pipeline_mode = #tpu.pipeline_mode<synchronous>, transform_indices = @transform_1, window_bounds = array<i64: 1, 128>}, {pipeline_mode = #tpu.pipeline_mode<synchronous>, transform_indices = @transform_2, window_bounds = array<i64: 1, 128>}, {transform_indices = @transform_3, window_bounds = array<i64: 64, 128>}, {transform_indices = @transform_4, window_bounds = array<i64: 64, 128>}]} {
    %c0 = arith.constant 0 : index
    %c0_0 = arith.constant 0 : index
    %0 = vector.load %arg1[%c0, %c0_0] : memref<64x128xbf16, #tpu.memory_space<vmem>>, vector<64x128xbf16>
    %1 = arith.extf %0 : vector<64x128xbf16> to vector<64x128xf32>
    %c0_1 = arith.constant 0 : index
    %c0_2 = arith.constant 0 : index
    %2 = vector.load %arg2[%c0_1, %c0_2] : memref<1x128xf32, #tpu.memory_space<vmem>>, vector<1x128xf32>
    %3 = vector.broadcast %2 : vector<1x128xf32> to vector<64x128xf32>
    %4 = arith.mulf %1, %3 : vector<64x128xf32>
    %c0_3 = arith.constant 0 : index
    %c0_4 = arith.constant 0 : index
    %5 = vector.load %arg3[%c0_3, %c0_4] : memref<1x128xf32, #tpu.memory_space<vmem>>, vector<1x128xf32>
    %6 = vector.broadcast %5 : vector<1x128xf32> to vector<64x128xf32>
    %7 = arith.addf %4, %6 : vector<64x128xf32>
    %cst = arith.constant 0.000000e+00 : f32
    %8 = vector.broadcast %cst : f32 to vector<64x128xf32>
    %9 = arith.maximumf %7, %8 : vector<64x128xf32>
    %c0_5 = arith.constant 0 : index
    %c0_6 = arith.constant 0 : index
    %10 = vector.load %arg4[%c0_5, %c0_6] : memref<64x128xbf16, #tpu.memory_space<vmem>>, vector<64x128xbf16>
    %11 = arith.extf %10 : vector<64x128xbf16> to vector<64x128xf32>
    %12 = arith.addf %9, %11 : vector<64x128xf32>
    %13 = arith.truncf %12 : vector<64x128xf32> to vector<64x128xbf16>
    %c0_7 = arith.constant 0 : index
    %c0_8 = arith.constant 0 : index
    %14 = vector.load %arg5[%c0_7, %c0_8] : memref<64x128xbf16, #tpu.memory_space<vmem>>, vector<64x128xbf16>
    tpu.vector_store %arg5[%c0_7, %c0_8], %13 {strides = array<i32>} : memref<64x128xbf16, #tpu.memory_space<vmem>>, vector<64x128xbf16>,
    return
  }
  func.func @transform_0(%arg0: i32) -> (i32, i32) {
    %c0_i32 = arith.constant 0 : i32
    %c0_i32_0 = arith.constant 0 : i32
    return %arg0, %c0_i32 : i32, i32
  }
  func.func @transform_1(%arg0: i32) -> (i32, i32) {
    %c0_i32 = arith.constant 0 : i32
    %c0_i32_0 = arith.constant 0 : i32
    %c0_i32_1 = arith.constant 0 : i32
    return %c0_i32, %c0_i32_0 : i32, i32
  }
  func.func @transform_2(%arg0: i32) -> (i32, i32) {
    %c0_i32 = arith.constant 0 : i32
    %c0_i32_0 = arith.constant 0 : i32
    %c0_i32_1 = arith.constant 0 : i32
    return %c0_i32, %c0_i32_0 : i32, i32
  }
  func.func @transform_3(%arg0: i32) -> (i32, i32) {
    %c0_i32 = arith.constant 0 : i32
    %c0_i32_0 = arith.constant 0 : i32
    return %arg0, %c0_i32 : i32, i32
  }
  func.func @transform_4(%arg0: i32) -> (i32, i32) {
    %c0_i32 = arith.constant 0 : i32
    %c0_i32_0 = arith.constant 0 : i32
    return %arg0, %c0_i32 : i32, i32
  }
}

</mosaic_0001>

<llo_original>
// kernel: resblock_forward.9
$region0: #{resblock_forward.9}
  #allocation0 [shape = 'u32[]', space=smem, size = 0x4, offset = 0x4, fixed_abs, tag = 'smem constant byte address 0x4 - core index']
  #allocation1 [shape = 'u32[144,128]{1,0:T(1,128)}', space=vmem, size = 0x12000, scoped, tag = 'internal scratch']
  %s0 = inlined_call_operand.vmem [shape: bf16[128,256], index: 0, kind: input, shape index: {}]
  %s1 = inlined_call_operand.vmem [shape: f32[1,128], index: 1, kind: input, shape index: {}]
  %s2 = inlined_call_operand.vmem [shape: f32[1,128], index: 2, kind: input, shape index: {}]
  %s3 = inlined_call_operand.vmem [shape: bf16[128,128], index: 3, kind: output, shape index: {}]
  %s4 = sld [smem:[#allocation0]]
  $region86: #{resblock_forward.9} parent=0
    _
  %s6 = ssub.s32 1, %s4
  %s7 = scalar_select 0, %s6, %s4
  $region1: #{resblock_forward.9} parent=0
    #allocation2 [shape = 'u8[32768]{0}', space=vmem, size = 0x8000, scoped, tag = 'input window, operand 0']
    loop: start=0, step=1, limit=4
    $region2: #{resblock_forward.9} parent=1 // loop_pre_header
      _
    $region3: #{resblock_forward.9} parent=1 // loop_header
      %s9 = sphi 0, %s13
      %p10 = scmp.ge.s32.totalorder %s9, 4
      %s19 = sphi 0, %s21
      %s22 = sphi 0, %s19
      %s23 = sphi 0, %s22
      %s39 = sphi 0, %s23
      %s43 = sphi 0, %s43
      %s45 = sphi 0, %s43
      %s46 = sphi 0, %s45
      %s60 = sphi 0, %s46
      %s64 = sphi 0, %s64
      %s66 = sphi 0, %s64
      %s67 = sphi 0, %s66
      %s81 = sphi 0, %s67
      %s87 = sphi 0, %s89
      %s90 = sphi 0, %s87
      %s91 = sphi 0, %s90
      %s107 = sphi 0, %s91
    $region4: #{resblock_forward.9} parent=1 // loop_header_branch
      %12 = sbr.rel (%p10) target = $region8
    $region5: #{resblock_forward.9} parent=1 // loop_body
      %s14 = ssub.s32 %s9, 1
      %s15 = ssub.s32 %s9, 2
      %s16 = sadd.s32 %s9, 1
      %s17 = ssub.s32 %s9, %s16
      %p18 = scmp.eq.s32.totalorder %s17, 0
      %s20 = sadd.s32 %s19, 1
      %s21 = scalar_select %p18, %s19, %s20
      %p24 = pneg %p18
      %p25 = scmp.eq.s32.totalorder %s9, 1
      %p26 = por %p24, %p25
      %p27 = scmp.ne.s32.totalorder %s19, %s22
      %p28 = scmp.eq.s32.totalorder %s9, 0
      %p29 = por %p27, %p28
      %p30 = scmp.ne.s32.totalorder %s19, %s22
      %p31 = scmp.eq.s32.totalorder %s14, 1
      %p32 = por %p30, %p31
      %p33 = scmp.ne.s32.totalorder %s22, %s23
      %p34 = scmp.eq.s32.totalorder %s14, 0
      %p35 = por %p33, %p34
      %p36 = scmp.ne.s32.totalorder %s22, %s23
      %p37 = scmp.eq.s32.totalorder %s15, 1
      %p38 = por %p36, %p37
      %p40 = scmp.ne.s32.totalorder %s23, %s39
      %p41 = scmp.eq.s32.totalorder %s15, 0
      %p42 = por %p40, %p41
      %s44 = sadd.s32 %s43, 1
      %p47 = scmp.eq.s32.totalorder %s9, 1
      %p48 = scmp.ne.s32.totalorder %s43, %s45
      %p49 = scmp.eq.s32.totalorder %s9, 0
      %p50 = por %p48, %p49
      %p51 = scmp.ne.s32.totalorder %s43, %s45
      %p52 = scmp.eq.s32.totalorder %s14, 1
      %p53 = por %p51, %p52
      %p54 = scmp.ne.s32.totalorder %s45, %s46
      %p55 = scmp.eq.s32.totalorder %s14, 0
      %p56 = por %p54, %p55
      %p57 = scmp.ne.s32.totalorder %s45, %s46
      %p58 = scmp.eq.s32.totalorder %s15, 1
      %p59 = por %p57, %p58
      %p61 = scmp.ne.s32.totalorder %s46, %s60
      %p62 = scmp.eq.s32.totalorder %s15, 0
      %p63 = por %p61, %p62
      %s65 = sadd.s32 %s64, 1
      %p68 = scmp.eq.s32.totalorder %s9, 1
      %p69 = scmp.ne.s32.totalorder %s64, %s66
      %p70 = scmp.eq.s32.totalorder %s9, 0
      %p71 = por %p69, %p70
      %p72 = scmp.ne.s32.totalorder %s64, %s66
      %p73 = scmp.eq.s32.totalorder %s14, 1
      %p74 = por %p72, %p73
      %p75 = scmp.ne.s32.totalorder %s66, %s67
      %p76 = scmp.eq.s32.totalorder %s14, 0
      %p77 = por %p75, %p76
      %p78 = scmp.ne.s32.totalorder %s66, %s67
      %p79 = scmp.eq.s32.totalorder %s15, 1
      %p80 = por %p78, %p79
      %p82 = scmp.ne.s32.totalorder %s67, %s81
      %p83 = scmp.eq.s32.totalorder %s15, 0
      %p84 = por %p82, %p83
      %s85 = ssub.s32 %s9, %s16
      %p86 = scmp.eq.s32.totalorder %s85, 0
      %s88 = sadd.s32 %s87, 1
      %s89 = scalar_select %p86, %s87, %s88
      %p92 = pneg %p86
      %p93 = scmp.eq.s32.totalorder %s9, 1
      %p94 = por %p92, %p93
      %p95 = scmp.ne.s32.totalorder %s87, %s90
      %p96 = scmp.eq.s32.totalorder %s9, 0
      %p97 = por %p95, %p96
      %p98 = scmp.ne.s32.totalorder %s87, %s90
      %p99 = scmp.eq.s32.totalorder %s14, 1
      %p100 = por %p98, %p99
      %p101 = scmp.ne.s32.totalorder %s90, %s91
      %p102 = scmp.eq.s32.totalorder %s14, 0
      %p103 = por %p101, %p102
      %p104 = scmp.ne.s32.totalorder %s90, %s91
      %p105 = scmp.eq.s32.totalorder %s15, 1
      %p106 = por %p104, %p105
      %p108 = scmp.ne.s32.totalorder %s91, %s107
      %p109 = scmp.eq.s32.totalorder %s15, 0
      %p110 = por %p108, %p109
      %p111 = scmp.le.s32.totalorder 1, %s9
      %p112 = scmp.lt.s32.totalorder %s9, 3
      %p113 = pnand %p111, %p112
      %p114 = pneg %p113
      // Predicated region
      $region9: #{resblock_forward.9} parent=5 // pred_check
        _
      $region10: #{resblock_forward.9} parent=5 // pred_check_branch
        %116 = sbr.rel (%p113) target = $region12
      $region11: #{resblock_forward.9} parent=5 // pred_region
        %s117 = ssub.s32 %s9, 1
        // Predicated region
        $region13: #{resblock_forward.9} parent=11 // pred_check
          %p118 = pneg %p56
        $region14: #{resblock_forward.9} parent=11 // pred_check_branch
          %120 = sbr.rel (%p118) target = $region16
        $region15: #{resblock_forward.9} parent=11 // pred_region
          _
        $region16: #{resblock_forward.9} parent=11 // pred_fallthru
          _
        // Predicated region
        $region17: #{resblock_forward.9} parent=11 // pred_check
          %p121 = pneg %p77
        $region18: #{resblock_forward.9} parent=11 // pred_check_branch
          %123 = sbr.rel (%p121) target = $region20
        $region19: #{resblock_forward.9} parent=11 // pred_region
          _
        $region20: #{resblock_forward.9} parent=11 // pred_fallthru
          _
      $region12: #{resblock_forward.9} parent=5 // pred_fallthru
        _
      %p124 = scmp.lt.s32.totalorder %s9, 2
      // Predicated region
      $region21: #{resblock_forward.9} parent=5 // pred_check
        %p125 = pneg %p124
      $region22: #{resblock_forward.9} parent=5 // pred_check_branch
        %127 = sbr.rel (%p125) target = $region24
      $region23: #{resblock_forward.9} parent=5 // pred_region
        // Predicated region
        $region25: #{resblock_forward.9} parent=23 // pred_check
          %p128 = pneg %p29
        $region26: #{resblock_forward.9} parent=23 // pred_check_branch
          %130 = sbr.rel (%p128) target = $region28
        $region27: #{resblock_forward.9} parent=23 // pred_region
          %s131 = sand.u32 %s19, 1
          %s132 = sand.u32 %s19, 1
          %s133 = smul.addr %s132, 32
          %s134 = scalar_lea.vmem [#allocation2], %s133
          %s135 = smul.u32 8, %s9
          %s136 = smul.addr %s135, 2
          %s137 = smul.addr %s136, 4
          %s138 = scalar_lea.vmem %s0, %s137
          // Predicated region
          $region29: #{resblock_forward.9} parent=27 // pred_check
            _
          $region30: #{resblock_forward.9} parent=27 // pred_check_branch
            %140 = sbr.rel (0) target = $region32
          $region31: #{resblock_forward.9} parent=27 // pred_region
            // Predicated region
            $region33: #{resblock_forward.9} parent=31 // pred_check
              _
            $region34: #{resblock_forward.9} parent=31 // pred_check_branch
              %142 = sbr.rel target = $region36
            $region35: #{resblock_forward.9} parent=31 // pred_region
              // Predicated region
              $region48: #{resblock_forward.9} parent=35 // pred_check
                _
              $region49: #{resblock_forward.9} parent=35 // pred_check_branch
                %171 = sbr.rel (0) target = $region51
              $region50: #{resblock_forward.9} parent=35 // pred_region
                loop: start=0, step=1, limit=1
                $region52: #{resblock_forward.9} parent=50 // loop_pre_header
                  _
                $region53: #{resblock_forward.9} parent=50 // loop_header
                  %s173 = sphi 0, %s177
                  %p174 = scmp.ge.s32.totalorder %s173, 1
                  %s178 = sphi %s138, %s138
                  %s179 = sphi %s134, %s134
                $region54: #{resblock_forward.9} parent=50 // loop_header_branch
                  %176 = sbr.rel (%p174) target = $region58
                $region55: #{resblock_forward.9} parent=50 // loop_body
                  _
                $region56: #{resblock_forward.9} parent=50 // loop_footer
                  %s177 = sadd.s32 1, %s173
                $region57: #{resblock_forward.9} parent=50 // loop_footer_branch
                  %172 = sbr.rel target = $region53
                $region58: #{resblock_forward.9} parent=50 // loop_exit
                  _
                loop: start=0, step=1, limit=1
                $region59: #{resblock_forward.9} parent=50 // loop_pre_header
                  _
                $region60: #{resblock_forward.9} parent=50 // loop_header
                  %s182 = sphi 0, %s186
                  %p183 = scmp.ge.s32.totalorder %s182, 1
                  %s187 = sphi %s138, %s138
                  %s188 = sphi %s134, %s134
                $region61: #{resblock_forward.9} parent=50 // loop_header_branch
                  %185 = sbr.rel (%p183) target = $region65
                $region62: #{resblock_forward.9} parent=50 // loop_body
                  %v189 = vld [vmem:[%s187] sm:$0xf]
                  %190 = vst [vmem:[%s188] sm:$0xf] %v189
                  %v191 = vld [vmem:[%s187 + $0x8] sm:$0xf]
                  %192 = vst [vmem:[%s188 + $0x4] sm:$0xf] %v191
                  %v193 = vld [vmem:[%s187 + $0x10] sm:$0xf]
                  %194 = vst [vmem:[%s188 + $0x8] sm:$0xf] %v193
                  %v195 = vld [vmem:[%s187 + $0x18] sm:$0xf]
                  %196 = vst [vmem:[%s188 + $0xc] sm:$0xf] %v195
                  %v197 = vld [vmem:[%s187 + $0x20] sm:$0xf]
                  %198 = vst [vmem:[%s188 + $0x10] sm:$0xf] %v197
                  %v199 = vld [vmem:[%s187 + $0x28] sm:$0xf]
                  %200 = vst [vmem:[%s188 + $0x14] sm:$0xf] %v199
                  %v201 = vld [vmem:[%s187 + $0x30] sm:$0xf]
                  %202 = vst [vmem:[%s188 + $0x18] sm:$0xf] %v201
                  %v203 = vld [vmem:[%s187 + $0x38] sm:$0xf]
                  %204 = vst [vmem:[%s188 + $0x1c] sm:$0xf] %v203
                $region63: #{resblock_forward.9} parent=50 // loop_footer
                  %s186 = sadd.s32 1, %s182
                $region64: #{resblock_forward.9} parent=50 // loop_footer_branch
                  %181 = sbr.rel target = $region60
                $region65: #{resblock_forward.9} parent=50 // loop_exit
                  _
              $region51: #{resblock_forward.9} parent=35 // pred_fallthru
                _
            $region36: #{resblock_forward.9} parent=31 // pred_fallthru
              _
            // Predicated region
            $region37: #{resblock_forward.9} parent=31 // pred_check
              _
            $region38: #{resblock_forward.9} parent=31 // pred_check_branch
              %144 = sbr.rel (0) target = $region40
            $region39: #{resblock_forward.9} parent=31 // pred_region
              loop: start=0, step=1, limit=1
              $region41: #{resblock_forward.9} parent=39 // loop_pre_header
                _
              $region42: #{resblock_forward.9} parent=39 // loop_header
                %s147 = sphi 0, %s151
                %p148 = scmp.ge.s32.totalorder %s147, 1
                %s152 = sphi %s138, %s138
                %s153 = sphi %s134, %s134
              $region43: #{resblock_forward.9} parent=39 // loop_header_branch
                %150 = sbr.rel (%p148) target = $region47
              $region44: #{resblock_forward.9} parent=39 // loop_body
                %v154 = vld [vmem:[%s152] sm:$0xf]
                %155 = vst [vmem:[%s153] sm:$0xf] %v154
                %v156 = vld [vmem:[%s152 + $0x8] sm:$0xf]
                %157 = vst [vmem:[%s153 + $0x4] sm:$0xf] %v156
                %v158 = vld [vmem:[%s152 + $0x10] sm:$0xf]
                %159 = vst [vmem:[%s153 + $0x8] sm:$0xf] %v158
                %v160 = vld [vmem:[%s152 + $0x18] sm:$0xf]
                %161 = vst [vmem:[%s153 + $0xc] sm:$0xf] %v160
                %v162 = vld [vmem:[%s152 + $0x20] sm:$0xf]
                %163 = vst [vmem:[%s153 + $0x10] sm:$0xf] %v162
                %v164 = vld [vmem:[%s152 + $0x28] sm:$0xf]
                %165 = vst [vmem:[%s153 + $0x14] sm:$0xf] %v164
                %v166 = vld [vmem:[%s152 + $0x30] sm:$0xf]
                %167 = vst [vmem:[%s153 + $0x18] sm:$0xf] %v166
                %v168 = vld [vmem:[%s152 + $0x38] sm:$0xf]
                %169 = vst [vmem:[%s153 + $0x1c] sm:$0xf] %v168
              $region45: #{resblock_forward.9} parent=39 // loop_footer
                %s151 = sadd.s32 1, %s147
              $region46: #{resblock_forward.9} parent=39 // loop_footer_branch
                %146 = sbr.rel target = $region42
              $region47: #{resblock_forward.9} parent=39 // loop_exit
                _
            $region40: #{resblock_forward.9} parent=31 // pred_fallthru
              _
          $region32: #{resblock_forward.9} parent=27 // pred_fallthru
            _
          %205 = vnop
        $region28: #{resblock_forward.9} parent=23 // pred_fallthru
          _
      $region24: #{resblock_forward.9} parent=5 // pred_fallthru
        _
      %p206 = scmp.le.s32.totalorder 1, %s9
      %p207 = scmp.lt.s32.totalorder %s9, 3
      %p208 = pnand %p206, %p207
      %p209 = pneg %p208
      // Predicated region
      $region66: #{resblock_forward.9} parent=5 // pred_check
        _
      $region67: #{resblock_forward.9} parent=5 // pred_check_branch
        %211 = sbr.rel (%p208) target = $region69
      $region68: #{resblock_forward.9} parent=5 // pred_region
        %s212 = ssub.s32 %s9, 1
        %s213 = sand.u32 %s22, 1
        %s214 = sand.u32 %s22, 1
        %s215 = smul.addr %s214, 32
        %s216 = scalar_lea.vmem [#allocation2], %s215
        // Predicated region
        $region70: #{resblock_forward.9} parent=68 // pred_check
          %p217 = pneg %p35
        $region71: #{resblock_forward.9} parent=68 // pred_check_branch
          %219 = sbr.rel (%p217) target = $region73
        $region72: #{resblock_forward.9} parent=68 // pred_region
          _
        $region73: #{resblock_forward.9} parent=68 // pred_fallthru
          _
        %s220 = sand.u32 %s22, 1
        %s221 = sand.u32 %s22, 1
        %s222 = smul.addr %s221, 32
        %s223 = scalar_lea.vmem [#allocation2], %s222
        %p224 = pneg %p35
        %p225 = pneg %p32
        %p226 = pneg %p56
        %p227 = pneg %p53
        %p228 = pneg %p77
        %p229 = pneg %p74
        %p230 = pneg %p103
        %p231 = pneg %p100
        %s232 = smul.u32 8, %s14
        %p233 = scmp.lt.s32.totalorder %s232, 15
        %s234 = scalar_select %p233, %s232, 15
        %s235 = smul.addr %s234, 4
        %s236 = scalar_lea.vmem %s3, %s235
        %s237 = smul.u32 8, %s14
        %s238 = smul.u32 8, %s14
        %p239 = scmp.lt.s32.totalorder %s238, 15
        %s240 = scalar_select %p239, %s238, 15
        %s241 = smul.addr %s240, 4
        %s242 = scalar_lea.vmem %s3, %s241
        %s243 = smul.u32 8, %s14
        %v244 = vld [vmem:[%s216] sm:$0xf]
        %v245 = vld [vmem:[%s216 + $0x4] sm:$0xf]
        %v246 = vld [vmem:[%s216 + $0x8] sm:$0xf]
        %v247 = vld [vmem:[%s216 + $0xc] sm:$0xf]
        %v248 = vld [vmem:[%s216 + $0x10] sm:$0xf]
        %v249 = vld [vmem:[%s216 + $0x14] sm:$0xf]
        %v250 = vld [vmem:[%s216 + $0x18] sm:$0xf]
        %v251 = vld [vmem:[%s216 + $0x1c] sm:$0xf]
        %v252 = vunpack.c.l.bf16 %v244
        %v253 = vunpack.c.l.bf16 %v245
        %v254 = vunpack.c.l.bf16 %v246
        %v255 = vunpack.c.l.bf16 %v247
        %v256 = vunpack.c.l.bf16 %v248
        %v257 = vunpack.c.l.bf16 %v249
        %v258 = vunpack.c.l.bf16 %v250
        %v259 = vunpack.c.l.bf16 %v251
        %v260 = vld [vmem:[%s1] sm:$0x1]
        %v262 = vlaneseq
        %v263 = vshrl.u32 %v262, 7
        %v264 = vsub.s32 0, %v263
        %v265 = vrot.slane %v260, %v264
        %v267 = vmul.f32 %v252, %v265
        %v268 = vmul.f32 %v253, %v265
        %v269 = vmul.f32 %v254, %v265
        %v270 = vmul.f32 %v255, %v265
        %v271 = vmul.f32 %v256, %v265
        %v272 = vmul.f32 %v257, %v265
        %v273 = vmul.f32 %v258, %v265
        %v274 = vmul.f32 %v259, %v265
        %v275 = vld [vmem:[%s2] sm:$0x1]
        %v277 = vlaneseq
        %v278 = vshrl.u32 %v277, 7
        %v279 = vsub.s32 0, %v278
        %v280 = vrot.slane %v275, %v279
        %v282 = vadd.f32 %v267, %v280
        %v283 = vadd.f32 %v268, %v280
        %v284 = vadd.f32 %v269, %v280
        %v285 = vadd.f32 %v270, %v280
        %v286 = vadd.f32 %v271, %v280
        %v287 = vadd.f32 %v272, %v280
        %v288 = vadd.f32 %v273, %v280
        %v289 = vadd.f32 %v274, %v280
        %v290 = vmax.f32 %v282, 0.0
        %v291 = vmax.f32 %v283, 0.0
        %v292 = vmax.f32 %v284, 0.0
        %v293 = vmax.f32 %v285, 0.0
        %v294 = vmax.f32 %v286, 0.0
        %v295 = vmax.f32 %v287, 0.0
        %v296 = vmax.f32 %v288, 0.0
        %v297 = vmax.f32 %v289, 0.0
        %v298 = vpack.c.bf16 %v291, %v290
        %v299 = vpack.c.bf16 %v293, %v292
        %v300 = vpack.c.bf16 %v295, %v294
        %v301 = vpack.c.bf16 %v297, %v296
        %v306 = vunpack.c.l.b16 %v298
        %v307 = vunpack.c.h.b16 %v298
        %v308 = vunpack.c.l.b16 %v299
        %v309 = vunpack.c.h.b16 %v299
        %v310 = vunpack.c.l.b16 %v300
        %v311 = vunpack.c.h.b16 %v300
        %v312 = vunpack.c.l.b16 %v301
        %v313 = vunpack.c.h.b16 %v301
        %v314 = vpack.c.b16 %v306, %v306
        %v315 = vpack.c.b16 %v307, %v307
        %v316 = vpack.c.b16 %v308, %v308
        %v317 = vpack.c.b16 %v309, %v309
        %v318 = vpack.c.b16 %v310, %v310
        %v319 = vpack.c.b16 %v311, %v311
        %v320 = vpack.c.b16 %v312, %v312
        %v321 = vpack.c.b16 %v313, %v313
        %330 = vst [vmem:[%s242] sm:$0xf] %v314
        %331 = vst [vmem:[%s242 + $0x4] sm:$0xf] %v315
        %332 = vst [vmem:[%s242 + $0x8] sm:$0xf] %v316
        %333 = vst [vmem:[%s242 + $0xc] sm:$0xf] %v317
        %334 = vst [vmem:[%s242 + $0x10] sm:$0xf] %v318
        %335 = vst [vmem:[%s242 + $0x14] sm:$0xf] %v319
        %336 = vst [vmem:[%s242 + $0x18] sm:$0xf] %v320
        %337 = vst [vmem:[%s242 + $0x1c] sm:$0xf] %v321
        %s338 = smul.u32 8, %s14
        %p339 = scmp.lt.s32.totalorder %s338, 15
        %s340 = scalar_select %p339, %s338, 15
        %s341 = smul.addr %s340, 4
        %s342 = scalar_lea.vmem %s3, %s341
        // Predicated region
        $region74: #{resblock_forward.9} parent=68 // pred_check
          %p343 = pneg %p100
        $region75: #{resblock_forward.9} parent=68 // pred_check_branch
          %345 = sbr.rel (%p343) target = $region77
        $region76: #{resblock_forward.9} parent=68 // pred_region
          %s346 = smul.u32 8, %s14
        $region77: #{resblock_forward.9} parent=68 // pred_fallthru
          _
      $region69: #{resblock_forward.9} parent=5 // pred_fallthru
        _
      %p347 = scmp.le.s32.totalorder 2, %s9
      // Predicated region
      $region78: #{resblock_forward.9} parent=5 // pred_check
        %p348 = pneg %p347
      $region79: #{resblock_forward.9} parent=5 // pred_check_branch
        %350 = sbr.rel (%p348) target = $region81
      $region80: #{resblock_forward.9} parent=5 // pred_region
        %s351 = ssub.s32 %s9, 2
        // Predicated region
        $region82: #{resblock_forward.9} parent=80 // pred_check
          %p352 = pneg %p106
        $region83: #{resblock_forward.9} parent=80 // pred_check_branch
          %354 = sbr.rel (%p352) target = $region85
        $region84: #{resblock_forward.9} parent=80 // pred_region
          %s355 = smul.u32 8, %s15
          %p356 = scmp.lt.s32.totalorder %s355, 15
          %s357 = scalar_select %p356, %s355, 15
          %s358 = smul.addr %s357, 4
          %s359 = scalar_lea.vmem %s3, %s358
        $region85: #{resblock_forward.9} parent=80 // pred_fallthru
          _
      $region81: #{resblock_forward.9} parent=5 // pred_fallthru
        _
    $region6: #{resblock_forward.9} parent=1 // loop_footer
      %s13 = sadd.s32 1, %s9
    $region7: #{resblock_forward.9} parent=1 // loop_footer_branch
      %8 = sbr.rel target = $region3
    $region8: #{resblock_forward.9} parent=1 // loop_exit
      _

// kernel: resblock_forward.8
$region0: #{resblock_forward.8}
  #allocation0 [shape = 'u32[]', space=smem, size = 0x4, offset = 0x4, fixed_abs, tag = 'smem constant byte address 0x4 - core index']
  #allocation1 [shape = 'u32[144,128]{1,0:T(1,128)}', space=vmem, size = 0x12000, scoped, tag = 'internal scratch']
  #allocation2 [shape = 'f32[64,256]{1,0:T(8,128)}', space=vmem, size = 0x10000, scoped, tag = 'scratch operand']
  %s0 = inlined_call_operand.vmem [shape: bf16[128,128], index: 0, kind: input, shape index: {}]
  %s1 = inlined_call_operand.vmem [shape: bf16[128,256], index: 1, kind: input, shape index: {}]
  %s2 = inlined_call_operand.vmem [shape: f32[1,256], index: 2, kind: input, shape index: {}]
  %s3 = inlined_call_operand.vmem [shape: bf16[128,256], index: 3, kind: output, shape index: {0}]
  %s4 = inlined_call_operand.vmem [shape: f32[2,2,256], index: 4, kind: output, shape index: {1}]
  %5 = xla_tuple %s3, %s4
  %s6 = sld [smem:[#allocation0]]
  $region61: #{resblock_forward.8} parent=0
    _
  %s8 = ssub.s32 1, %s6
  %s9 = scalar_select 0, %s8, %s6
  loop: start=0, step=1, limit=4
  $region2: #{resblock_forward.8} parent=0 // loop_pre_header
    _
  $region3: #{resblock_forward.8} parent=0 // loop_header
    %s11 = sphi 0, %s15
    %p12 = scmp.ge.s32.totalorder %s11, 4
    %s18 = sphi 0, %s37
    %s19 = sphi 0, %s33
    %s20 = sphi 0, %s29
    %s21 = sphi 0, %s18
    %s22 = sphi 0, %s19
    %s23 = sphi 0, %s20
    %s24 = sphi 0, %s21
    %s25 = sphi 0, %s22
    %s26 = sphi 0, %s23
    %s42 = sphi 0, %s44
    %s45 = sphi 0, %s42
    %s46 = sphi 0, %s45
    %s62 = sphi 0, %s46
    %s70 = sphi 0, %s72
    %s73 = sphi 0, %s70
    %s74 = sphi 0, %s73
    %s90 = sphi 0, %s74
    %s96 = sphi 0, %s98
    %s99 = sphi 0, %s96
    %s100 = sphi 0, %s99
    %s116 = sphi 0, %s100
    %s124 = sphi 0, %s126
    %s127 = sphi 0, %s124
    %s128 = sphi 0, %s127
    %s144 = sphi 0, %s128
    %s152 = sphi 0, %s154
    %s155 = sphi 0, %s152
    %s156 = sphi 0, %s155
    %s172 = sphi 0, %s156
  $region4: #{resblock_forward.8} parent=0 // loop_header_branch
    %14 = sbr.rel (%p12) target = $region8
  $region5: #{resblock_forward.8} parent=0 // loop_body
    %s16 = ssub.s32 %s11, 1
    %s17 = ssub.s32 %s11, 2
    %s27 = sadd.s32 1, %s20
    %p28 = scmp.ge.s32.totalorder %s27, 1
    %s29 = scalar_select %p28, 0, %s27
    %s30 = sadd.s32 1, %s19
    %s31 = scalar_select %p28, %s30, %s19
    %p32 = scmp.ge.s32.totalorder %s31, 1
    %s33 = scalar_select %p32, 0, %s31
    %s34 = sadd.s32 1, %s18
    %s35 = scalar_select %p32, %s34, %s18
    %p36 = scmp.ge.s32.totalorder %s35, 2
    %s37 = scalar_select %p36, 0, %s35
    %s38 = ssub.s32 %s18, %s37
    %s39 = ssub.s32 %s20, %s29
    %s40 = sor.u32 %s38, %s39
    %p41 = scmp.eq.s32.totalorder %s40, 0
    %s43 = sadd.s32 %s42, 1
    %s44 = scalar_select %p41, %s42, %s43
    %p47 = pneg %p41
    %p48 = scmp.eq.s32.totalorder %s11, 1
    %p49 = por %p47, %p48
    %p50 = scmp.ne.s32.totalorder %s42, %s45
    %p51 = scmp.eq.s32.totalorder %s11, 0
    %p52 = por %p50, %p51
    %p53 = scmp.ne.s32.totalorder %s42, %s45
    %p54 = scmp.eq.s32.totalorder %s16, 1
    %p55 = por %p53, %p54
    %p56 = scmp.ne.s32.totalorder %s45, %s46
    %p57 = scmp.eq.s32.totalorder %s16, 0
    %p58 = por %p56, %p57
    %p59 = scmp.ne.s32.totalorder %s45, %s46
    %p60 = scmp.eq.s32.totalorder %s17, 1
    %p61 = por %p59, %p60
    %p63 = scmp.ne.s32.totalorder %s46, %s62
    %p64 = scmp.eq.s32.totalorder %s17, 0
    %p65 = por %p63, %p64
    %s66 = ssub.s32 %s20, %s29
    %s67 = ssub.s32 %s19, %s33
    %s68 = sor.u32 %s66, %s67
    %p69 = scmp.eq.s32.totalorder %s68, 0
    %s71 = sadd.s32 %s70, 1
    %s72 = scalar_select %p69, %s70, %s71
    %p75 = pneg %p69
    %p76 = scmp.eq.s32.totalorder %s11, 1
    %p77 = por %p75, %p76
    %p78 = scmp.ne.s32.totalorder %s70, %s73
    %p79 = scmp.eq.s32.totalorder %s11, 0
    %p80 = por %p78, %p79
    %p81 = scmp.ne.s32.totalorder %s70, %s73
    %p82 = scmp.eq.s32.totalorder %s16, 1
    %p83 = por %p81, %p82
    %p84 = scmp.ne.s32.totalorder %s73, %s74
    %p85 = scmp.eq.s32.totalorder %s16, 0
    %p86 = por %p84, %p85
    %p87 = scmp.ne.s32.totalorder %s73, %s74
    %p88 = scmp.eq.s32.totalorder %s17, 1
    %p89 = por %p87, %p88
    %p91 = scmp.ne.s32.totalorder %s74, %s90
    %p92 = scmp.eq.s32.totalorder %s17, 0
    %p93 = por %p91, %p92
    %s94 = ssub.s32 %s19, %s33
    %p95 = scmp.eq.s32.totalorder %s94, 0
    %s97 = sadd.s32 %s96, 1
    %s98 = scalar_select %p95, %s96, %s97
    %p101 = pneg %p95
    %p102 = scmp.eq.s32.totalorder %s11, 1
    %p103 = por %p101, %p102
    %p104 = scmp.ne.s32.totalorder %s96, %s99
    %p105 = scmp.eq.s32.totalorder %s11, 0
    %p106 = por %p104, %p105
    %p107 = scmp.ne.s32.totalorder %s96, %s99
    %p108 = scmp.eq.s32.totalorder %s16, 1
    %p109 = por %p107, %p108
    %p110 = scmp.ne.s32.totalorder %s99, %s100
    %p111 = scmp.eq.s32.totalorder %s16, 0
    %p112 = por %p110, %p111
    %p113 = scmp.ne.s32.totalorder %s99, %s100
    %p114 = scmp.eq.s32.totalorder %s17, 1
    %p115 = por %p113, %p114
    %p117 = scmp.ne.s32.totalorder %s100, %s116
    %p118 = scmp.eq.s32.totalorder %s17, 0
    %p119 = por %p117, %p118
    %s120 = ssub.s32 %s18, %s37
    %s121 = ssub.s32 %s19, %s33
    %s122 = sor.u32 %s120, %s121
    %p123 = scmp.eq.s32.totalorder %s122, 0
    %s125 = sadd.s32 %s124, 1
    %s126 = scalar_select %p123, %s124, %s125
    %p129 = pneg %p123
    %p130 = scmp.eq.s32.totalorder %s11, 1
    %p131 = por %p129, %p130
    %p132 = scmp.ne.s32.totalorder %s124, %s127
    %p133 = scmp.eq.s32.totalorder %s11, 0
    %p134 = por %p132, %p133
    %p135 = scmp.ne.s32.totalorder %s124, %s127
    %p136 = scmp.eq.s32.totalorder %s16, 1
    %p137 = por %p135, %p136
    %p138 = scmp.ne.s32.totalorder %s127, %s128
    %p139 = scmp.eq.s32.totalorder %s16, 0
    %p140 = por %p138, %p139
    %p141 = scmp.ne.s32.totalorder %s127, %s128
    %p142 = scmp.eq.s32.totalorder %s17, 1
    %p143 = por %p141, %p142
    %p145 = scmp.ne.s32.totalorder %s128, %s144
    %p146 = scmp.eq.s32.totalorder %s17, 0
    %p147 = por %p145, %p146
    %s148 = ssub.s32 %s18, %s37
    %s149 = ssub.s32 %s19, %s33
    %s150 = sor.u32 %s148, %s149
    %p151 = scmp.eq.s32.totalorder %s150, 0
    %s153 = sadd.s32 %s152, 1
    %s154 = scalar_select %p151, %s152, %s153
    %p157 = pneg %p151
    %p158 = scmp.eq.s32.totalorder %s11, 1
    %p159 = por %p157, %p158
    %p160 = scmp.ne.s32.totalorder %s152, %s155
    %p161 = scmp.eq.s32.totalorder %s11, 0
    %p162 = por %p160, %p161
    %p163 = scmp.ne.s32.totalorder %s152, %s155
    %p164 = scmp.eq.s32.totalorder %s16, 1
    %p165 = por %p163, %p164
    %p166 = scmp.ne.s32.totalorder %s155, %s156
    %p167 = scmp.eq.s32.totalorder %s16, 0
    %p168 = por %p166, %p167
    %p169 = scmp.ne.s32.totalorder %s155, %s156
    %p170 = scmp.eq.s32.totalorder %s17, 1
    %p171 = por %p169, %p170
    %p173 = scmp.ne.s32.totalorder %s156, %s172
    %p174 = scmp.eq.s32.totalorder %s17, 0
    %p175 = por %p173, %p174
    %p176 = scmp.le.s32.totalorder 1, %s11
    %p177 = scmp.lt.s32.totalorder %s11, 3
    %p178 = pnand %p176, %p177
    %p179 = pneg %p178
    // Predicated region
    $region9: #{resblock_forward.8} parent=5 // pred_check
      _
    $region10: #{resblock_forward.8} parent=5 // pred_check_branch
      %181 = sbr.rel (%p178) target = $region12
    $region11: #{resblock_forward.8} parent=5 // pred_region
      %s182 = ssub.s32 %s11, 1
      // Predicated region
      $region13: #{resblock_forward.8} parent=11 // pred_check
        %p183 = pneg %p86
      $region14: #{resblock_forward.8} parent=11 // pred_check_branch
        %185 = sbr.rel (%p183) target = $region16
      $region15: #{resblock_forward.8} parent=11 // pred_region
        %s186 = smul.u32 16, %s23
        %s187 = smul.u32 2, %s22
        %p188 = scmp.lt.s32.totalorder %s186, 15
        %s189 = scalar_select %p188, %s186, 15
        %p190 = scmp.lt.s32.totalorder %s187, 1
        %s191 = scalar_select %p190, %s187, 1
        %s192 = smul.addr %s189, 2
        %s193 = sadd.s32 %s191, %s192
        %s194 = smul.addr %s193, 4
        %s195 = scalar_lea.vmem %s1, %s194
        %s196 = smul.u32 16, %s23
        %s197 = smul.u32 2, %s22
      $region16: #{resblock_forward.8} parent=11 // pred_fallthru
        _
      // Predicated region
      $region17: #{resblock_forward.8} parent=11 // pred_check
        %p198 = pneg %p112
      $region18: #{resblock_forward.8} parent=11 // pred_check_branch
        %200 = sbr.rel (%p198) target = $region20
      $region19: #{resblock_forward.8} parent=11 // pred_region
        %s201 = smul.u32 2, %s22
        %p202 = scmp.lt.s32.totalorder %s201, 1
        %s203 = scalar_select %p202, %s201, 1
        %s204 = scalar_lea.vmem %s2, %s203
        %s205 = smul.u32 2, %s22
      $region20: #{resblock_forward.8} parent=11 // pred_fallthru
        _
    $region12: #{resblock_forward.8} parent=5 // pred_fallthru
      _
    %p206 = scmp.lt.s32.totalorder %s11, 2
    // Predicated region
    $region21: #{resblock_forward.8} parent=5 // pred_check
      %p207 = pneg %p206
    $region22: #{resblock_forward.8} parent=5 // pred_check_branch
      %209 = sbr.rel (%p207) target = $region24
    $region23: #{resblock_forward.8} parent=5 // pred_region
      // Predicated region
      $region25: #{resblock_forward.8} parent=23 // pred_check
        %p210 = pneg %p52
      $region26: #{resblock_forward.8} parent=23 // pred_check_branch
        %212 = sbr.rel (%p210) target = $region28
      $region27: #{resblock_forward.8} parent=23 // pred_region
        %s213 = smul.u32 8, %s18
        %p214 = scmp.lt.s32.totalorder %s213, 15
        %s215 = scalar_select %p214, %s213, 15
        %p216 = scmp.lt.s32.totalorder %s20, 0
        %s217 = scalar_select %p216, %s20, 0
        %s218 = sadd.s32 %s217, %s215
        %s219 = smul.addr %s218, 4
        %s220 = scalar_lea.vmem %s0, %s219
        %s221 = smul.u32 8, %s18
      $region28: #{resblock_forward.8} parent=23 // pred_fallthru
        _
    $region24: #{resblock_forward.8} parent=5 // pred_fallthru
      _
    %p222 = scmp.le.s32.totalorder 1, %s11
    %p223 = scmp.lt.s32.totalorder %s11, 3
    %p224 = pnand %p222, %p223
    %p225 = pneg %p224
    // Predicated region
    $region29: #{resblock_forward.8} parent=5 // pred_check
      _
    $region30: #{resblock_forward.8} parent=5 // pred_check_branch
      %227 = sbr.rel (%p224) target = $region32
    $region31: #{resblock_forward.8} parent=5 // pred_region
      %s228 = ssub.s32 %s11, 1
      %s229 = smul.u32 8, %s21
      %p230 = scmp.lt.s32.totalorder %s229, 15
      %s231 = scalar_select %p230, %s229, 15
      %p232 = scmp.lt.s32.totalorder %s23, 0
      %s233 = scalar_select %p232, %s23, 0
      %s234 = sadd.s32 %s233, %s231
      %s235 = smul.addr %s234, 4
      %s236 = scalar_lea.vmem %s0, %s235
      %p237 = pneg %p58
      %p238 = pneg %p55
      %s239 = smul.u32 16, %s23
      %s240 = smul.u32 2, %s22
      %p241 = scmp.lt.s32.totalorder %s239, 15
      %s242 = scalar_select %p241, %s239, 15
      %p243 = scmp.lt.s32.totalorder %s240, 1
      %s244 = scalar_select %p243, %s240, 1
      %s245 = smul.addr %s242, 2
      %s246 = sadd.s32 %s244, %s245
      %s247 = smul.addr %s246, 4
      %s248 = scalar_lea.vmem %s1, %s247
      %p249 = pneg %p86
      %p250 = pneg %p83
      %s251 = smul.u32 2, %s22
      %p252 = scmp.lt.s32.totalorder %s251, 1
      %s253 = scalar_select %p252, %s251, 1
      %s254 = scalar_lea.vmem %s2, %s253
      %p255 = pneg %p112
      %p256 = pneg %p109
      %p257 = pneg %p140
      %p258 = pneg %p137
      %s259 = smul.u32 8, %s21
      %s260 = smul.u32 2, %s22
      %p261 = scmp.lt.s32.totalorder %s259, 15
      %s262 = scalar_select %p261, %s259, 15
      %p263 = scmp.lt.s32.totalorder %s260, 1
      %s264 = scalar_select %p263, %s260, 1
      %s265 = smul.addr %s262, 2
      %s266 = sadd.s32 %s264, %s265
      %s267 = smul.addr %s266, 4
      %s268 = scalar_lea.vmem %s3, %s267
      %p269 = pneg %p168
      %p270 = pneg %p165
      %s271 = smul.u32 2, %s22
      %p272 = scmp.lt.s32.totalorder %s21, 1
      %s273 = scalar_select %p272, %s21, 1
      %p274 = scmp.lt.s32.totalorder %s271, 1
      %s275 = scalar_select %p274, %s271, 1
      %s276 = smul.addr %s273, 2
      %s277 = sadd.s32 %s275, %s276
      %s278 = smul.addr %s277, 2
      %s279 = scalar_lea.vmem %s4, %s278
      %s280 = smul.u32 8, %s21
      %p281 = scmp.lt.s32.totalorder %s280, 15
      %s282 = scalar_select %p281, %s280, 15
      %p283 = scmp.lt.s32.totalorder %s23, 0
      %s284 = scalar_select %p283, %s23, 0
      %s285 = sadd.s32 %s284, %s282
      %s286 = smul.addr %s285, 4
      %s287 = scalar_lea.vmem %s0, %s286
      %s288 = smul.u32 8, %s21
      %s289 = smul.u32 16, %s23
      %s290 = smul.u32 2, %s22
      %p291 = scmp.lt.s32.totalorder %s289, 15
      %s292 = scalar_select %p291, %s289, 15
      %p293 = scmp.lt.s32.totalorder %s290, 1
      %s294 = scalar_select %p293, %s290, 1
      %s295 = smul.addr %s292, 2
      %s296 = sadd.s32 %s294, %s295
      %s297 = smul.addr %s296, 4
      %s298 = scalar_lea.vmem %s1, %s297
      %s299 = smul.u32 16, %s23
      %s300 = smul.u32 2, %s22
      %s301 = smul.u32 2, %s22
      %p302 = scmp.lt.s32.totalorder %s301, 1
      %s303 = scalar_select %p302, %s301, 1
      %s304 = scalar_lea.vmem %s2, %s303
      %s305 = smul.u32 2, %s22
      %s306 = smul.u32 8, %s21
      %s307 = smul.u32 2, %s22
      %p308 = scmp.lt.s32.totalorder %s306, 15
      %s309 = scalar_select %p308, %s306, 15
      %p310 = scmp.lt.s32.totalorder %s307, 1
      %s311 = scalar_select %p310, %s307, 1
      %s312 = smul.addr %s309, 2
      %s313 = sadd.s32 %s311, %s312
      %s314 = smul.addr %s313, 4
      %s315 = scalar_lea.vmem %s3, %s314
      %s316 = smul.u32 8, %s21
      %s317 = smul.u32 2, %s22
      %s318 = smul.u32 2, %s22
      %p319 = scmp.lt.s32.totalorder %s21, 1
      %s320 = scalar_select %p319, %s21, 1
      %p321 = scmp.lt.s32.totalorder %s318, 1
      %s322 = scalar_select %p321, %s318, 1
      %s323 = smul.addr %s320, 2
      %s324 = sadd.s32 %s322, %s323
      %s325 = smul.addr %s324, 2
      %s326 = scalar_lea.vmem %s4, %s325
      %s327 = smul.u32 2, %s22
      %p329 = scmp.eq.s32.totalorder %s23, 0
      // Predicated region
      $region33: #{resblock_forward.8} parent=31 // pred_check
        %p330 = pneg %p329
      $region34: #{resblock_forward.8} parent=31 // pred_check_branch
        %332 = sbr.rel (%p330) target = $region36
      $region35: #{resblock_forward.8} parent=31 // pred_region
        %333 = vst [vmem:[#allocation2] sm:$0xff] 0.0
        %334 = vst [vmem:[#allocation2 + $0x8] sm:$0xff] 0.0
        %335 = vst [vmem:[#allocation2 + $0x10] sm:$0xff] 0.0
        %336 = vst [vmem:[#allocation2 + $0x18] sm:$0xff] 0.0
        %337 = vst [vmem:[#allocation2 + $0x20] sm:$0xff] 0.0
        %338 = vst [vmem:[#allocation2 + $0x28] sm:$0xff] 0.0
        %339 = vst [vmem:[#allocation2 + $0x30] sm:$0xff] 0.0
        %340 = vst [vmem:[#allocation2 + $0x38] sm:$0xff] 0.0
        %341 = vst [vmem:[#allocation2 + $0x40] sm:$0xff] 0.0
        %342 = vst [vmem:[#allocation2 + $0x48] sm:$0xff] 0.0
        %343 = vst [vmem:[#allocation2 + $0x50] sm:$0xff] 0.0
        %344 = vst [vmem:[#allocation2 + $0x58] sm:$0xff] 0.0
        %345 = vst [vmem:[#allocation2 + $0x60] sm:$0xff] 0.0
        %346 = vst [vmem:[#allocation2 + $0x68] sm:$0xff] 0.0
        %347 = vst [vmem:[#allocation2 + $0x70] sm:$0xff] 0.0
        %348 = vst [vmem:[#allocation2 + $0x78] sm:$0xff] 0.0
      $region36: #{resblock_forward.8} parent=31 // pred_fallthru
        _
      %v349 = vld [vmem:[#allocation2] sm:$0xff]
      %v350 = vld [vmem:[#allocation2 + $0x8] sm:$0xff]
      %v351 = vld [vmem:[#allocation2 + $0x10] sm:$0xff]
      %v352 = vld [vmem:[#allocation2 + $0x18] sm:$0xff]
      %v353 = vld [vmem:[#allocation2 + $0x20] sm:$0xff]
      %v354 = vld [vmem:[#allocation2 + $0x28] sm:$0xff]
      %v355 = vld [vmem:[#allocation2 + $0x30] sm:$0xff]
      %v356 = vld [vmem:[#allocation2 + $0x38] sm:$0xff]
      %v357 = vld [vmem:[#allocation2 + $0x40] sm:$0xff]
      %v358 = vld [vmem:[#allocation2 + $0x48] sm:$0xff]
      %v359 = vld [vmem:[#allocation2 + $0x50] sm:$0xff]
      %v360 = vld [vmem:[#allocation2 + $0x58] sm:$0xff]
      %v361 = vld [vmem:[#allocation2 + $0x60] sm:$0xff]
      %v362 = vld [vmem:[#allocation2 + $0x68] sm:$0xff]
      %v363 = vld [vmem:[#allocation2 + $0x70] sm:$0xff]
      %v364 = vld [vmem:[#allocation2 + $0x78] sm:$0xff]
      %v365 = vld [vmem:[%s287] sm:$0xf]
      %v366 = vld [vmem:[%s287 + $0x4] sm:$0xf]
      %v367 = vld [vmem:[%s287 + $0x8] sm:$0xf]
      %v368 = vld [vmem:[%s287 + $0xc] sm:$0xf]
      %v369 = vld [vmem:[%s287 + $0x10] sm:$0xf]
      %v370 = vld [vmem:[%s287 + $0x14] sm:$0xf]
      %v371 = vld [vmem:[%s287 + $0x18] sm:$0xf]
      %v372 = vld [vmem:[%s287 + $0x1c] sm:$0xf]
      %v373 = vld [vmem:[%s298] sm:$0xff]
      %v374 = vld [vmem:[%s298 + $0x8] sm:$0xff]
      %v375 = vld [vmem:[%s298 + $0x10] sm:$0xff]
      %v376 = vld [vmem:[%s298 + $0x18] sm:$0xff]
      %v377 = vld [vmem:[%s298 + $0x20] sm:$0xff]
      %v378 = vld [vmem:[%s298 + $0x28] sm:$0xff]
      %v379 = vld [vmem:[%s298 + $0x30] sm:$0xff]
      %v380 = vld [vmem:[%s298 + $0x38] sm:$0xff]
      %v381 = vld [vmem:[%s298 + $0x40] sm:$0xff]
      %v382 = vld [vmem:[%s298 + $0x48] sm:$0xff]
      %v383 = vld [vmem:[%s298 + $0x50] sm:$0xff]
      %v384 = vld [vmem:[%s298 + $0x58] sm:$0xff]
      %v385 = vld [vmem:[%s298 + $0x60] sm:$0xff]
      %v386 = vld [vmem:[%s298 + $0x68] sm:$0xff]
      %v387 = vld [vmem:[%s298 + $0x70] sm:$0xff]
      %v388 = vld [vmem:[%s298 + $0x78] sm:$0xff]
      %v397 = vunpack.c.l.b16 %v365
      %v398 = vunpack.c.l.b16 %v366
      %v399 = vunpack.c.l.b16 %v367
      %v400 = vunpack.c.l.b16 %v368
      %v401 = vunpack.c.l.b16 %v369
      %v402 = vunpack.c.l.b16 %v370
      %v403 = vunpack.c.l.b16 %v371
      %v404 = vunpack.c.l.b16 %v372
      %v405 = vpack.c.b16 %v398, %v397
      %v406 = vpack.c.b16 %v400, %v399
      %v407 = vpack.c.b16 %v402, %v401
      %v408 = vpack.c.b16 %v404, %v403
      %v429 = vunpack.c.l.b16 %v373
      %v430 = vunpack.c.h.b16 %v373
      %v431 = vunpack.c.l.b16 %v374
      %v432 = vunpack.c.h.b16 %v374
      %v433 = vunpack.c.l.b16 %v375
      %v434 = vunpack.c.h.b16 %v375
      %v435 = vunpack.c.l.b16 %v376
      %v436 = vunpack.c.h.b16 %v376
      %v437 = vunpack.c.l.b16 %v377
      %v438 = vunpack.c.h.b16 %v377
      %v439 = vunpack.c.l.b16 %v378
      %v440 = vunpack.c.h.b16 %v378
      %v441 = vunpack.c.l.b16 %v379
      %v442 = vunpack.c.h.b16 %v379
      %v443 = vunpack.c.l.b16 %v380
      %v444 = vunpack.c.h.b16 %v380
      %v445 = vunpack.c.l.b16 %v381
      %v446 = vunpack.c.h.b16 %v381
      %v447 = vunpack.c.l.b16 %v382
      %v448 = vunpack.c.h.b16 %v382
      %v449 = vunpack.c.l.b16 %v383
      %v450 = vunpack.c.h.b16 %v383
      %v451 = vunpack.c.l.b16 %v384
      %v452 = vunpack.c.h.b16 %v384
      %v453 = vunpack.c.l.b16 %v385
      %v454 = vunpack.c.h.b16 %v385
      %v455 = vunpack.c.l.b16 %v386
      %v456 = vunpack.c.h.b16 %v386
      %v457 = vunpack.c.l.b16 %v387
      %v458 = vunpack.c.h.b16 %v387
      %v459 = vunpack.c.l.b16 %v388
      %v460 = vunpack.c.h.b16 %v388
      %v461 = vpack.c.b16 %v431, %v429
      %v462 = vpack.c.b16 %v432, %v430
      %v463 = vpack.c.b16 %v435, %v433
      %v464 = vpack.c.b16 %v436, %v434
      %v465 = vpack.c.b16 %v439, %v437
      %v466 = vpack.c.b16 %v440, %v438
      %v467 = vpack.c.b16 %v443, %v441
      %v468 = vpack.c.b16 %v444, %v442
      %v469 = vpack.c.b16 %v447, %v445
      %v470 = vpack.c.b16 %v448, %v446
      %v471 = vpack.c.b16 %v451, %v449
      %v472 = vpack.c.b16 %v452, %v450
      %v473 = vpack.c.b16 %v455, %v453
      %v474 = vpack.c.b16 %v456, %v454
      %v475 = vpack.c.b16 %v459, %v457
      %v476 = vpack.c.b16 %v460, %v458
      %493 = vmatprep.subr.bf16.mxu0 %v462
      %494 = vmatpush1.bf16.msra.mxu0 %v461
      %495 = vmatprep.subr.bf16.mxu0 %v464
      %496 = vmatpush1.bf16.msra.mxu0 %v463
      %497 = vmatprep.subr.bf16.mxu0 %v466
      %498 = vmatpush1.bf16.msra.mxu0 %v465
      %499 = vmatprep.subr.bf16.mxu0 %v468
      %500 = vmatpush1.bf16.msra.mxu0 %v467
      %501 = vmatprep.subr.bf16.mxu0 %v470
      %502 = vmatpush1.bf16.msra.mxu0 %v469
      %503 = vmatprep.subr.bf16.mxu0 %v472
      %504 = vmatpush1.bf16.msra.mxu0 %v471
      %505 = vmatprep.subr.bf16.mxu0 %v474
      %506 = vmatpush1.bf16.msra.mxu0 %v473
      %507 = vmatprep.subr.bf16.mxu0 %v476
      %508 = vmatpush1.bf16.msra.mxu0 %v475
      %509 = vmatprep.subr.bf16.mxu0 0
      %510 = vmatpush1.bf16.msra.mxu0 0
      %511 = vmatprep.subr.bf16.mxu0 0
      %512 = vmatpush1.bf16.msra.mxu0 0
      %513 = vmatprep.subr.bf16.mxu0 0
      %514 = vmatpush1.bf16.msra.mxu0 0
      %515 = vmatprep.subr.bf16.mxu0 0
      %516 = vmatpush1.bf16.msra.mxu0 0
      %517 = vmatprep.subr.bf16.mxu0 0
      %518 = vmatpush1.bf16.msra.mxu0 0
      %519 = vmatprep.subr.bf16.mxu0 0
      %520 = vmatpush1.bf16.msra.mxu0 0
      %521 = vmatprep.subr.bf16.mxu0 0
      %522 = vmatpush1.bf16.msra.mxu0 0
      %523 = vmatprep.subr.bf16.mxu0 0
      %524 = vmatpush1.bf16.msra.mxu0 0
      %525 = vmatprep.mubr.bf16.mxu0 0
      %526 = vmatmul.mubr.bf16.gmra.mrb[0].mxu0 %v405
      %v527 = vpop.f32.mrb[0].mxu0
      %v528 = vadd.f32 0.0, %v527
      %v529 = vpop.f32.mrb[0].mxu0
      %v530 = vadd.f32 0.0, %v529
      %v531 = vpop.f32.mrb[0].mxu0
      %v532 = vadd.f32 0.0, %v531
      %v533 = vpop.f32.mrb[0].mxu0
      %v534 = vadd.f32 0.0, %v533
      %535 = vmatprep.mubr.bf16.mxu0 0
      %536 = vmatmul.mubr.bf16.gmra.mrb[0].mxu0 %v406
      %v537 = vpop.f32.mrb[0].mxu0
      %v538 = vadd.f32 0.0, %v537
      %v539 = vpop.f32.mrb[0].mxu0
      %v540 = vadd.f32 0.0, %v539
      %v541 = vpop.f32.mrb[0].mxu0
      %v542 = vadd.f32 0.0, %v541
      %v543 = vpop.f32.mrb[0].mxu0
      %v544 = vadd.f32 0.0, %v543
      %545 = vmatprep.mubr.bf16.mxu0 0
      %546 = vmatmul.mubr.bf16.gmra.mrb[0].mxu0 %v407
      %v547 = vpop.f32.mrb[0].mxu0
      %v548 = vadd.f32 0.0, %v547
      %v549 = vpop.f32.mrb[0].mxu0
      %v550 = vadd.f32 0.0, %v549
      %v551 = vpop.f32.mrb[0].mxu0
      %v552 = vadd.f32 0.0, %v551
      %v553 = vpop.f32.mrb[0].mxu0
      %v554 = vadd.f32 0.0, %v553
      %555 = vmatprep.mubr.bf16.mxu0 0
      %556 = vmatmul.mubr.bf16.gmra.mrb[0].mxu0 %v408
      %v557 = vpop.f32.mrb[0].mxu0
      %v558 = vadd.f32 0.0, %v557
      %v559 = vpop.f32.mrb[0].mxu0
      %v560 = vadd.f32 0.0, %v559
      %v561 = vpop.f32.mrb[0].mxu0
      %v562 = vadd.f32 0.0, %v561
      %v563 = vpop.f32.mrb[0].mxu0
      %v564 = vadd.f32 0.0, %v563
      %565 = vdwg.mxu0
      %v566 = vadd.f32 %v349, %v528
      %v567 = vadd.f32 %v350, %v530
      %v568 = vadd.f32 %v351, %v532
      %v569 = vadd.f32 %v352, %v534
      %v570 = vadd.f32 %v353, %v538
      %v571 = vadd.f32 %v354, %v540
      %v572 = vadd.f32 %v355, %v542
      %v573 = vadd.f32 %v356, %v544
      %v574 = vadd.f32 %v357, %v548
      %v575 = vadd.f32 %v358, %v550
      %v576 = vadd.f32 %v359, %v552
      %v577 = vadd.f32 %v360, %v554
      %v578 = vadd.f32 %v361, %v558
      %v579 = vadd.f32 %v362, %v560
      %v580 = vadd.f32 %v363, %v562
      %v581 = vadd.f32 %v364, %v564
      %582 = vst [vmem:[#allocation2] sm:$0xff] %v566
      %583 = vst [vmem:[#allocation2 + $0x8] sm:$0xff] %v567
      %584 = vst [vmem:[#allocation2 + $0x10] sm:$0xff] %v568
      %585 = vst [vmem:[#allocation2 + $0x18] sm:$0xff] %v569
      %586 = vst [vmem:[#allocation2 + $0x20] sm:$0xff] %v570
      %587 = vst [vmem:[#allocation2 + $0x28] sm:$0xff] %v571
      %588 = vst [vmem:[#allocation2 + $0x30] sm:$0xff] %v572
      %589 = vst [vmem:[#allocation2 + $0x38] sm:$0xff] %v573
      %590 = vst [vmem:[#allocation2 + $0x40] sm:$0xff] %v574
      %591 = vst [vmem:[#allocation2 + $0x48] sm:$0xff] %v575
      %592 = vst [vmem:[#allocation2 + $0x50] sm:$0xff] %v576
      %593 = vst [vmem:[#allocation2 + $0x58] sm:$0xff] %v577
      %594 = vst [vmem:[#allocation2 + $0x60] sm:$0xff] %v578
      %595 = vst [vmem:[#allocation2 + $0x68] sm:$0xff] %v579
      %596 = vst [vmem:[#allocation2 + $0x70] sm:$0xff] %v580
      %597 = vst [vmem:[#allocation2 + $0x78] sm:$0xff] %v581
      // Predicated region
      $region37: #{resblock_forward.8} parent=31 // pred_check
        %p598 = pneg %p329
      $region38: #{resblock_forward.8} parent=31 // pred_check_branch
        %600 = sbr.rel (%p598) target = $region40
      $region39: #{resblock_forward.8} parent=31 // pred_region
        %v601 = vld [vmem:[#allocation2] sm:$0xff]
        %v602 = vld [vmem:[#allocation2 + $0x8] sm:$0xff]
        %v603 = vld [vmem:[#allocation2 + $0x10] sm:$0xff]
        %v604 = vld [vmem:[#allocation2 + $0x18] sm:$0xff]
        %v605 = vld [vmem:[#allocation2 + $0x20] sm:$0xff]
        %v606 = vld [vmem:[#allocation2 + $0x28] sm:$0xff]
        %v607 = vld [vmem:[#allocation2 + $0x30] sm:$0xff]
        %v608 = vld [vmem:[#allocation2 + $0x38] sm:$0xff]
        %v609 = vld [vmem:[#allocation2 + $0x40] sm:$0xff]
        %v610 = vld [vmem:[#allocation2 + $0x48] sm:$0xff]
        %v611 = vld [vmem:[#allocation2 + $0x50] sm:$0xff]
        %v612 = vld [vmem:[#allocation2 + $0x58] sm:$0xff]
        %v613 = vld [vmem:[#allocation2 + $0x60] sm:$0xff]
        %v614 = vld [vmem:[#allocation2 + $0x68] sm:$0xff]
        %v615 = vld [vmem:[#allocation2 + $0x70] sm:$0xff]
        %v616 = vld [vmem:[#allocation2 + $0x78] sm:$0xff]
        %v617 = vld [vmem:[%s304] sm:$0x3]
        %v619 = vlaneseq
        %v620 = vshrl.u32 %v619, 7
        %v621 = vsub.s32 0, %v620
        %v622 = vrot.slane %v617, %v621
        %v623 = vlaneseq
        %v624 = vshrl.u32 %v623, 7
        %v625 = vsub.s32 1, %v624
        %v626 = vrot.slane %v617, %v625
        %v629 = vadd.f32 %v601, %v622
        %v630 = vadd.f32 %v602, %v626
        %v631 = vadd.f32 %v603, %v622
        %v632 = vadd.f32 %v604, %v626
        %v633 = vadd.f32 %v605, %v622
        %v634 = vadd.f32 %v606, %v626
        %v635 = vadd.f32 %v607, %v622
        %v636 = vadd.f32 %v608, %v626
        %v637 = vadd.f32 %v609, %v622
        %v638 = vadd.f32 %v610, %v626
        %v639 = vadd.f32 %v611, %v622
        %v640 = vadd.f32 %v612, %v626
        %v641 = vadd.f32 %v613, %v622
        %v642 = vadd.f32 %v614, %v626
        %v643 = vadd.f32 %v615, %v622
        %v644 = vadd.f32 %v616, %v626
        %645 = vst [vmem:[#allocation2] sm:$0xff] %v629
        %646 = vst [vmem:[#allocation2 + $0x8] sm:$0xff] %v630
        %647 = vst [vmem:[#allocation2 + $0x10] sm:$0xff] %v631
        %648 = vst [vmem:[#allocation2 + $0x18] sm:$0xff] %v632
        %649 = vst [vmem:[#allocation2 + $0x20] sm:$0xff] %v633
        %650 = vst [vmem:[#allocation2 + $0x28] sm:$0xff] %v634
        %651 = vst [vmem:[#allocation2 + $0x30] sm:$0xff] %v635
        %652 = vst [vmem:[#allocation2 + $0x38] sm:$0xff] %v636
        %653 = vst [vmem:[#allocation2 + $0x40] sm:$0xff] %v637
        %654 = vst [vmem:[#allocation2 + $0x48] sm:$0xff] %v638
        %655 = vst [vmem:[#allocation2 + $0x50] sm:$0xff] %v639
        %656 = vst [vmem:[#allocation2 + $0x58] sm:$0xff] %v640
        %657 = vst [vmem:[#allocation2 + $0x60] sm:$0xff] %v641
        %658 = vst [vmem:[#allocation2 + $0x68] sm:$0xff] %v642
        %659 = vst [vmem:[#allocation2 + $0x70] sm:$0xff] %v643
        %660 = vst [vmem:[#allocation2 + $0x78] sm:$0xff] %v644
        %v661 = vld [vmem:[#allocation2] sm:$0xff]
        %v662 = vld [vmem:[#allocation2 + $0x8] sm:$0xff]
        %v663 = vld [vmem:[#allocation2 + $0x10] sm:$0xff]
        %v664 = vld [vmem:[#allocation2 + $0x18] sm:$0xff]
        %v665 = vld [vmem:[#allocation2 + $0x20] sm:$0xff]
        %v666 = vld [vmem:[#allocation2 + $0x28] sm:$0xff]
        %v667 = vld [vmem:[#allocation2 + $0x30] sm:$0xff]
        %v668 = vld [vmem:[#allocation2 + $0x38] sm:$0xff]
        %v669 = vld [vmem:[#allocation2 + $0x40] sm:$0xff]
        %v670 = vld [vmem:[#allocation2 + $0x48] sm:$0xff]
        %v671 = vld [vmem:[#allocation2 + $0x50] sm:$0xff]
        %v672 = vld [vmem:[#allocation2 + $0x58] sm:$0xff]
        %v673 = vld [vmem:[#allocation2 + $0x60] sm:$0xff]
        %v674 = vld [vmem:[#allocation2 + $0x68] sm:$0xff]
        %v675 = vld [vmem:[#allocation2 + $0x70] sm:$0xff]
        %v676 = vld [vmem:[#allocation2 + $0x78] sm:$0xff]
        %v677 = vpack.c.bf16 %v663, %v661
        %v678 = vpack.c.bf16 %v664, %v662
        %v679 = vpack.c.bf16 %v667, %v665
        %v680 = vpack.c.bf16 %v668, %v666
        %v681 = vpack.c.bf16 %v671, %v669
        %v682 = vpack.c.bf16 %v672, %v670
        %v683 = vpack.c.bf16 %v675, %v673
        %v684 = vpack.c.bf16 %v676, %v674
        %v693 = vunpack.c.l.b16 %v677
        %v694 = vunpack.c.l.b16 %v678
        %v695 = vunpack.c.h.b16 %v677
        %v696 = vunpack.c.h.b16 %v678
        %v697 = vunpack.c.l.b16 %v679
        %v698 = vunpack.c.l.b16 %v680
        %v699 = vunpack.c.h.b16 %v679
        %v700 = vunpack.c.h.b16 %v680
        %v701 = vunpack.c.l.b16 %v681
        %v702 = vunpack.c.l.b16 %v682
        %v703 = vunpack.c.h.b16 %v681
        %v704 = vunpack.c.h.b16 %v682
        %v705 = vunpack.c.l.b16 %v683
        %v706 = vunpack.c.l.b16 %v684
        %v707 = vunpack.c.h.b16 %v683
        %v708 = vunpack.c.h.b16 %v684
        %v709 = vpack.c.b16 %v694, %v693
        %v710 = vpack.c.b16 %v696, %v695
        %v711 = vpack.c.b16 %v698, %v697
        %v712 = vpack.c.b16 %v700, %v699
        %v713 = vpack.c.b16 %v702, %v701
        %v714 = vpack.c.b16 %v704, %v703
        %v715 = vpack.c.b16 %v706, %v705
        %v716 = vpack.c.b16 %v708, %v707
        %725 = vst [vmem:[%s315] sm:$0xff] %v709
        %726 = vst [vmem:[%s315 + $0x8] sm:$0xff] %v710
        %727 = vst [vmem:[%s315 + $0x10] sm:$0xff] %v711
        %728 = vst [vmem:[%s315 + $0x18] sm:$0xff] %v712
        %729 = vst [vmem:[%s315 + $0x20] sm:$0xff] %v713
        %730 = vst [vmem:[%s315 + $0x28] sm:$0xff] %v714
        %731 = vst [vmem:[%s315 + $0x30] sm:$0xff] %v715
        %732 = vst [vmem:[%s315 + $0x38] sm:$0xff] %v716
        %v733 = vadd.f32 %v661, %v663
        %v734 = vadd.f32 %v733, %v665
        %v735 = vadd.f32 %v734, %v667
        %v736 = vadd.f32 %v735, %v669
        %v737 = vadd.f32 %v736, %v671
        %v738 = vadd.f32 %v737, %v673
        %v739 = vadd.f32 %v738, %v675
        %v740 = vrot.slane %v739, 4
        %v741 = vadd.f32 %v739, %v740
        %v742 = vrot.slane %v741, 2
        %v743 = vadd.f32 %v741, %v742
        %v744 = vrot.slane %v743, 1
        %v745 = vadd.f32 %v743, %v744
        %v746 = vadd.f32 %v662, %v664
        %v747 = vadd.f32 %v746, %v666
        %v748 = vadd.f32 %v747, %v668
        %v749 = vadd.f32 %v748, %v670
        %v750 = vadd.f32 %v749, %v672
        %v751 = vadd.f32 %v750, %v674
        %v752 = vadd.f32 %v751, %v676
        %v753 = vrot.slane %v752, 4
        %v754 = vadd.f32 %v752, %v753
        %v755 = vrot.slane %v754, 2
        %v756 = vadd.f32 %v754, %v755
        %v757 = vrot.slane %v756, 1
        %v758 = vadd.f32 %v756, %v757
        %v761 = vcombine.low %v745, %v758
        %v763 = vunpack.c.l.s4 1966171168
        %v764 = vunpack.c.0.s8 %v763
        %v765 = vlaneseq
        %v766 = vshrl.u32 %v765, 7
        %v767 = vsub.s32 %v764, %v766
        %v768 = vrot.slane %v761, %v767
        %v770 = vunpack.c.l.s4 1966171168
        %v771 = vunpack.c.0.s8 %v770
        %v772 = vlaneseq
        %v773 = vshrl.u32 %v772, 7
        %v774 = vsub.s32 %v771, %v773
        %v775 = vrot.slane %v768, %v774
        %v777 = vlaneseq
        %vm778 = vcmp.ge.s32.totalorder %v777, 0
        %vm779 = vcmp.lt.s32.totalorder %v777, 256
        %vm780 = vmand %vm778, %vm779
        %781 = vst.msk [vmem:[%s326] ss:$2 sm:$0x3] %vm780, %v775
        %v782 = vmul.f32 %v661, %v661
        %v783 = vmul.f32 %v662, %v662
        %v784 = vmul.f32 %v663, %v663
        %v785 = vmul.f32 %v664, %v664
        %v786 = vmul.f32 %v665, %v665
        %v787 = vmul.f32 %v666, %v666
        %v788 = vmul.f32 %v667, %v667
        %v789 = vmul.f32 %v668, %v668
        %v790 = vmul.f32 %v669, %v669
        %v791 = vmul.f32 %v670, %v670
        %v792 = vmul.f32 %v671, %v671
        %v793 = vmul.f32 %v672, %v672
        %v794 = vmul.f32 %v673, %v673
        %v795 = vmul.f32 %v674, %v674
        %v796 = vmul.f32 %v675, %v675
        %v797 = vmul.f32 %v676, %v676
        %v798 = vadd.f32 %v782, %v784
        %v799 = vadd.f32 %v798, %v786
        %v800 = vadd.f32 %v799, %v788
        %v801 = vadd.f32 %v800, %v790
        %v802 = vadd.f32 %v801, %v792
        %v803 = vadd.f32 %v802, %v794
        %v804 = vadd.f32 %v803, %v796
        %v805 = vrot.slane %v804, 4
        %v806 = vadd.f32 %v804, %v805
        %v807 = vrot.slane %v806, 2
        %v808 = vadd.f32 %v806, %v807
        %v809 = vrot.slane %v808, 1
        %v810 = vadd.f32 %v808, %v809
        %v811 = vadd.f32 %v783, %v785
        %v812 = vadd.f32 %v811, %v787
        %v813 = vadd.f32 %v812, %v789
        %v814 = vadd.f32 %v813, %v791
        %v815 = vadd.f32 %v814, %v793
        %v816 = vadd.f32 %v815, %v795
        %v817 = vadd.f32 %v816, %v797
        %v818 = vrot.slane %v817, 4
        %v819 = vadd.f32 %v817, %v818
        %v820 = vrot.slane %v819, 2
        %v821 = vadd.f32 %v819, %v820
        %v822 = vrot.slane %v821, 1
        %v823 = vadd.f32 %v821, %v822
        %v826 = vcombine.low %v810, %v823
        %v828 = vunpack.c.l.s4 1966171168
        %v829 = vunpack.c.0.s8 %v828
        %v830 = vlaneseq
        %v831 = vshrl.u32 %v830, 7
        %v832 = vsub.s32 %v829, %v831
        %v833 = vrot.slane %v826, %v832
        %v835 = vunpack.c.l.s4 1966171168
        %v836 = vunpack.c.0.s8 %v835
        %v837 = vlaneseq
        %v838 = vshrl.u32 %v837, 7
        %v839 = vsub.s32 %v836, %v838
        %v840 = vrot.slane %v833, %v839
        %s842 = scalar_lea.vmem %s326, 1
        %843 = vst.msk [vmem:[%s842] ss:$2 sm:$0x3] %vm780, %v840
      $region40: #{resblock_forward.8} parent=31 // pred_fallthru
        _
      %s844 = smul.u32 8, %s21
      %s845 = smul.u32 2, %s22
      %p846 = scmp.lt.s32.totalorder %s844, 15
      %s847 = scalar_select %p846, %s844, 15
      %p848 = scmp.lt.s32.totalorder %s845, 1
      %s849 = scalar_select %p848, %s845, 1
      %s850 = smul.addr %s847, 2
      %s851 = sadd.s32 %s849, %s850
      %s852 = smul.addr %s851, 4
      %s853 = scalar_lea.vmem %s3, %s852
      %s854 = smul.u32 2, %s22
      %p855 = scmp.lt.s32.totalorder %s21, 1
      %s856 = scalar_select %p855, %s21, 1
      %p857 = scmp.lt.s32.totalorder %s854, 1
      %s858 = scalar_select %p857, %s854, 1
      %s859 = smul.addr %s856, 2
      %s860 = sadd.s32 %s858, %s859
      %s861 = smul.addr %s860, 2
      %s862 = scalar_lea.vmem %s4, %s861
      // Predicated region
      $region41: #{resblock_forward.8} parent=31 // pred_check
        %p863 = pneg %p137
      $region42: #{resblock_forward.8} parent=31 // pred_check_branch
        %865 = sbr.rel (%p863) target = $region44
      $region43: #{resblock_forward.8} parent=31 // pred_region
        %s866 = smul.u32 8, %s21
        %s867 = smul.u32 2, %s22
      $region44: #{resblock_forward.8} parent=31 // pred_fallthru
        _
      // Predicated region
      $region45: #{resblock_forward.8} parent=31 // pred_check
        %p868 = pneg %p165
      $region46: #{resblock_forward.8} parent=31 // pred_check_branch
        %870 = sbr.rel (%p868) target = $region48
      $region47: #{resblock_forward.8} parent=31 // pred_region
        %s871 = smul.u32 2, %s22
      $region48: #{resblock_forward.8} parent=31 // pred_fallthru
        _
    $region32: #{resblock_forward.8} parent=5 // pred_fallthru
      _
    %p872 = scmp.le.s32.totalorder 2, %s11
    // Predicated region
    $region49: #{resblock_forward.8} parent=5 // pred_check
      %p873 = pneg %p872
    $region50: #{resblock_forward.8} parent=5 // pred_check_branch
      %875 = sbr.rel (%p873) target = $region52
    $region51: #{resblock_forward.8} parent=5 // pred_region
      %s876 = ssub.s32 %s11, 2
      // Predicated region
      $region53: #{resblock_forward.8} parent=51 // pred_check
        %p877 = pneg %p143
      $region54: #{resblock_forward.8} parent=51 // pred_check_branch
        %879 = sbr.rel (%p877) target = $region56
      $region55: #{resblock_forward.8} parent=51 // pred_region
        %s880 = smul.u32 8, %s24
        %s881 = smul.u32 2, %s25
        %p882 = scmp.lt.s32.totalorder %s880, 15
        %s883 = scalar_select %p882, %s880, 15
        %p884 = scmp.lt.s32.totalorder %s881, 1
        %s885 = scalar_select %p884, %s881, 1
        %s886 = smul.addr %s883, 2
        %s887 = sadd.s32 %s885, %s886
        %s888 = smul.addr %s887, 4
        %s889 = scalar_lea.vmem %s3, %s888
      $region56: #{resblock_forward.8} parent=51 // pred_fallthru
        _
      // Predicated region
      $region57: #{resblock_forward.8} parent=51 // pred_check
        %p890 = pneg %p171
      $region58: #{resblock_forward.8} parent=51 // pred_check_branch
        %892 = sbr.rel (%p890) target = $region60
      $region59: #{resblock_forward.8} parent=51 // pred_region
        %s893 = smul.u32 2, %s25
        %p894 = scmp.lt.s32.totalorder %s24, 1
        %s895 = scalar_select %p894, %s24, 1
        %p896 = scmp.lt.s32.totalorder %s893, 1
        %s897 = scalar_select %p896, %s893, 1
        %s898 = smul.addr %s895, 2
        %s899 = sadd.s32 %s897, %s898
        %s900 = smul.addr %s899, 2
        %s901 = scalar_lea.vmem %s4, %s900
      $region60: #{resblock_forward.8} parent=51 // pred_fallthru
        _
    $region52: #{resblock_forward.8} parent=5 // pred_fallthru
      _
  $region6: #{resblock_forward.8} parent=0 // loop_footer
    %s15 = sadd.s32 1, %s11
  $region7: #{resblock_forward.8} parent=0 // loop_footer_branch
    %10 = sbr.rel target = $region3
  $region8: #{resblock_forward.8} parent=0 // loop_exit
    _

// kernel: resblock_forward.11
$region0: #{resblock_forward.11}
  #allocation0 [shape = 'u32[]', space=smem, size = 0x4, offset = 0x4, fixed_abs, tag = 'smem constant byte address 0x4 - core index']
  #allocation1 [shape = 'u32[144,128]{1,0:T(1,128)}', space=vmem, size = 0x12000, scoped, tag = 'internal scratch']
  %s0 = inlined_call_operand.vmem [shape: bf16[128,128], index: 0, kind: input, shape index: {}]
  %s1 = inlined_call_operand.vmem [shape: f32[1,128], index: 1, kind: input, shape index: {}]
  %s2 = inlined_call_operand.vmem [shape: f32[1,128], index: 2, kind: input, shape index: {}]
  %s3 = inlined_call_operand.vmem [shape: bf16[128,256], index: 3, kind: input, shape index: {}]
  %s4 = inlined_call_operand.vmem [shape: bf16[128,128], index: 4, kind: output, shape index: {}]
  %s5 = sld [smem:[#allocation0]]
  $region90: #{resblock_forward.11} parent=0
    _
  %s7 = ssub.s32 1, %s5
  %s8 = scalar_select 0, %s7, %s5
  $region1: #{resblock_forward.11} parent=0
    #allocation2 [shape = 'u8[32768]{0}', space=vmem, size = 0x8000, scoped, tag = 'input window, operand 3']
    loop: start=0, step=1, limit=4
    $region2: #{resblock_forward.11} parent=1 // loop_pre_header
      _
    $region3: #{resblock_forward.11} parent=1 // loop_header
      %s10 = sphi 0, %s14
      %p11 = scmp.ge.s32.totalorder %s10, 4
      %s20 = sphi 0, %s22
      %s23 = sphi 0, %s20
      %s24 = sphi 0, %s23
      %s40 = sphi 0, %s24
      %s44 = sphi 0, %s44
      %s46 = sphi 0, %s44
      %s47 = sphi 0, %s46
      %s61 = sphi 0, %s47
      %s65 = sphi 0, %s65
      %s67 = sphi 0, %s65
      %s68 = sphi 0, %s67
      %s82 = sphi 0, %s68
      %s88 = sphi 0, %s90
      %s91 = sphi 0, %s88
      %s92 = sphi 0, %s91
      %s108 = sphi 0, %s92
      %s114 = sphi 0, %s116
      %s117 = sphi 0, %s114
      %s118 = sphi 0, %s117
      %s134 = sphi 0, %s118
    $region4: #{resblock_forward.11} parent=1 // loop_header_branch
      %13 = sbr.rel (%p11) target = $region8
    $region5: #{resblock_forward.11} parent=1 // loop_body
      %s15 = ssub.s32 %s10, 1
      %s16 = ssub.s32 %s10, 2
      %s17 = sadd.s32 %s10, 1
      %s18 = ssub.s32 %s10, %s17
      %p19 = scmp.eq.s32.totalorder %s18, 0
      %s21 = sadd.s32 %s20, 1
      %s22 = scalar_select %p19, %s20, %s21
      %p25 = pneg %p19
      %p26 = scmp.eq.s32.totalorder %s10, 1
      %p27 = por %p25, %p26
      %p28 = scmp.ne.s32.totalorder %s20, %s23
      %p29 = scmp.eq.s32.totalorder %s10, 0
      %p30 = por %p28, %p29
      %p31 = scmp.ne.s32.totalorder %s20, %s23
      %p32 = scmp.eq.s32.totalorder %s15, 1
      %p33 = por %p31, %p32
      %p34 = scmp.ne.s32.totalorder %s23, %s24
      %p35 = scmp.eq.s32.totalorder %s15, 0
      %p36 = por %p34, %p35
      %p37 = scmp.ne.s32.totalorder %s23, %s24
      %p38 = scmp.eq.s32.totalorder %s16, 1
      %p39 = por %p37, %p38
      %p41 = scmp.ne.s32.totalorder %s24, %s40
      %p42 = scmp.eq.s32.totalorder %s16, 0
      %p43 = por %p41, %p42
      %s45 = sadd.s32 %s44, 1
      %p48 = scmp.eq.s32.totalorder %s10, 1
      %p49 = scmp.ne.s32.totalorder %s44, %s46
      %p50 = scmp.eq.s32.totalorder %s10, 0
      %p51 = por %p49, %p50
      %p52 = scmp.ne.s32.totalorder %s44, %s46
      %p53 = scmp.eq.s32.totalorder %s15, 1
      %p54 = por %p52, %p53
      %p55 = scmp.ne.s32.totalorder %s46, %s47
      %p56 = scmp.eq.s32.totalorder %s15, 0
      %p57 = por %p55, %p56
      %p58 = scmp.ne.s32.totalorder %s46, %s47
      %p59 = scmp.eq.s32.totalorder %s16, 1
      %p60 = por %p58, %p59
      %p62 = scmp.ne.s32.totalorder %s47, %s61
      %p63 = scmp.eq.s32.totalorder %s16, 0
      %p64 = por %p62, %p63
      %s66 = sadd.s32 %s65, 1
      %p69 = scmp.eq.s32.totalorder %s10, 1
      %p70 = scmp.ne.s32.totalorder %s65, %s67
      %p71 = scmp.eq.s32.totalorder %s10, 0
      %p72 = por %p70, %p71
      %p73 = scmp.ne.s32.totalorder %s65, %s67
      %p74 = scmp.eq.s32.totalorder %s15, 1
      %p75 = por %p73, %p74
      %p76 = scmp.ne.s32.totalorder %s67, %s68
      %p77 = scmp.eq.s32.totalorder %s15, 0
      %p78 = por %p76, %p77
      %p79 = scmp.ne.s32.totalorder %s67, %s68
      %p80 = scmp.eq.s32.totalorder %s16, 1
      %p81 = por %p79, %p80
      %p83 = scmp.ne.s32.totalorder %s68, %s82
      %p84 = scmp.eq.s32.totalorder %s16, 0
      %p85 = por %p83, %p84
      %s86 = ssub.s32 %s10, %s17
      %p87 = scmp.eq.s32.totalorder %s86, 0
      %s89 = sadd.s32 %s88, 1
      %s90 = scalar_select %p87, %s88, %s89
      %p93 = pneg %p87
      %p94 = scmp.eq.s32.totalorder %s10, 1
      %p95 = por %p93, %p94
      %p96 = scmp.ne.s32.totalorder %s88, %s91
      %p97 = scmp.eq.s32.totalorder %s10, 0
      %p98 = por %p96, %p97
      %p99 = scmp.ne.s32.totalorder %s88, %s91
      %p100 = scmp.eq.s32.totalorder %s15, 1
      %p101 = por %p99, %p100
      %p102 = scmp.ne.s32.totalorder %s91, %s92
      %p103 = scmp.eq.s32.totalorder %s15, 0
      %p104 = por %p102, %p103
      %p105 = scmp.ne.s32.totalorder %s91, %s92
      %p106 = scmp.eq.s32.totalorder %s16, 1
      %p107 = por %p105, %p106
      %p109 = scmp.ne.s32.totalorder %s92, %s108
      %p110 = scmp.eq.s32.totalorder %s16, 0
      %p111 = por %p109, %p110
      %s112 = ssub.s32 %s10, %s17
      %p113 = scmp.eq.s32.totalorder %s112, 0
      %s115 = sadd.s32 %s114, 1
      %s116 = scalar_select %p113, %s114, %s115
      %p119 = pneg %p113
      %p120 = scmp.eq.s32.totalorder %s10, 1
      %p121 = por %p119, %p120
      %p122 = scmp.ne.s32.totalorder %s114, %s117
      %p123 = scmp.eq.s32.totalorder %s10, 0
      %p124 = por %p122, %p123
      %p125 = scmp.ne.s32.totalorder %s114, %s117
      %p126 = scmp.eq.s32.totalorder %s15, 1
      %p127 = por %p125, %p126
      %p128 = scmp.ne.s32.totalorder %s117, %s118
      %p129 = scmp.eq.s32.totalorder %s15, 0
      %p130 = por %p128, %p129
      %p131 = scmp.ne.s32.totalorder %s117, %s118
      %p132 = scmp.eq.s32.totalorder %s16, 1
      %p133 = por %p131, %p132
      %p135 = scmp.ne.s32.totalorder %s118, %s134
      %p136 = scmp.eq.s32.totalorder %s16, 0
      %p137 = por %p135, %p136
      %p138 = scmp.le.s32.totalorder 1, %s10
      %p139 = scmp.lt.s32.totalorder %s10, 3
      %p140 = pnand %p138, %p139
      %p141 = pneg %p140
      // Predicated region
      $region9: #{resblock_forward.11} parent=5 // pred_check
        _
      $region10: #{resblock_forward.11} parent=5 // pred_check_branch
        %143 = sbr.rel (%p140) target = $region12
      $region11: #{resblock_forward.11} parent=5 // pred_region
        %s144 = ssub.s32 %s10, 1
        // Predicated region
        $region13: #{resblock_forward.11} parent=11 // pred_check
          %p145 = pneg %p57
        $region14: #{resblock_forward.11} parent=11 // pred_check_branch
          %147 = sbr.rel (%p145) target = $region16
        $region15: #{resblock_forward.11} parent=11 // pred_region
          _
        $region16: #{resblock_forward.11} parent=11 // pred_fallthru
          _
        // Predicated region
        $region17: #{resblock_forward.11} parent=11 // pred_check
          %p148 = pneg %p78
        $region18: #{resblock_forward.11} parent=11 // pred_check_branch
          %150 = sbr.rel (%p148) target = $region20
        $region19: #{resblock_forward.11} parent=11 // pred_region
          _
        $region20: #{resblock_forward.11} parent=11 // pred_fallthru
          _
      $region12: #{resblock_forward.11} parent=5 // pred_fallthru
        _
      %p151 = scmp.lt.s32.totalorder %s10, 2
      // Predicated region
      $region21: #{resblock_forward.11} parent=5 // pred_check
        %p152 = pneg %p151
      $region22: #{resblock_forward.11} parent=5 // pred_check_branch
        %154 = sbr.rel (%p152) target = $region24
      $region23: #{resblock_forward.11} parent=5 // pred_region
        // Predicated region
        $region25: #{resblock_forward.11} parent=23 // pred_check
          %p155 = pneg %p30
        $region26: #{resblock_forward.11} parent=23 // pred_check_branch
          %157 = sbr.rel (%p155) target = $region28
        $region27: #{resblock_forward.11} parent=23 // pred_region
          %s158 = smul.u32 8, %s10
          %p159 = scmp.lt.s32.totalorder %s158, 15
          %s160 = scalar_select %p159, %s158, 15
          %s161 = smul.addr %s160, 4
          %s162 = scalar_lea.vmem %s0, %s161
          %s163 = smul.u32 8, %s10
        $region28: #{resblock_forward.11} parent=23 // pred_fallthru
          _
        // Predicated region
        $region29: #{resblock_forward.11} parent=23 // pred_check
          %p164 = pneg %p98
        $region30: #{resblock_forward.11} parent=23 // pred_check_branch
          %166 = sbr.rel (%p164) target = $region32
        $region31: #{resblock_forward.11} parent=23 // pred_region
          %s167 = sand.u32 %s88, 1
          %s168 = sand.u32 %s88, 1
          %s169 = smul.addr %s168, 32
          %s170 = scalar_lea.vmem [#allocation2], %s169
          %s171 = smul.u32 8, %s10
          %s172 = smul.addr %s171, 2
          %s173 = sadd.s32 1, %s172
          %s174 = smul.addr %s173, 4
          %s175 = scalar_lea.vmem %s3, %s174
          // Predicated region
          $region33: #{resblock_forward.11} parent=31 // pred_check
            _
          $region34: #{resblock_forward.11} parent=31 // pred_check_branch
            %177 = sbr.rel (0) target = $region36
          $region35: #{resblock_forward.11} parent=31 // pred_region
            // Predicated region
            $region37: #{resblock_forward.11} parent=35 // pred_check
              _
            $region38: #{resblock_forward.11} parent=35 // pred_check_branch
              %179 = sbr.rel target = $region40
            $region39: #{resblock_forward.11} parent=35 // pred_region
              // Predicated region
              $region52: #{resblock_forward.11} parent=39 // pred_check
                _
              $region53: #{resblock_forward.11} parent=39 // pred_check_branch
                %208 = sbr.rel (0) target = $region55
              $region54: #{resblock_forward.11} parent=39 // pred_region
                loop: start=0, step=1, limit=1
                $region56: #{resblock_forward.11} parent=54 // loop_pre_header
                  _
                $region57: #{resblock_forward.11} parent=54 // loop_header
                  %s210 = sphi 0, %s214
                  %p211 = scmp.ge.s32.totalorder %s210, 1
                  %s215 = sphi %s175, %s175
                  %s216 = sphi %s170, %s170
                $region58: #{resblock_forward.11} parent=54 // loop_header_branch
                  %213 = sbr.rel (%p211) target = $region62
                $region59: #{resblock_forward.11} parent=54 // loop_body
                  _
                $region60: #{resblock_forward.11} parent=54 // loop_footer
                  %s214 = sadd.s32 1, %s210
                $region61: #{resblock_forward.11} parent=54 // loop_footer_branch
                  %209 = sbr.rel target = $region57
                $region62: #{resblock_forward.11} parent=54 // loop_exit
                  _
                loop: start=0, step=1, limit=1
                $region63: #{resblock_forward.11} parent=54 // loop_pre_header
                  _
                $region64: #{resblock_forward.11} parent=54 // loop_header
                  %s219 = sphi 0, %s223
                  %p220 = scmp.ge.s32.totalorder %s219, 1
                  %s224 = sphi %s175, %s175
                  %s225 = sphi %s170, %s170
                $region65: #{resblock_forward.11} parent=54 // loop_header_branch
                  %222 = sbr.rel (%p220) target = $region69
                $region66: #{resblock_forward.11} parent=54 // loop_body
                  %v226 = vld [vmem:[%s224] sm:$0xf]
                  %227 = vst [vmem:[%s225] sm:$0xf] %v226
                  %v228 = vld [vmem:[%s224 + $0x8] sm:$0xf]
                  %229 = vst [vmem:[%s225 + $0x4] sm:$0xf] %v228
                  %v230 = vld [vmem:[%s224 + $0x10] sm:$0xf]
                  %231 = vst [vmem:[%s225 + $0x8] sm:$0xf] %v230
                  %v232 = vld [vmem:[%s224 + $0x18] sm:$0xf]
                  %233 = vst [vmem:[%s225 + $0xc] sm:$0xf] %v232
                  %v234 = vld [vmem:[%s224 + $0x20] sm:$0xf]
                  %235 = vst [vmem:[%s225 + $0x10] sm:$0xf] %v234
                  %v236 = vld [vmem:[%s224 + $0x28] sm:$0xf]
                  %237 = vst [vmem:[%s225 + $0x14] sm:$0xf] %v236
                  %v238 = vld [vmem:[%s224 + $0x30] sm:$0xf]
                  %239 = vst [vmem:[%s225 + $0x18] sm:$0xf] %v238
                  %v240 = vld [vmem:[%s224 + $0x38] sm:$0xf]
                  %241 = vst [vmem:[%s225 + $0x1c] sm:$0xf] %v240
                $region67: #{resblock_forward.11} parent=54 // loop_footer
                  %s223 = sadd.s32 1, %s219
                $region68: #{resblock_forward.11} parent=54 // loop_footer_branch
                  %218 = sbr.rel target = $region64
                $region69: #{resblock_forward.11} parent=54 // loop_exit
                  _
              $region55: #{resblock_forward.11} parent=39 // pred_fallthru
                _
            $region40: #{resblock_forward.11} parent=35 // pred_fallthru
              _
            // Predicated region
            $region41: #{resblock_forward.11} parent=35 // pred_check
              _
            $region42: #{resblock_forward.11} parent=35 // pred_check_branch
              %181 = sbr.rel (0) target = $region44
            $region43: #{resblock_forward.11} parent=35 // pred_region
              loop: start=0, step=1, limit=1
              $region45: #{resblock_forward.11} parent=43 // loop_pre_header
                _
              $region46: #{resblock_forward.11} parent=43 // loop_header
                %s184 = sphi 0, %s188
                %p185 = scmp.ge.s32.totalorder %s184, 1
                %s189 = sphi %s175, %s175
                %s190 = sphi %s170, %s170
              $region47: #{resblock_forward.11} parent=43 // loop_header_branch
                %187 = sbr.rel (%p185) target = $region51
              $region48: #{resblock_forward.11} parent=43 // loop_body
                %v191 = vld [vmem:[%s189] sm:$0xf]
                %192 = vst [vmem:[%s190] sm:$0xf] %v191
                %v193 = vld [vmem:[%s189 + $0x8] sm:$0xf]
                %194 = vst [vmem:[%s190 + $0x4] sm:$0xf] %v193
                %v195 = vld [vmem:[%s189 + $0x10] sm:$0xf]
                %196 = vst [vmem:[%s190 + $0x8] sm:$0xf] %v195
                %v197 = vld [vmem:[%s189 + $0x18] sm:$0xf]
                %198 = vst [vmem:[%s190 + $0xc] sm:$0xf] %v197
                %v199 = vld [vmem:[%s189 + $0x20] sm:$0xf]
                %200 = vst [vmem:[%s190 + $0x10] sm:$0xf] %v199
                %v201 = vld [vmem:[%s189 + $0x28] sm:$0xf]
                %202 = vst [vmem:[%s190 + $0x14] sm:$0xf] %v201
                %v203 = vld [vmem:[%s189 + $0x30] sm:$0xf]
                %204 = vst [vmem:[%s190 + $0x18] sm:$0xf] %v203
                %v205 = vld [vmem:[%s189 + $0x38] sm:$0xf]
                %206 = vst [vmem:[%s190 + $0x1c] sm:$0xf] %v205
              $region49: #{resblock_forward.11} parent=43 // loop_footer
                %s188 = sadd.s32 1, %s184
              $region50: #{resblock_forward.11} parent=43 // loop_footer_branch
                %183 = sbr.rel target = $region46
              $region51: #{resblock_forward.11} parent=43 // loop_exit
                _
            $region44: #{resblock_forward.11} parent=35 // pred_fallthru
              _
          $region36: #{resblock_forward.11} parent=31 // pred_fallthru
            _
          %242 = vnop
        $region32: #{resblock_forward.11} parent=23 // pred_fallthru
          _
      $region24: #{resblock_forward.11} parent=5 // pred_fallthru
        _
      %p243 = scmp.le.s32.totalorder 1, %s10
      %p244 = scmp.lt.s32.totalorder %s10, 3
      %p245 = pnand %p243, %p244
      %p246 = pneg %p245
      // Predicated region
      $region70: #{resblock_forward.11} parent=5 // pred_check
        _
      $region71: #{resblock_forward.11} parent=5 // pred_check_branch
        %248 = sbr.rel (%p245) target = $region73
      $region72: #{resblock_forward.11} parent=5 // pred_region
        %s249 = ssub.s32 %s10, 1
        %s250 = sand.u32 %s91, 1
        %s251 = sand.u32 %s91, 1
        %s252 = smul.addr %s251, 32
        %s253 = scalar_lea.vmem [#allocation2], %s252
        // Predicated region
        $region74: #{resblock_forward.11} parent=72 // pred_check
          %p254 = pneg %p104
        $region75: #{resblock_forward.11} parent=72 // pred_check_branch
          %256 = sbr.rel (%p254) target = $region77
        $region76: #{resblock_forward.11} parent=72 // pred_region
          _
        $region77: #{resblock_forward.11} parent=72 // pred_fallthru
          _
        %s257 = smul.u32 8, %s15
        %p258 = scmp.lt.s32.totalorder %s257, 15
        %s259 = scalar_select %p258, %s257, 15
        %s260 = smul.addr %s259, 4
        %s261 = scalar_lea.vmem %s0, %s260
        %p262 = pneg %p36
        %p263 = pneg %p33
        %p264 = pneg %p57
        %p265 = pneg %p54
        %p266 = pneg %p78
        %p267 = pneg %p75
        %s268 = sand.u32 %s91, 1
        %s269 = sand.u32 %s91, 1
        %s270 = smul.addr %s269, 32
        %s271 = scalar_lea.vmem [#allocation2], %s270
        %p272 = pneg %p104
        %p273 = pneg %p101
        %p274 = pneg %p130
        %p275 = pneg %p127
        %s276 = smul.u32 8, %s15
        %p277 = scmp.lt.s32.totalorder %s276, 15
        %s278 = scalar_select %p277, %s276, 15
        %s279 = smul.addr %s278, 4
        %s280 = scalar_lea.vmem %s4, %s279
        %s281 = smul.u32 8, %s15
        %p282 = scmp.lt.s32.totalorder %s281, 15
        %s283 = scalar_select %p282, %s281, 15
        %s284 = smul.addr %s283, 4
        %s285 = scalar_lea.vmem %s0, %s284
        %s286 = smul.u32 8, %s15
        %s287 = smul.u32 8, %s15
        %s288 = smul.u32 8, %s15
        %p289 = scmp.lt.s32.totalorder %s288, 15
        %s290 = scalar_select %p289, %s288, 15
        %s291 = smul.addr %s290, 4
        %s292 = scalar_lea.vmem %s4, %s291
        %s293 = smul.u32 8, %s15
        %v294 = vld [vmem:[%s285] sm:$0xf]
        %v295 = vld [vmem:[%s285 + $0x4] sm:$0xf]
        %v296 = vld [vmem:[%s285 + $0x8] sm:$0xf]
        %v297 = vld [vmem:[%s285 + $0xc] sm:$0xf]
        %v298 = vld [vmem:[%s285 + $0x10] sm:$0xf]
        %v299 = vld [vmem:[%s285 + $0x14] sm:$0xf]
        %v300 = vld [vmem:[%s285 + $0x18] sm:$0xf]
        %v301 = vld [vmem:[%s285 + $0x1c] sm:$0xf]
        %v302 = vunpack.c.l.bf16 %v294
        %v303 = vunpack.c.l.bf16 %v295
        %v304 = vunpack.c.l.bf16 %v296
        %v305 = vunpack.c.l.bf16 %v297
        %v306 = vunpack.c.l.bf16 %v298
        %v307 = vunpack.c.l.bf16 %v299
        %v308 = vunpack.c.l.bf16 %v300
        %v309 = vunpack.c.l.bf16 %v301
        %v310 = vld [vmem:[%s1] sm:$0x1]
        %v312 = vlaneseq
        %v313 = vshrl.u32 %v312, 7
        %v314 = vsub.s32 0, %v313
        %v315 = vrot.slane %v310, %v314
        %v317 = vmul.f32 %v302, %v315
        %v318 = vmul.f32 %v303, %v315
        %v319 = vmul.f32 %v304, %v315
        %v320 = vmul.f32 %v305, %v315
        %v321 = vmul.f32 %v306, %v315
        %v322 = vmul.f32 %v307, %v315
        %v323 = vmul.f32 %v308, %v315
        %v324 = vmul.f32 %v309, %v315
        %v325 = vld [vmem:[%s2] sm:$0x1]
        %v327 = vlaneseq
        %v328 = vshrl.u32 %v327, 7
        %v329 = vsub.s32 0, %v328
        %v330 = vrot.slane %v325, %v329
        %v332 = vadd.f32 %v317, %v330
        %v333 = vadd.f32 %v318, %v330
        %v334 = vadd.f32 %v319, %v330
        %v335 = vadd.f32 %v320, %v330
        %v336 = vadd.f32 %v321, %v330
        %v337 = vadd.f32 %v322, %v330
        %v338 = vadd.f32 %v323, %v330
        %v339 = vadd.f32 %v324, %v330
        %v340 = vmax.f32 %v332, 0.0
        %v341 = vmax.f32 %v333, 0.0
        %v342 = vmax.f32 %v334, 0.0
        %v343 = vmax.f32 %v335, 0.0
        %v344 = vmax.f32 %v336, 0.0
        %v345 = vmax.f32 %v337, 0.0
        %v346 = vmax.f32 %v338, 0.0
        %v347 = vmax.f32 %v339, 0.0
        %v348 = vld [vmem:[%s253] sm:$0xf]
        %v349 = vld [vmem:[%s253 + $0x4] sm:$0xf]
        %v350 = vld [vmem:[%s253 + $0x8] sm:$0xf]
        %v351 = vld [vmem:[%s253 + $0xc] sm:$0xf]
        %v352 = vld [vmem:[%s253 + $0x10] sm:$0xf]
        %v353 = vld [vmem:[%s253 + $0x14] sm:$0xf]
        %v354 = vld [vmem:[%s253 + $0x18] sm:$0xf]
        %v355 = vld [vmem:[%s253 + $0x1c] sm:$0xf]
        %v356 = vunpack.c.l.bf16 %v348
        %v357 = vunpack.c.l.bf16 %v349
        %v358 = vunpack.c.l.bf16 %v350
        %v359 = vunpack.c.l.bf16 %v351
        %v360 = vunpack.c.l.bf16 %v352
        %v361 = vunpack.c.l.bf16 %v353
        %v362 = vunpack.c.l.bf16 %v354
        %v363 = vunpack.c.l.bf16 %v355
        %v364 = vadd.f32 %v340, %v356
        %v365 = vadd.f32 %v341, %v357
        %v366 = vadd.f32 %v342, %v358
        %v367 = vadd.f32 %v343, %v359
        %v368 = vadd.f32 %v344, %v360
        %v369 = vadd.f32 %v345, %v361
        %v370 = vadd.f32 %v346, %v362
        %v371 = vadd.f32 %v347, %v363
        %v372 = vpack.c.bf16 %v365, %v364
        %v373 = vpack.c.bf16 %v367, %v366
        %v374 = vpack.c.bf16 %v369, %v368
        %v375 = vpack.c.bf16 %v371, %v370
        %v380 = vunpack.c.l.b16 %v372
        %v381 = vunpack.c.h.b16 %v372
        %v382 = vunpack.c.l.b16 %v373
        %v383 = vunpack.c.h.b16 %v373
        %v384 = vunpack.c.l.b16 %v374
        %v385 = vunpack.c.h.b16 %v374
        %v386 = vunpack.c.l.b16 %v375
        %v387 = vunpack.c.h.b16 %v375
        %v388 = vpack.c.b16 %v380, %v380
        %v389 = vpack.c.b16 %v381, %v381
        %v390 = vpack.c.b16 %v382, %v382
        %v391 = vpack.c.b16 %v383, %v383
        %v392 = vpack.c.b16 %v384, %v384
        %v393 = vpack.c.b16 %v385, %v385
        %v394 = vpack.c.b16 %v386, %v386
        %v395 = vpack.c.b16 %v387, %v387
        %404 = vst [vmem:[%s292] sm:$0xf] %v388
        %405 = vst [vmem:[%s292 + $0x4] sm:$0xf] %v389
        %406 = vst [vmem:[%s292 + $0x8] sm:$0xf] %v390
        %407 = vst [vmem:[%s292 + $0xc] sm:$0xf] %v391
        %408 = vst [vmem:[%s292 + $0x10] sm:$0xf] %v392
        %409 = vst [vmem:[%s292 + $0x14] sm:$0xf] %v393
        %410 = vst [vmem:[%s292 + $0x18] sm:$0xf] %v394
        %411 = vst [vmem:[%s292 + $0x1c] sm:$0xf] %v395
        %s412 = smul.u32 8, %s15
        %p413 = scmp.lt.s32.totalorder %s412, 15
        %s414 = scalar_select %p413, %s412, 15
        %s415 = smul.addr %s414, 4
        %s416 = scalar_lea.vmem %s4, %s415
        // Predicated region
        $region78: #{resblock_forward.11} parent=72 // pred_check
          %p417 = pneg %p127
        $region79: #{resblock_forward.11} parent=72 // pred_check_branch
          %419 = sbr.rel (%p417) target = $region81
        $region80: #{resblock_forward.11} parent=72 // pred_region
          %s420 = smul.u32 8, %s15
        $region81: #{resblock_forward.11} parent=72 // pred_fallthru
          _
      $region73: #{resblock_forward.11} parent=5 // pred_fallthru
        _
      %p421 = scmp.le.s32.totalorder 2, %s10
      // Predicated region
      $region82: #{resblock_forward.11} parent=5 // pred_check
        %p422 = pneg %p421
      $region83: #{resblock_forward.11} parent=5 // pred_check_branch
        %424 = sbr.rel (%p422) target = $region85
      $region84: #{resblock_forward.11} parent=5 // pred_region
        %s425 = ssub.s32 %s10, 2
        // Predicated region
        $region86: #{resblock_forward.11} parent=84 // pred_check
          %p426 = pneg %p133
        $region87: #{resblock_forward.11} parent=84 // pred_check_branch
          %428 = sbr.rel (%p426) target = $region89
        $region88: #{resblock_forward.11} parent=84 // pred_region
          %s429 = smul.u32 8, %s16
          %p430 = scmp.lt.s32.totalorder %s429, 15
          %s431 = scalar_select %p430, %s429, 15
          %s432 = smul.addr %s431, 4
          %s433 = scalar_lea.vmem %s4, %s432
        $region89: #{resblock_forward.11} parent=84 // pred_fallthru
          _
      $region85: #{resblock_forward.11} parent=5 // pred_fallthru
        _
    $region6: #{resblock_forward.11} parent=1 // loop_footer
      %s14 = sadd.s32 1, %s10
    $region7: #{resblock_forward.11} parent=1 // loop_footer_branch
      %9 = sbr.rel target = $region3
    $region8: #{resblock_forward.11} parent=1 // loop_exit
      _

// kernel: resblock_forward.13
$region0: #{resblock_forward.13}
  #allocation0 [shape = 'u32[]', space=smem, size = 0x4, offset = 0x4, fixed_abs, tag = 'smem constant byte address 0x4 - core index']
  #allocation1 [shape = 'u32[144,128]{1,0:T(1,128)}', space=vmem, size = 0x12000, scoped, tag = 'internal scratch']
  %s0 = inlined_call_operand.vmem [shape: bf16[128,128], index: 0, kind: input, shape index: {}]
  %s1 = inlined_call_operand.vmem [shape: f32[1,128], index: 1, kind: input, shape index: {}]
  %s2 = inlined_call_operand.vmem [shape: f32[1,128], index: 2, kind: input, shape index: {}]
  %s3 = inlined_call_operand.vmem [shape: bf16[128,128], index: 3, kind: output, shape index: {}]
  %s4 = sld [smem:[#allocation0]]
  $region45: #{resblock_forward.13} parent=0
    _
  %s6 = ssub.s32 1, %s4
  %s7 = scalar_select 0, %s6, %s4
  loop: start=0, step=1, limit=4
  $region2: #{resblock_forward.13} parent=0 // loop_pre_header
    _
  $region3: #{resblock_forward.13} parent=0 // loop_header
    %s9 = sphi 0, %s13
    %p10 = scmp.ge.s32.totalorder %s9, 4
    %s19 = sphi 0, %s21
    %s22 = sphi 0, %s19
    %s23 = sphi 0, %s22
    %s39 = sphi 0, %s23
    %s43 = sphi 0, %s43
    %s45 = sphi 0, %s43
    %s46 = sphi 0, %s45
    %s60 = sphi 0, %s46
    %s64 = sphi 0, %s64
    %s66 = sphi 0, %s64
    %s67 = sphi 0, %s66
    %s81 = sphi 0, %s67
    %s87 = sphi 0, %s89
    %s90 = sphi 0, %s87
    %s91 = sphi 0, %s90
    %s107 = sphi 0, %s91
  $region4: #{resblock_forward.13} parent=0 // loop_header_branch
    %12 = sbr.rel (%p10) target = $region8
  $region5: #{resblock_forward.13} parent=0 // loop_body
    %s14 = ssub.s32 %s9, 1
    %s15 = ssub.s32 %s9, 2
    %s16 = sadd.s32 %s9, 1
    %s17 = ssub.s32 %s9, %s16
    %p18 = scmp.eq.s32.totalorder %s17, 0
    %s20 = sadd.s32 %s19, 1
    %s21 = scalar_select %p18, %s19, %s20
    %p24 = pneg %p18
    %p25 = scmp.eq.s32.totalorder %s9, 1
    %p26 = por %p24, %p25
    %p27 = scmp.ne.s32.totalorder %s19, %s22
    %p28 = scmp.eq.s32.totalorder %s9, 0
    %p29 = por %p27, %p28
    %p30 = scmp.ne.s32.totalorder %s19, %s22
    %p31 = scmp.eq.s32.totalorder %s14, 1
    %p32 = por %p30, %p31
    %p33 = scmp.ne.s32.totalorder %s22, %s23
    %p34 = scmp.eq.s32.totalorder %s14, 0
    %p35 = por %p33, %p34
    %p36 = scmp.ne.s32.totalorder %s22, %s23
    %p37 = scmp.eq.s32.totalorder %s15, 1
    %p38 = por %p36, %p37
    %p40 = scmp.ne.s32.totalorder %s23, %s39
    %p41 = scmp.eq.s32.totalorder %s15, 0
    %p42 = por %p40, %p41
    %s44 = sadd.s32 %s43, 1
    %p47 = scmp.eq.s32.totalorder %s9, 1
    %p48 = scmp.ne.s32.totalorder %s43, %s45
    %p49 = scmp.eq.s32.totalorder %s9, 0
    %p50 = por %p48, %p49
    %p51 = scmp.ne.s32.totalorder %s43, %s45
    %p52 = scmp.eq.s32.totalorder %s14, 1
    %p53 = por %p51, %p52
    %p54 = scmp.ne.s32.totalorder %s45, %s46
    %p55 = scmp.eq.s32.totalorder %s14, 0
    %p56 = por %p54, %p55
    %p57 = scmp.ne.s32.totalorder %s45, %s46
    %p58 = scmp.eq.s32.totalorder %s15, 1
    %p59 = por %p57, %p58
    %p61 = scmp.ne.s32.totalorder %s46, %s60
    %p62 = scmp.eq.s32.totalorder %s15, 0
    %p63 = por %p61, %p62
    %s65 = sadd.s32 %s64, 1
    %p68 = scmp.eq.s32.totalorder %s9, 1
    %p69 = scmp.ne.s32.totalorder %s64, %s66
    %p70 = scmp.eq.s32.totalorder %s9, 0
    %p71 = por %p69, %p70
    %p72 = scmp.ne.s32.totalorder %s64, %s66
    %p73 = scmp.eq.s32.totalorder %s14, 1
    %p74 = por %p72, %p73
    %p75 = scmp.ne.s32.totalorder %s66, %s67
    %p76 = scmp.eq.s32.totalorder %s14, 0
    %p77 = por %p75, %p76
    %p78 = scmp.ne.s32.totalorder %s66, %s67
    %p79 = scmp.eq.s32.totalorder %s15, 1
    %p80 = por %p78, %p79
    %p82 = scmp.ne.s32.totalorder %s67, %s81
    %p83 = scmp.eq.s32.totalorder %s15, 0
    %p84 = por %p82, %p83
    %s85 = ssub.s32 %s9, %s16
    %p86 = scmp.eq.s32.totalorder %s85, 0
    %s88 = sadd.s32 %s87, 1
    %s89 = scalar_select %p86, %s87, %s88
    %p92 = pneg %p86
    %p93 = scmp.eq.s32.totalorder %s9, 1
    %p94 = por %p92, %p93
    %p95 = scmp.ne.s32.totalorder %s87, %s90
    %p96 = scmp.eq.s32.totalorder %s9, 0
    %p97 = por %p95, %p96
    %p98 = scmp.ne.s32.totalorder %s87, %s90
    %p99 = scmp.eq.s32.totalorder %s14, 1
    %p100 = por %p98, %p99
    %p101 = scmp.ne.s32.totalorder %s90, %s91
    %p102 = scmp.eq.s32.totalorder %s14, 0
    %p103 = por %p101, %p102
    %p104 = scmp.ne.s32.totalorder %s90, %s91
    %p105 = scmp.eq.s32.totalorder %s15, 1
    %p106 = por %p104, %p105
    %p108 = scmp.ne.s32.totalorder %s91, %s107
    %p109 = scmp.eq.s32.totalorder %s15, 0
    %p110 = por %p108, %p109
    %p111 = scmp.le.s32.totalorder 1, %s9
    %p112 = scmp.lt.s32.totalorder %s9, 3
    %p113 = pnand %p111, %p112
    %p114 = pneg %p113
    // Predicated region
    $region9: #{resblock_forward.13} parent=5 // pred_check
      _
    $region10: #{resblock_forward.13} parent=5 // pred_check_branch
      %116 = sbr.rel (%p113) target = $region12
    $region11: #{resblock_forward.13} parent=5 // pred_region
      %s117 = ssub.s32 %s9, 1
      // Predicated region
      $region13: #{resblock_forward.13} parent=11 // pred_check
        %p118 = pneg %p56
      $region14: #{resblock_forward.13} parent=11 // pred_check_branch
        %120 = sbr.rel (%p118) target = $region16
      $region15: #{resblock_forward.13} parent=11 // pred_region
        _
      $region16: #{resblock_forward.13} parent=11 // pred_fallthru
        _
      // Predicated region
      $region17: #{resblock_forward.13} parent=11 // pred_check
        %p121 = pneg %p77
      $region18: #{resblock_forward.13} parent=11 // pred_check_branch
        %123 = sbr.rel (%p121) target = $region20
      $region19: #{resblock_forward.13} parent=11 // pred_region
        _
      $region20: #{resblock_forward.13} parent=11 // pred_fallthru
        _
    $region12: #{resblock_forward.13} parent=5 // pred_fallthru
      _
    %p124 = scmp.lt.s32.totalorder %s9, 2
    // Predicated region
    $region21: #{resblock_forward.13} parent=5 // pred_check
      %p125 = pneg %p124
    $region22: #{resblock_forward.13} parent=5 // pred_check_branch
      %127 = sbr.rel (%p125) target = $region24
    $region23: #{resblock_forward.13} parent=5 // pred_region
      // Predicated region
      $region25: #{resblock_forward.13} parent=23 // pred_check
        %p128 = pneg %p29
      $region26: #{resblock_forward.13} parent=23 // pred_check_branch
        %130 = sbr.rel (%p128) target = $region28
      $region27: #{resblock_forward.13} parent=23 // pred_region
        %s131 = smul.u32 8, %s9
        %p132 = scmp.lt.s32.totalorder %s131, 15
        %s133 = scalar_select %p132, %s131, 15
        %s134 = smul.addr %s133, 4
        %s135 = scalar_lea.vmem %s0, %s134
        %s136 = smul.u32 8, %s9
      $region28: #{resblock_forward.13} parent=23 // pred_fallthru
        _
    $region24: #{resblock_forward.13} parent=5 // pred_fallthru
      _
    %p137 = scmp.le.s32.totalorder 1, %s9
    %p138 = scmp.lt.s32.totalorder %s9, 3
    %p139 = pnand %p137, %p138
    %p140 = pneg %p139
    // Predicated region
    $region29: #{resblock_forward.13} parent=5 // pred_check
      _
    $region30: #{resblock_forward.13} parent=5 // pred_check_branch
      %142 = sbr.rel (%p139) target = $region32
    $region31: #{resblock_forward.13} parent=5 // pred_region
      %s143 = ssub.s32 %s9, 1
      %s144 = smul.u32 8, %s14
      %p145 = scmp.lt.s32.totalorder %s144, 15
      %s146 = scalar_select %p145, %s144, 15
      %s147 = smul.addr %s146, 4
      %s148 = scalar_lea.vmem %s0, %s147
      %p149 = pneg %p35
      %p150 = pneg %p32
      %p151 = pneg %p56
      %p152 = pneg %p53
      %p153 = pneg %p77
      %p154 = pneg %p74
      %p155 = pneg %p103
      %p156 = pneg %p100
      %s157 = smul.u32 8, %s14
      %p158 = scmp.lt.s32.totalorder %s157, 15
      %s159 = scalar_select %p158, %s157, 15
      %s160 = smul.addr %s159, 4
      %s161 = scalar_lea.vmem %s3, %s160
      %s162 = smul.u32 8, %s14
      %p163 = scmp.lt.s32.totalorder %s162, 15
      %s164 = scalar_select %p163, %s162, 15
      %s165 = smul.addr %s164, 4
      %s166 = scalar_lea.vmem %s0, %s165
      %s167 = smul.u32 8, %s14
      %s168 = smul.u32 8, %s14
      %p169 = scmp.lt.s32.totalorder %s168, 15
      %s170 = scalar_select %p169, %s168, 15
      %s171 = smul.addr %s170, 4
      %s172 = scalar_lea.vmem %s3, %s171
      %s173 = smul.u32 8, %s14
      %v174 = vld [vmem:[%s166] sm:$0xf]
      %v175 = vld [vmem:[%s166 + $0x4] sm:$0xf]
      %v176 = vld [vmem:[%s166 + $0x8] sm:$0xf]
      %v177 = vld [vmem:[%s166 + $0xc] sm:$0xf]
      %v178 = vld [vmem:[%s166 + $0x10] sm:$0xf]
      %v179 = vld [vmem:[%s166 + $0x14] sm:$0xf]
      %v180 = vld [vmem:[%s166 + $0x18] sm:$0xf]
      %v181 = vld [vmem:[%s166 + $0x1c] sm:$0xf]
      %v182 = vunpack.c.l.bf16 %v174
      %v183 = vunpack.c.l.bf16 %v175
      %v184 = vunpack.c.l.bf16 %v176
      %v185 = vunpack.c.l.bf16 %v177
      %v186 = vunpack.c.l.bf16 %v178
      %v187 = vunpack.c.l.bf16 %v179
      %v188 = vunpack.c.l.bf16 %v180
      %v189 = vunpack.c.l.bf16 %v181
      %v190 = vld [vmem:[%s1] sm:$0x1]
      %v192 = vlaneseq
      %v193 = vshrl.u32 %v192, 7
      %v194 = vsub.s32 0, %v193
      %v195 = vrot.slane %v190, %v194
      %v197 = vmul.f32 %v182, %v195
      %v198 = vmul.f32 %v183, %v195
      %v199 = vmul.f32 %v184, %v195
      %v200 = vmul.f32 %v185, %v195
      %v201 = vmul.f32 %v186, %v195
      %v202 = vmul.f32 %v187, %v195
      %v203 = vmul.f32 %v188, %v195
      %v204 = vmul.f32 %v189, %v195
      %v205 = vld [vmem:[%s2] sm:$0x1]
      %v207 = vlaneseq
      %v208 = vshrl.u32 %v207, 7
      %v209 = vsub.s32 0, %v208
      %v210 = vrot.slane %v205, %v209
      %v212 = vadd.f32 %v197, %v210
      %v213 = vadd.f32 %v198, %v210
      %v214 = vadd.f32 %v199, %v210
      %v215 = vadd.f32 %v200, %v210
      %v216 = vadd.f32 %v201, %v210
      %v217 = vadd.f32 %v202, %v210
      %v218 = vadd.f32 %v203, %v210
      %v219 = vadd.f32 %v204, %v210
      %v220 = vmax.f32 %v212, 0.0
      %v221 = vmax.f32 %v213, 0.0
      %v222 = vmax.f32 %v214, 0.0
      %v223 = vmax.f32 %v215, 0.0
      %v224 = vmax.f32 %v216, 0.0
      %v225 = vmax.f32 %v217, 0.0
      %v226 = vmax.f32 %v218, 0.0
      %v227 = vmax.f32 %v219, 0.0
      %v228 = vpack.c.bf16 %v221, %v220
      %v229 = vpack.c.bf16 %v223, %v222
      %v230 = vpack.c.bf16 %v225, %v224
      %v231 = vpack.c.bf16 %v227, %v226
      %v236 = vunpack.c.l.b16 %v228
      %v237 = vunpack.c.h.b16 %v228
      %v238 = vunpack.c.l.b16 %v229
      %v239 = vunpack.c.h.b16 %v229
      %v240 = vunpack.c.l.b16 %v230
      %v241 = vunpack.c.h.b16 %v230
      %v242 = vunpack.c.l.b16 %v231
      %v243 = vunpack.c.h.b16 %v231
      %v244 = vpack.c.b16 %v236, %v236
      %v245 = vpack.c.b16 %v237, %v237
      %v246 = vpack.c.b16 %v238, %v238
      %v247 = vpack.c.b16 %v239, %v239
      %v248 = vpack.c.b16 %v240, %v240
      %v249 = vpack.c.b16 %v241, %v241
      %v250 = vpack.c.b16 %v242, %v242
      %v251 = vpack.c.b16 %v243, %v243
      %260 = vst [vmem:[%s172] sm:$0xf] %v244
      %261 = vst [vmem:[%s172 + $0x4] sm:$0xf] %v245
      %262 = vst [vmem:[%s172 + $0x8] sm:$0xf] %v246
      %263 = vst [vmem:[%s172 + $0xc] sm:$0xf] %v247
      %264 = vst [vmem:[%s172 + $0x10] sm:$0xf] %v248
      %265 = vst [vmem:[%s172 + $0x14] sm:$0xf] %v249
      %266 = vst [vmem:[%s172 + $0x18] sm:$0xf] %v250
      %267 = vst [vmem:[%s172 + $0x1c] sm:$0xf] %v251
      %s268 = smul.u32 8, %s14
      %p269 = scmp.lt.s32.totalorder %s268, 15
      %s270 = scalar_select %p269, %s268, 15
      %s271 = smul.addr %s270, 4
      %s272 = scalar_lea.vmem %s3, %s271
      // Predicated region
      $region33: #{resblock_forward.13} parent=31 // pred_check
        %p273 = pneg %p100
      $region34: #{resblock_forward.13} parent=31 // pred_check_branch
        %275 = sbr.rel (%p273) target = $region36
      $region35: #{resblock_forward.13} parent=31 // pred_region
        %s276 = smul.u32 8, %s14
      $region36: #{resblock_forward.13} parent=31 // pred_fallthru
        _
    $region32: #{resblock_forward.13} parent=5 // pred_fallthru
      _
    %p277 = scmp.le.s32.totalorder 2, %s9
    // Predicated region
    $region37: #{resblock_forward.13} parent=5 // pred_check
      %p278 = pneg %p277
    $region38: #{resblock_forward.13} parent=5 // pred_check_branch
      %280 = sbr.rel (%p278) target = $region40
    $region39: #{resblock_forward.13} parent=5 // pred_region
      %s281 = ssub.s32 %s9, 2
      // Predicated region
      $region41: #{resblock_forward.13} parent=39 // pred_check
        %p282 = pneg %p106
      $region42: #{resblock_forward.13} parent=39 // pred_check_branch
        %284 = sbr.rel (%p282) target = $region44
      $region43: #{resblock_forward.13} parent=39 // pred_region
        %s285 = smul.u32 8, %s15
        %p286 = scmp.lt.s32.totalorder %s285, 15
        %s287 = scalar_select %p286, %s285, 15
        %s288 = smul.addr %s287, 4
        %s289 = scalar_lea.vmem %s3, %s288
      $region44: #{resblock_forward.13} parent=39 // pred_fallthru
        _
    $region40: #{resblock_forward.13} parent=5 // pred_fallthru
      _
  $region6: #{resblock_forward.13} parent=0 // loop_footer
    %s13 = sadd.s32 1, %s9
  $region7: #{resblock_forward.13} parent=0 // loop_footer_branch
    %8 = sbr.rel target = $region3
  $region8: #{resblock_forward.13} parent=0 // loop_exit
    _

// kernel: resblock_forward.15
$region0: #{resblock_forward.15}
  #allocation0 [shape = 'u32[]', space=smem, size = 0x4, offset = 0x4, fixed_abs, tag = 'smem constant byte address 0x4 - core index']
  #allocation1 [shape = 'u32[144,128]{1,0:T(1,128)}', space=vmem, size = 0x12000, scoped, tag = 'internal scratch']
  %s0 = inlined_call_operand.vmem [shape: bf16[128,128], index: 0, kind: input, shape index: {}]
  %s1 = inlined_call_operand.vmem [shape: f32[1,128], index: 1, kind: input, shape index: {}]
  %s2 = inlined_call_operand.vmem [shape: f32[1,128], index: 2, kind: input, shape index: {}]
  %s3 = inlined_call_operand.vmem [shape: bf16[128,128], index: 3, kind: input, shape index: {}]
  %s4 = inlined_call_operand.vmem [shape: bf16[128,128], index: 4, kind: output, shape index: {}]
  %s5 = sld [smem:[#allocation0]]
  $region49: #{resblock_forward.15} parent=0
    _
  %s7 = ssub.s32 1, %s5
  %s8 = scalar_select 0, %s7, %s5
  loop: start=0, step=1, limit=4
  $region2: #{resblock_forward.15} parent=0 // loop_pre_header
    _
  $region3: #{resblock_forward.15} parent=0 // loop_header
    %s10 = sphi 0, %s14
    %p11 = scmp.ge.s32.totalorder %s10, 4
    %s20 = sphi 0, %s22
    %s23 = sphi 0, %s20
    %s24 = sphi 0, %s23
    %s40 = sphi 0, %s24
    %s44 = sphi 0, %s44
    %s46 = sphi 0, %s44
    %s47 = sphi 0, %s46
    %s61 = sphi 0, %s47
    %s65 = sphi 0, %s65
    %s67 = sphi 0, %s65
    %s68 = sphi 0, %s67
    %s82 = sphi 0, %s68
    %s88 = sphi 0, %s90
    %s91 = sphi 0, %s88
    %s92 = sphi 0, %s91
    %s108 = sphi 0, %s92
    %s114 = sphi 0, %s116
    %s117 = sphi 0, %s114
    %s118 = sphi 0, %s117
    %s134 = sphi 0, %s118
  $region4: #{resblock_forward.15} parent=0 // loop_header_branch
    %13 = sbr.rel (%p11) target = $region8
  $region5: #{resblock_forward.15} parent=0 // loop_body
    %s15 = ssub.s32 %s10, 1
    %s16 = ssub.s32 %s10, 2
    %s17 = sadd.s32 %s10, 1
    %s18 = ssub.s32 %s10, %s17
    %p19 = scmp.eq.s32.totalorder %s18, 0
    %s21 = sadd.s32 %s20, 1
    %s22 = scalar_select %p19, %s20, %s21
    %p25 = pneg %p19
    %p26 = scmp.eq.s32.totalorder %s10, 1
    %p27 = por %p25, %p26
    %p28 = scmp.ne.s32.totalorder %s20, %s23
    %p29 = scmp.eq.s32.totalorder %s10, 0
    %p30 = por %p28, %p29
    %p31 = scmp.ne.s32.totalorder %s20, %s23
    %p32 = scmp.eq.s32.totalorder %s15, 1
    %p33 = por %p31, %p32
    %p34 = scmp.ne.s32.totalorder %s23, %s24
    %p35 = scmp.eq.s32.totalorder %s15, 0
    %p36 = por %p34, %p35
    %p37 = scmp.ne.s32.totalorder %s23, %s24
    %p38 = scmp.eq.s32.totalorder %s16, 1
    %p39 = por %p37, %p38
    %p41 = scmp.ne.s32.totalorder %s24, %s40
    %p42 = scmp.eq.s32.totalorder %s16, 0
    %p43 = por %p41, %p42
    %s45 = sadd.s32 %s44, 1
    %p48 = scmp.eq.s32.totalorder %s10, 1
    %p49 = scmp.ne.s32.totalorder %s44, %s46
    %p50 = scmp.eq.s32.totalorder %s10, 0
    %p51 = por %p49, %p50
    %p52 = scmp.ne.s32.totalorder %s44, %s46
    %p53 = scmp.eq.s32.totalorder %s15, 1
    %p54 = por %p52, %p53
    %p55 = scmp.ne.s32.totalorder %s46, %s47
    %p56 = scmp.eq.s32.totalorder %s15, 0
    %p57 = por %p55, %p56
    %p58 = scmp.ne.s32.totalorder %s46, %s47
    %p59 = scmp.eq.s32.totalorder %s16, 1
    %p60 = por %p58, %p59
    %p62 = scmp.ne.s32.totalorder %s47, %s61
    %p63 = scmp.eq.s32.totalorder %s16, 0
    %p64 = por %p62, %p63
    %s66 = sadd.s32 %s65, 1
    %p69 = scmp.eq.s32.totalorder %s10, 1
    %p70 = scmp.ne.s32.totalorder %s65, %s67
    %p71 = scmp.eq.s32.totalorder %s10, 0
    %p72 = por %p70, %p71
    %p73 = scmp.ne.s32.totalorder %s65, %s67
    %p74 = scmp.eq.s32.totalorder %s15, 1
    %p75 = por %p73, %p74
    %p76 = scmp.ne.s32.totalorder %s67, %s68
    %p77 = scmp.eq.s32.totalorder %s15, 0
    %p78 = por %p76, %p77
    %p79 = scmp.ne.s32.totalorder %s67, %s68
    %p80 = scmp.eq.s32.totalorder %s16, 1
    %p81 = por %p79, %p80
    %p83 = scmp.ne.s32.totalorder %s68, %s82
    %p84 = scmp.eq.s32.totalorder %s16, 0
    %p85 = por %p83, %p84
    %s86 = ssub.s32 %s10, %s17
    %p87 = scmp.eq.s32.totalorder %s86, 0
    %s89 = sadd.s32 %s88, 1
    %s90 = scalar_select %p87, %s88, %s89
    %p93 = pneg %p87
    %p94 = scmp.eq.s32.totalorder %s10, 1
    %p95 = por %p93, %p94
    %p96 = scmp.ne.s32.totalorder %s88, %s91
    %p97 = scmp.eq.s32.totalorder %s10, 0
    %p98 = por %p96, %p97
    %p99 = scmp.ne.s32.totalorder %s88, %s91
    %p100 = scmp.eq.s32.totalorder %s15, 1
    %p101 = por %p99, %p100
    %p102 = scmp.ne.s32.totalorder %s91, %s92
    %p103 = scmp.eq.s32.totalorder %s15, 0
    %p104 = por %p102, %p103
    %p105 = scmp.ne.s32.totalorder %s91, %s92
    %p106 = scmp.eq.s32.totalorder %s16, 1
    %p107 = por %p105, %p106
    %p109 = scmp.ne.s32.totalorder %s92, %s108
    %p110 = scmp.eq.s32.totalorder %s16, 0
    %p111 = por %p109, %p110
    %s112 = ssub.s32 %s10, %s17
    %p113 = scmp.eq.s32.totalorder %s112, 0
    %s115 = sadd.s32 %s114, 1
    %s116 = scalar_select %p113, %s114, %s115
    %p119 = pneg %p113
    %p120 = scmp.eq.s32.totalorder %s10, 1
    %p121 = por %p119, %p120
    %p122 = scmp.ne.s32.totalorder %s114, %s117
    %p123 = scmp.eq.s32.totalorder %s10, 0
    %p124 = por %p122, %p123
    %p125 = scmp.ne.s32.totalorder %s114, %s117
    %p126 = scmp.eq.s32.totalorder %s15, 1
    %p127 = por %p125, %p126
    %p128 = scmp.ne.s32.totalorder %s117, %s118
    %p129 = scmp.eq.s32.totalorder %s15, 0
    %p130 = por %p128, %p129
    %p131 = scmp.ne.s32.totalorder %s117, %s118
    %p132 = scmp.eq.s32.totalorder %s16, 1
    %p133 = por %p131, %p132
    %p135 = scmp.ne.s32.totalorder %s118, %s134
    %p136 = scmp.eq.s32.totalorder %s16, 0
    %p137 = por %p135, %p136
    %p138 = scmp.le.s32.totalorder 1, %s10
    %p139 = scmp.lt.s32.totalorder %s10, 3
    %p140 = pnand %p138, %p139
    %p141 = pneg %p140
    // Predicated region
    $region9: #{resblock_forward.15} parent=5 // pred_check
      _
    $region10: #{resblock_forward.15} parent=5 // pred_check_branch
      %143 = sbr.rel (%p140) target = $region12
    $region11: #{resblock_forward.15} parent=5 // pred_region
      %s144 = ssub.s32 %s10, 1
      // Predicated region
      $region13: #{resblock_forward.15} parent=11 // pred_check
        %p145 = pneg %p57
      $region14: #{resblock_forward.15} parent=11 // pred_check_branch
        %147 = sbr.rel (%p145) target = $region16
      $region15: #{resblock_forward.15} parent=11 // pred_region
        _
      $region16: #{resblock_forward.15} parent=11 // pred_fallthru
        _
      // Predicated region
      $region17: #{resblock_forward.15} parent=11 // pred_check
        %p148 = pneg %p78
      $region18: #{resblock_forward.15} parent=11 // pred_check_branch
        %150 = sbr.rel (%p148) target = $region20
      $region19: #{resblock_forward.15} parent=11 // pred_region
        _
      $region20: #{resblock_forward.15} parent=11 // pred_fallthru
        _
    $region12: #{resblock_forward.15} parent=5 // pred_fallthru
      _
    %p151 = scmp.lt.s32.totalorder %s10, 2
    // Predicated region
    $region21: #{resblock_forward.15} parent=5 // pred_check
      %p152 = pneg %p151
    $region22: #{resblock_forward.15} parent=5 // pred_check_branch
      %154 = sbr.rel (%p152) target = $region24
    $region23: #{resblock_forward.15} parent=5 // pred_region
      // Predicated region
      $region25: #{resblock_forward.15} parent=23 // pred_check
        %p155 = pneg %p30
      $region26: #{resblock_forward.15} parent=23 // pred_check_branch
        %157 = sbr.rel (%p155) target = $region28
      $region27: #{resblock_forward.15} parent=23 // pred_region
        %s158 = smul.u32 8, %s10
        %p159 = scmp.lt.s32.totalorder %s158, 15
        %s160 = scalar_select %p159, %s158, 15
        %s161 = smul.addr %s160, 4
        %s162 = scalar_lea.vmem %s0, %s161
        %s163 = smul.u32 8, %s10
      $region28: #{resblock_forward.15} parent=23 // pred_fallthru
        _
      // Predicated region
      $region29: #{resblock_forward.15} parent=23 // pred_check
        %p164 = pneg %p98
      $region30: #{resblock_forward.15} parent=23 // pred_check_branch
        %166 = sbr.rel (%p164) target = $region32
      $region31: #{resblock_forward.15} parent=23 // pred_region
        %s167 = smul.u32 8, %s10
        %p168 = scmp.lt.s32.totalorder %s167, 15
        %s169 = scalar_select %p168, %s167, 15
        %s170 = smul.addr %s169, 4
        %s171 = scalar_lea.vmem %s3, %s170
        %s172 = smul.u32 8, %s10
      $region32: #{resblock_forward.15} parent=23 // pred_fallthru
        _
    $region24: #{resblock_forward.15} parent=5 // pred_fallthru
      _
    %p173 = scmp.le.s32.totalorder 1, %s10
    %p174 = scmp.lt.s32.totalorder %s10, 3
    %p175 = pnand %p173, %p174
    %p176 = pneg %p175
    // Predicated region
    $region33: #{resblock_forward.15} parent=5 // pred_check
      _
    $region34: #{resblock_forward.15} parent=5 // pred_check_branch
      %178 = sbr.rel (%p175) target = $region36
    $region35: #{resblock_forward.15} parent=5 // pred_region
      %s179 = ssub.s32 %s10, 1
      %s180 = smul.u32 8, %s15
      %p181 = scmp.lt.s32.totalorder %s180, 15
      %s182 = scalar_select %p181, %s180, 15
      %s183 = smul.addr %s182, 4
      %s184 = scalar_lea.vmem %s0, %s183
      %p185 = pneg %p36
      %p186 = pneg %p33
      %p187 = pneg %p57
      %p188 = pneg %p54
      %p189 = pneg %p78
      %p190 = pneg %p75
      %s191 = smul.u32 8, %s15
      %p192 = scmp.lt.s32.totalorder %s191, 15
      %s193 = scalar_select %p192, %s191, 15
      %s194 = smul.addr %s193, 4
      %s195 = scalar_lea.vmem %s3, %s194
      %p196 = pneg %p104
      %p197 = pneg %p101
      %p198 = pneg %p130
      %p199 = pneg %p127
      %s200 = smul.u32 8, %s15
      %p201 = scmp.lt.s32.totalorder %s200, 15
      %s202 = scalar_select %p201, %s200, 15
      %s203 = smul.addr %s202, 4
      %s204 = scalar_lea.vmem %s4, %s203
      %s205 = smul.u32 8, %s15
      %p206 = scmp.lt.s32.totalorder %s205, 15
      %s207 = scalar_select %p206, %s205, 15
      %s208 = smul.addr %s207, 4
      %s209 = scalar_lea.vmem %s0, %s208
      %s210 = smul.u32 8, %s15
      %s211 = smul.u32 8, %s15
      %p212 = scmp.lt.s32.totalorder %s211, 15
      %s213 = scalar_select %p212, %s211, 15
      %s214 = smul.addr %s213, 4
      %s215 = scalar_lea.vmem %s3, %s214
      %s216 = smul.u32 8, %s15
      %s217 = smul.u32 8, %s15
      %p218 = scmp.lt.s32.totalorder %s217, 15
      %s219 = scalar_select %p218, %s217, 15
      %s220 = smul.addr %s219, 4
      %s221 = scalar_lea.vmem %s4, %s220
      %s222 = smul.u32 8, %s15
      %v223 = vld [vmem:[%s209] sm:$0xf]
      %v224 = vld [vmem:[%s209 + $0x4] sm:$0xf]
      %v225 = vld [vmem:[%s209 + $0x8] sm:$0xf]
      %v226 = vld [vmem:[%s209 + $0xc] sm:$0xf]
      %v227 = vld [vmem:[%s209 + $0x10] sm:$0xf]
      %v228 = vld [vmem:[%s209 + $0x14] sm:$0xf]
      %v229 = vld [vmem:[%s209 + $0x18] sm:$0xf]
      %v230 = vld [vmem:[%s209 + $0x1c] sm:$0xf]
      %v231 = vunpack.c.l.bf16 %v223
      %v232 = vunpack.c.l.bf16 %v224
      %v233 = vunpack.c.l.bf16 %v225
      %v234 = vunpack.c.l.bf16 %v226
      %v235 = vunpack.c.l.bf16 %v227
      %v236 = vunpack.c.l.bf16 %v228
      %v237 = vunpack.c.l.bf16 %v229
      %v238 = vunpack.c.l.bf16 %v230
      %v239 = vld [vmem:[%s1] sm:$0x1]
      %v241 = vlaneseq
      %v242 = vshrl.u32 %v241, 7
      %v243 = vsub.s32 0, %v242
      %v244 = vrot.slane %v239, %v243
      %v246 = vmul.f32 %v231, %v244
      %v247 = vmul.f32 %v232, %v244
      %v248 = vmul.f32 %v233, %v244
      %v249 = vmul.f32 %v234, %v244
      %v250 = vmul.f32 %v235, %v244
      %v251 = vmul.f32 %v236, %v244
      %v252 = vmul.f32 %v237, %v244
      %v253 = vmul.f32 %v238, %v244
      %v254 = vld [vmem:[%s2] sm:$0x1]
      %v256 = vlaneseq
      %v257 = vshrl.u32 %v256, 7
      %v258 = vsub.s32 0, %v257
      %v259 = vrot.slane %v254, %v258
      %v261 = vadd.f32 %v246, %v259
      %v262 = vadd.f32 %v247, %v259
      %v263 = vadd.f32 %v248, %v259
      %v264 = vadd.f32 %v249, %v259
      %v265 = vadd.f32 %v250, %v259
      %v266 = vadd.f32 %v251, %v259
      %v267 = vadd.f32 %v252, %v259
      %v268 = vadd.f32 %v253, %v259
      %v269 = vmax.f32 %v261, 0.0
      %v270 = vmax.f32 %v262, 0.0
      %v271 = vmax.f32 %v263, 0.0
      %v272 = vmax.f32 %v264, 0.0
      %v273 = vmax.f32 %v265, 0.0
      %v274 = vmax.f32 %v266, 0.0
      %v275 = vmax.f32 %v267, 0.0
      %v276 = vmax.f32 %v268, 0.0
      %v277 = vld [vmem:[%s215] sm:$0xf]
      %v278 = vld [vmem:[%s215 + $0x4] sm:$0xf]
      %v279 = vld [vmem:[%s215 + $0x8] sm:$0xf]
      %v280 = vld [vmem:[%s215 + $0xc] sm:$0xf]
      %v281 = vld [vmem:[%s215 + $0x10] sm:$0xf]
      %v282 = vld [vmem:[%s215 + $0x14] sm:$0xf]
      %v283 = vld [vmem:[%s215 + $0x18] sm:$0xf]
      %v284 = vld [vmem:[%s215 + $0x1c] sm:$0xf]
      %v285 = vunpack.c.l.bf16 %v277
      %v286 = vunpack.c.l.bf16 %v278
      %v287 = vunpack.c.l.bf16 %v279
      %v288 = vunpack.c.l.bf16 %v280
      %v289 = vunpack.c.l.bf16 %v281
      %v290 = vunpack.c.l.bf16 %v282
      %v291 = vunpack.c.l.bf16 %v283
      %v292 = vunpack.c.l.bf16 %v284
      %v293 = vadd.f32 %v269, %v285
      %v294 = vadd.f32 %v270, %v286
      %v295 = vadd.f32 %v271, %v287
      %v296 = vadd.f32 %v272, %v288
      %v297 = vadd.f32 %v273, %v289
      %v298 = vadd.f32 %v274, %v290
      %v299 = vadd.f32 %v275, %v291
      %v300 = vadd.f32 %v276, %v292
      %v301 = vpack.c.bf16 %v294, %v293
      %v302 = vpack.c.bf16 %v296, %v295
      %v303 = vpack.c.bf16 %v298, %v297
      %v304 = vpack.c.bf16 %v300, %v299
      %v309 = vunpack.c.l.b16 %v301
      %v310 = vunpack.c.h.b16 %v301
      %v311 = vunpack.c.l.b16 %v302
      %v312 = vunpack.c.h.b16 %v302
      %v313 = vunpack.c.l.b16 %v303
      %v314 = vunpack.c.h.b16 %v303
      %v315 = vunpack.c.l.b16 %v304
      %v316 = vunpack.c.h.b16 %v304
      %v317 = vpack.c.b16 %v309, %v309
      %v318 = vpack.c.b16 %v310, %v310
      %v319 = vpack.c.b16 %v311, %v311
      %v320 = vpack.c.b16 %v312, %v312
      %v321 = vpack.c.b16 %v313, %v313
      %v322 = vpack.c.b16 %v314, %v314
      %v323 = vpack.c.b16 %v315, %v315
      %v324 = vpack.c.b16 %v316, %v316
      %333 = vst [vmem:[%s221] sm:$0xf] %v317
      %334 = vst [vmem:[%s221 + $0x4] sm:$0xf] %v318
      %335 = vst [vmem:[%s221 + $0x8] sm:$0xf] %v319
      %336 = vst [vmem:[%s221 + $0xc] sm:$0xf] %v320
      %337 = vst [vmem:[%s221 + $0x10] sm:$0xf] %v321
      %338 = vst [vmem:[%s221 + $0x14] sm:$0xf] %v322
      %339 = vst [vmem:[%s221 + $0x18] sm:$0xf] %v323
      %340 = vst [vmem:[%s221 + $0x1c] sm:$0xf] %v324
      %s341 = smul.u32 8, %s15
      %p342 = scmp.lt.s32.totalorder %s341, 15
      %s343 = scalar_select %p342, %s341, 15
      %s344 = smul.addr %s343, 4
      %s345 = scalar_lea.vmem %s4, %s344
      // Predicated region
      $region37: #{resblock_forward.15} parent=35 // pred_check
        %p346 = pneg %p127
      $region38: #{resblock_forward.15} parent=35 // pred_check_branch
        %348 = sbr.rel (%p346) target = $region40
      $region39: #{resblock_forward.15} parent=35 // pred_region
        %s349 = smul.u32 8, %s15
      $region40: #{resblock_forward.15} parent=35 // pred_fallthru
        _
    $region36: #{resblock_forward.15} parent=5 // pred_fallthru
      _
    %p350 = scmp.le.s32.totalorder 2, %s10
    // Predicated region
    $region41: #{resblock_forward.15} parent=5 // pred_check
      %p351 = pneg %p350
    $region42: #{resblock_forward.15} parent=5 // pred_check_branch
      %353 = sbr.rel (%p351) target = $region44
    $region43: #{resblock_forward.15} parent=5 // pred_region
      %s354 = ssub.s32 %s10, 2
      // Predicated region
      $region45: #{resblock_forward.15} parent=43 // pred_check
        %p355 = pneg %p133
      $region46: #{resblock_forward.15} parent=43 // pred_check_branch
        %357 = sbr.rel (%p355) target = $region48
      $region47: #{resblock_forward.15} parent=43 // pred_region
        %s358 = smul.u32 8, %s16
        %p359 = scmp.lt.s32.totalorder %s358, 15
        %s360 = scalar_select %p359, %s358, 15
        %s361 = smul.addr %s360, 4
        %s362 = scalar_lea.vmem %s4, %s361
      $region48: #{resblock_forward.15} parent=43 // pred_fallthru
        _
    $region44: #{resblock_forward.15} parent=5 // pred_fallthru
      _
  $region6: #{resblock_forward.15} parent=0 // loop_footer
    %s14 = sadd.s32 1, %s10
  $region7: #{resblock_forward.15} parent=0 // loop_footer_branch
    %9 = sbr.rel target = $region3
  $region8: #{resblock_forward.15} parent=0 // loop_exit
    _

// kernel: resblock_forward.10
$region0: #{resblock_forward.10}
  #allocation0 [shape = 'u32[]', space=smem, size = 0x4, offset = 0x4, fixed_abs, tag = 'smem constant byte address 0x4 - core index']
  #allocation1 [shape = 'u32[144,128]{1,0:T(1,128)}', space=vmem, size = 0x12000, scoped, tag = 'internal scratch']
  %s0 = inlined_call_operand.vmem [shape: bf16[2,6,24,384], index: 0, kind: input, shape index: {}, may-alias: {0,1,2}]
  %s1 = inlined_call_operand.vmem [shape: bf16[2,6,24,384], index: 1, kind: input, shape index: {}, may-alias: {0,1,2}]
  %s2 = inlined_call_operand.vmem [shape: bf16[2,6,24,384], index: 2, kind: input, shape index: {}, may-alias: {0,1,2}]
  %s3 = inlined_call_operand.vmem [shape: bf16[9,384,128], index: 3, kind: input, shape index: {}]
  %s4 = inlined_call_operand.vmem [shape: bf16[2,4,16,128], index: 4, kind: output, shape index: {0}]
  %s5 = inlined_call_operand.vmem [shape: f32[2,4,2,128], index: 5, kind: output, shape index: {1}]
  %6 = xla_tuple %s4, %s5
  %s7 = sld [smem:[#allocation0]]
  $region57: #{resblock_forward.10} parent=0
    _
  %s9 = ssub.s32 1, %s7
  %s10 = scalar_select 0, %s9, %s7
  loop: start=0, step=1, limit=10
  $region2: #{resblock_forward.10} parent=0 // loop_pre_header
    _
  $region3: #{resblock_forward.10} parent=0 // loop_header
    %s12 = sphi 0, %s16
    %p13 = scmp.ge.s32.totalorder %s12, 10
    %s19 = sphi 0, %s31
    %s20 = sphi 0, %s27
    %s21 = sphi 0, %s19
    %s22 = sphi 0, %s20
    %s23 = sphi 0, %s21
    %s24 = sphi 0, %s22
    %s36 = sphi 0, %s38
    %s39 = sphi 0, %s36
    %s40 = sphi 0, %s39
    %s56 = sphi 0, %s40
    %s66 = sphi 0, %s68
    %s69 = sphi 0, %s66
    %s70 = sphi 0, %s69
    %s86 = sphi 0, %s70
    %s96 = sphi 0, %s98
    %s99 = sphi 0, %s96
    %s100 = sphi 0, %s99
    %s116 = sphi 0, %s100
    %s120 = sphi 0, %s120
    %s122 = sphi 0, %s120
    %s123 = sphi 0, %s122
    %s137 = sphi 0, %s123
    %s145 = sphi 0, %s147
    %s148 = sphi 0, %s145
    %s149 = sphi 0, %s148
    %s165 = sphi 0, %s149
    %s173 = sphi 0, %s175
    %s176 = sphi 0, %s173
    %s177 = sphi 0, %s176
    %s193 = sphi 0, %s177
  $region4: #{resblock_forward.10} parent=0 // loop_header_branch
    %15 = sbr.rel (%p13) target = $region8
  $region5: #{resblock_forward.10} parent=0 // loop_body
    %s17 = ssub.s32 %s12, 1
    %s18 = ssub.s32 %s12, 2
    %s25 = sadd.s32 1, %s20
    %p26 = scmp.ge.s32.totalorder %s25, 4
    %s27 = scalar_select %p26, 0, %s25
    %s28 = sadd.s32 1, %s19
    %s29 = scalar_select %p26, %s28, %s19
    %p30 = scmp.ge.s32.totalorder %s29, 2
    %s31 = scalar_select %p30, 0, %s29
    %s32 = ssub.s32 %s19, %s31
    %s33 = ssub.s32 %s20, %s27
    %s34 = sor.u32 %s32, %s33
    %p35 = scmp.eq.s32.totalorder %s34, 0
    %s37 = sadd.s32 %s36, 1
    %s38 = scalar_select %p35, %s36, %s37
    %p41 = pneg %p35
    %p42 = scmp.eq.s32.totalorder %s12, 7
    %p43 = por %p41, %p42
    %p44 = scmp.ne.s32.totalorder %s36, %s39
    %p45 = scmp.eq.s32.totalorder %s12, 0
    %p46 = por %p44, %p45
    %p47 = scmp.ne.s32.totalorder %s36, %s39
    %p48 = scmp.eq.s32.totalorder %s17, 7
    %p49 = por %p47, %p48
    %p50 = scmp.ne.s32.totalorder %s39, %s40
    %p51 = scmp.eq.s32.totalorder %s17, 0
    %p52 = por %p50, %p51
    %p53 = scmp.ne.s32.totalorder %s39, %s40
    %p54 = scmp.eq.s32.totalorder %s18, 7
    %p55 = por %p53, %p54
    %p57 = scmp.ne.s32.totalorder %s40, %s56
    %p58 = scmp.eq.s32.totalorder %s18, 0
    %p59 = por %p57, %p58
    %s60 = sadd.s32 %s20, 1
    %s61 = sadd.s32 %s27, 1
    %s62 = ssub.s32 %s19, %s31
    %s63 = ssub.s32 %s60, %s61
    %s64 = sor.u32 %s62, %s63
    %p65 = scmp.eq.s32.totalorder %s64, 0
    %s67 = sadd.s32 %s66, 1
    %s68 = scalar_select %p65, %s66, %s67
    %p71 = pneg %p65
    %p72 = scmp.eq.s32.totalorder %s12, 7
    %p73 = por %p71, %p72
    %p74 = scmp.ne.s32.totalorder %s66, %s69
    %p75 = scmp.eq.s32.totalorder %s12, 0
    %p76 = por %p74, %p75
    %p77 = scmp.ne.s32.totalorder %s66, %s69
    %p78 = scmp.eq.s32.totalorder %s17, 7
    %p79 = por %p77, %p78
    %p80 = scmp.ne.s32.totalorder %s69, %s70
    %p81 = scmp.eq.s32.totalorder %s17, 0
    %p82 = por %p80, %p81
    %p83 = scmp.ne.s32.totalorder %s69, %s70
    %p84 = scmp.eq.s32.totalorder %s18, 7
    %p85 = por %p83, %p84
    %p87 = scmp.ne.s32.totalorder %s70, %s86
    %p88 = scmp.eq.s32.totalorder %s18, 0
    %p89 = por %p87, %p88
    %s90 = sadd.s32 %s20, 2
    %s91 = sadd.s32 %s27, 2
    %s92 = ssub.s32 %s19, %s31
    %s93 = ssub.s32 %s90, %s91
    %s94 = sor.u32 %s92, %s93
    %p95 = scmp.eq.s32.totalorder %s94, 0
    %s97 = sadd.s32 %s96, 1
    %s98 = scalar_select %p95, %s96, %s97
    %p101 = pneg %p95
    %p102 = scmp.eq.s32.totalorder %s12, 7
    %p103 = por %p101, %p102
    %p104 = scmp.ne.s32.totalorder %s96, %s99
    %p105 = scmp.eq.s32.totalorder %s12, 0
    %p106 = por %p104, %p105
    %p107 = scmp.ne.s32.totalorder %s96, %s99
    %p108 = scmp.eq.s32.totalorder %s17, 7
    %p109 = por %p107, %p108
    %p110 = scmp.ne.s32.totalorder %s99, %s100
    %p111 = scmp.eq.s32.totalorder %s17, 0
    %p112 = por %p110, %p111
    %p113 = scmp.ne.s32.totalorder %s99, %s100
    %p114 = scmp.eq.s32.totalorder %s18, 7
    %p115 = por %p113, %p114
    %p117 = scmp.ne.s32.totalorder %s100, %s116
    %p118 = scmp.eq.s32.totalorder %s18, 0
    %p119 = por %p117, %p118
    %s121 = sadd.s32 %s120, 1
    %p124 = scmp.eq.s32.totalorder %s12, 7
    %p125 = scmp.ne.s32.totalorder %s120, %s122
    %p126 = scmp.eq.s32.totalorder %s12, 0
    %p127 = por %p125, %p126
    %p128 = scmp.ne.s32.totalorder %s120, %s122
    %p129 = scmp.eq.s32.totalorder %s17, 7
    %p130 = por %p128, %p129
    %p131 = scmp.ne.s32.totalorder %s122, %s123
    %p132 = scmp.eq.s32.totalorder %s17, 0
    %p133 = por %p131, %p132
    %p134 = scmp.ne.s32.totalorder %s122, %s123
    %p135 = scmp.eq.s32.totalorder %s18, 7
    %p136 = por %p134, %p135
    %p138 = scmp.ne.s32.totalorder %s123, %s137
    %p139 = scmp.eq.s32.totalorder %s18, 0
    %p140 = por %p138, %p139
    %s141 = ssub.s32 %s19, %s31
    %s142 = ssub.s32 %s20, %s27
    %s143 = sor.u32 %s141, %s142
    %p144 = scmp.eq.s32.totalorder %s143, 0
    %s146 = sadd.s32 %s145, 1
    %s147 = scalar_select %p144, %s145, %s146
    %p150 = pneg %p144
    %p151 = scmp.eq.s32.totalorder %s12, 7
    %p152 = por %p150, %p151
    %p153 = scmp.ne.s32.totalorder %s145, %s148
    %p154 = scmp.eq.s32.totalorder %s12, 0
    %p155 = por %p153, %p154
    %p156 = scmp.ne.s32.totalorder %s145, %s148
    %p157 = scmp.eq.s32.totalorder %s17, 7
    %p158 = por %p156, %p157
    %p159 = scmp.ne.s32.totalorder %s148, %s149
    %p160 = scmp.eq.s32.totalorder %s17, 0
    %p161 = por %p159, %p160
    %p162 = scmp.ne.s32.totalorder %s148, %s149
    %p163 = scmp.eq.s32.totalorder %s18, 7
    %p164 = por %p162, %p163
    %p166 = scmp.ne.s32.totalorder %s149, %s165
    %p167 = scmp.eq.s32.totalorder %s18, 0
    %p168 = por %p166, %p167
    %s169 = ssub.s32 %s19, %s31
    %s170 = ssub.s32 %s20, %s27
    %s171 = sor.u32 %s169, %s170
    %p172 = scmp.eq.s32.totalorder %s171, 0
    %s174 = sadd.s32 %s173, 1
    %s175 = scalar_select %p172, %s173, %s174
    %p178 = pneg %p172
    %p179 = scmp.eq.s32.totalorder %s12, 7
    %p180 = por %p178, %p179
    %p181 = scmp.ne.s32.totalorder %s173, %s176
    %p182 = scmp.eq.s32.totalorder %s12, 0
    %p183 = por %p181, %p182
    %p184 = scmp.ne.s32.totalorder %s173, %s176
    %p185 = scmp.eq.s32.totalorder %s17, 7
    %p186 = por %p184, %p185
    %p187 = scmp.ne.s32.totalorder %s176, %s177
    %p188 = scmp.eq.s32.totalorder %s17, 0
    %p189 = por %p187, %p188
    %p190 = scmp.ne.s32.totalorder %s176, %s177
    %p191 = scmp.eq.s32.totalorder %s18, 7
    %p192 = por %p190, %p191
    %p194 = scmp.ne.s32.totalorder %s177, %s193
    %p195 = scmp.eq.s32.totalorder %s18, 0
    %p196 = por %p194, %p195
    %p197 = scmp.le.s32.totalorder 1, %s12
    %p198 = scmp.lt.s32.totalorder %s12, 9
    %p199 = pnand %p197, %p198
    %p200 = pneg %p199
    // Predicated region
    $region9: #{resblock_forward.10} parent=5 // pred_check
      _
    $region10: #{resblock_forward.10} parent=5 // pred_check_branch
      %202 = sbr.rel (%p199) target = $region12
    $region11: #{resblock_forward.10} parent=5 // pred_region
      %s203 = ssub.s32 %s12, 1
      // Predicated region
      $region13: #{resblock_forward.10} parent=11 // pred_check
        %p204 = pneg %p133
      $region14: #{resblock_forward.10} parent=11 // pred_check_branch
        %206 = sbr.rel (%p204) target = $region16
      $region15: #{resblock_forward.10} parent=11 // pred_region
        _
      $region16: #{resblock_forward.10} parent=11 // pred_fallthru
        _
    $region12: #{resblock_forward.10} parent=5 // pred_fallthru
      _
    %p207 = scmp.lt.s32.totalorder %s12, 8
    // Predicated region
    $region17: #{resblock_forward.10} parent=5 // pred_check
      %p208 = pneg %p207
    $region18: #{resblock_forward.10} parent=5 // pred_check_branch
      %210 = sbr.rel (%p208) target = $region20
    $region19: #{resblock_forward.10} parent=5 // pred_region
      // Predicated region
      $region21: #{resblock_forward.10} parent=19 // pred_check
        %p211 = pneg %p46
      $region22: #{resblock_forward.10} parent=19 // pred_check_branch
        %213 = sbr.rel (%p211) target = $region24
      $region23: #{resblock_forward.10} parent=19 // pred_region
        %p214 = scmp.lt.s32.totalorder %s19, 1
        %s215 = scalar_select %p214, %s19, 1
        %p216 = scmp.lt.s32.totalorder %s20, 5
        %s217 = scalar_select %p216, %s20, 5
        %s218 = smul.addr %s217, 9
        %s219 = smul.addr %s215, 54
        %s220 = sadd.s32 %s218, %s219
        %s221 = smul.addr %s220, 4
        %s222 = scalar_lea.vmem %s0, %s221
      $region24: #{resblock_forward.10} parent=19 // pred_fallthru
        _
      // Predicated region
      $region25: #{resblock_forward.10} parent=19 // pred_check
        %p223 = pneg %p76
      $region26: #{resblock_forward.10} parent=19 // pred_check_branch
        %225 = sbr.rel (%p223) target = $region28
      $region27: #{resblock_forward.10} parent=19 // pred_region
        %s226 = sadd.s32 %s20, 1
        %p227 = scmp.lt.s32.totalorder %s19, 1
        %s228 = scalar_select %p227, %s19, 1
        %p229 = scmp.lt.s32.totalorder %s226, 5
        %s230 = scalar_select %p229, %s226, 5
        %s231 = smul.addr %s230, 9
        %s232 = smul.addr %s228, 54
        %s233 = sadd.s32 %s231, %s232
        %s234 = smul.addr %s233, 4
        %s235 = scalar_lea.vmem %s1, %s234
        %s236 = sadd.s32 %s20, 1
      $region28: #{resblock_forward.10} parent=19 // pred_fallthru
        _
      // Predicated region
      $region29: #{resblock_forward.10} parent=19 // pred_check
        %p237 = pneg %p106
      $region30: #{resblock_forward.10} parent=19 // pred_check_branch
        %239 = sbr.rel (%p237) target = $region32
      $region31: #{resblock_forward.10} parent=19 // pred_region
        %s240 = sadd.s32 %s20, 2
        %p241 = scmp.lt.s32.totalorder %s19, 1
        %s242 = scalar_select %p241, %s19, 1
        %p243 = scmp.lt.s32.totalorder %s240, 5
        %s244 = scalar_select %p243, %s240, 5
        %s245 = smul.addr %s244, 9
        %s246 = smul.addr %s242, 54
        %s247 = sadd.s32 %s245, %s246
        %s248 = smul.addr %s247, 4
        %s249 = scalar_lea.vmem %s2, %s248
        %s250 = sadd.s32 %s20, 2
      $region32: #{resblock_forward.10} parent=19 // pred_fallthru
        _
    $region20: #{resblock_forward.10} parent=5 // pred_fallthru
      _
    %p251 = scmp.le.s32.totalorder 1, %s12
    %p252 = scmp.lt.s32.totalorder %s12, 9
    %p253 = pnand %p251, %p252
    %p254 = pneg %p253
    // Predicated region
    $region33: #{resblock_forward.10} parent=5 // pred_check
      _
    $region34: #{resblock_forward.10} parent=5 // pred_check_branch
      %256 = sbr.rel (%p253) target = $region36
    $region35: #{resblock_forward.10} parent=5 // pred_region
      %s257 = ssub.s32 %s12, 1
      %p258 = scmp.lt.s32.totalorder %s21, 1
      %s259 = scalar_select %p258, %s21, 1
      %p260 = scmp.lt.s32.totalorder %s22, 5
      %s261 = scalar_select %p260, %s22, 5
      %s262 = smul.addr %s261, 9
      %s263 = smul.addr %s259, 54
      %s264 = sadd.s32 %s262, %s263
      %s265 = smul.addr %s264, 4
      %s266 = scalar_lea.vmem %s0, %s265
      %p267 = pneg %p52
      %p268 = pneg %p49
      %s269 = sadd.s32 %s22, 1
      %p270 = scmp.lt.s32.totalorder %s21, 1
      %s271 = scalar_select %p270, %s21, 1
      %p272 = scmp.lt.s32.totalorder %s269, 5
      %s273 = scalar_select %p272, %s269, 5
      %s274 = smul.addr %s273, 9
      %s275 = smul.addr %s271, 54
      %s276 = sadd.s32 %s274, %s275
      %s277 = smul.addr %s276, 4
      %s278 = scalar_lea.vmem %s1, %s277
      %p279 = pneg %p82
      %p280 = pneg %p79
      %s281 = sadd.s32 %s22, 2
      %p282 = scmp.lt.s32.totalorder %s21, 1
      %s283 = scalar_select %p282, %s21, 1
      %p284 = scmp.lt.s32.totalorder %s281, 5
      %s285 = scalar_select %p284, %s281, 5
      %s286 = smul.addr %s285, 9
      %s287 = smul.addr %s283, 54
      %s288 = sadd.s32 %s286, %s287
      %s289 = smul.addr %s288, 4
      %s290 = scalar_lea.vmem %s2, %s289
      %p291 = pneg %p112
      %p292 = pneg %p109
      %p293 = pneg %p133
      %p294 = pneg %p130
      %p295 = pneg %p161
      %p296 = pneg %p158
      %p297 = scmp.lt.s32.totalorder %s21, 1
      %s298 = scalar_select %p297, %s21, 1
      %p299 = scmp.lt.s32.totalorder %s22, 3
      %s300 = scalar_select %p299, %s22, 3
      %s301 = smul.addr %s300, 2
      %s302 = smul.addr %s298, 8
      %s303 = sadd.s32 %s301, %s302
      %s304 = smul.addr %s303, 4
      %s305 = scalar_lea.vmem %s4, %s304
      %p306 = pneg %p189
      %p307 = pneg %p186
      %p308 = scmp.lt.s32.totalorder %s21, 1
      %s309 = scalar_select %p308, %s21, 1
      %p310 = scmp.lt.s32.totalorder %s22, 3
      %s311 = scalar_select %p310, %s22, 3
      %s312 = smul.addr %s309, 4
      %s313 = sadd.s32 %s311, %s312
      %s314 = smul.addr %s313, 2
      %s315 = scalar_lea.vmem %s5, %s314
      %p316 = scmp.lt.s32.totalorder %s21, 1
      %s317 = scalar_select %p316, %s21, 1
      %p318 = scmp.lt.s32.totalorder %s22, 5
      %s319 = scalar_select %p318, %s22, 5
      %s320 = smul.addr %s319, 9
      %s321 = smul.addr %s317, 54
      %s322 = sadd.s32 %s320, %s321
      %s323 = smul.addr %s322, 4
      %s324 = scalar_lea.vmem %s0, %s323
      %s325 = sadd.s32 %s22, 1
      %p326 = scmp.lt.s32.totalorder %s21, 1
      %s327 = scalar_select %p326, %s21, 1
      %p328 = scmp.lt.s32.totalorder %s325, 5
      %s329 = scalar_select %p328, %s325, 5
      %s330 = smul.addr %s329, 9
      %s331 = smul.addr %s327, 54
      %s332 = sadd.s32 %s330, %s331
      %s333 = smul.addr %s332, 4
      %s334 = scalar_lea.vmem %s1, %s333
      %s335 = sadd.s32 %s22, 1
      %s336 = sadd.s32 %s22, 2
      %p337 = scmp.lt.s32.totalorder %s21, 1
      %s338 = scalar_select %p337, %s21, 1
      %p339 = scmp.lt.s32.totalorder %s336, 5
      %s340 = scalar_select %p339, %s336, 5
      %s341 = smul.addr %s340, 9
      %s342 = smul.addr %s338, 54
      %s343 = sadd.s32 %s341, %s342
      %s344 = smul.addr %s343, 4
      %s345 = scalar_lea.vmem %s2, %s344
      %s346 = sadd.s32 %s22, 2
      %p347 = scmp.lt.s32.totalorder %s21, 1
      %s348 = scalar_select %p347, %s21, 1
      %p349 = scmp.lt.s32.totalorder %s22, 3
      %s350 = scalar_select %p349, %s22, 3
      %s351 = smul.addr %s350, 2
      %s352 = smul.addr %s348, 8
      %s353 = sadd.s32 %s351, %s352
      %s354 = smul.addr %s353, 4
      %s355 = scalar_lea.vmem %s4, %s354
      %p356 = scmp.lt.s32.totalorder %s21, 1
      %s357 = scalar_select %p356, %s21, 1
      %p358 = scmp.lt.s32.totalorder %s22, 3
      %s359 = scalar_select %p358, %s22, 3
      %s360 = smul.addr %s357, 4
      %s361 = sadd.s32 %s359, %s360
      %s362 = smul.addr %s361, 2
      %s363 = scalar_lea.vmem %s5, %s362
      %v365 = vld [vmem:[%s324] sm:$0xff]
      %v366 = vld [vmem:[%s324 + $0x8] sm:$0xf]
      %v367 = vld [vmem:[%s324 + $0xc] sm:$0xff]
      %v368 = vld [vmem:[%s324 + $0x14] sm:$0xf]
      %v369 = vld [vmem:[%s3] sm:$0xf]
      %v370 = vld [vmem:[%s3 + $0x4] sm:$0xf]
      %v371 = vld [vmem:[%s3 + $0x8] sm:$0xf]
      %v372 = vld [vmem:[%s3 + $0xc] sm:$0xf]
      %v373 = vld [vmem:[%s3 + $0x10] sm:$0xf]
      %v374 = vld [vmem:[%s3 + $0x14] sm:$0xf]
      %v375 = vld [vmem:[%s3 + $0x18] sm:$0xf]
      %v376 = vld [vmem:[%s3 + $0x1c] sm:$0xf]
      %v377 = vld [vmem:[%s3 + $0x20] sm:$0xf]
      %v378 = vld [vmem:[%s3 + $0x24] sm:$0xf]
      %v379 = vld [vmem:[%s3 + $0x28] sm:$0xf]
      %v380 = vld [vmem:[%s3 + $0x2c] sm:$0xf]
      %v381 = vld [vmem:[%s3 + $0x30] sm:$0xf]
      %v382 = vld [vmem:[%s3 + $0x34] sm:$0xf]
      %v383 = vld [vmem:[%s3 + $0x38] sm:$0xf]
      %v384 = vld [vmem:[%s3 + $0x3c] sm:$0xf]
      %v385 = vld [vmem:[%s3 + $0x40] sm:$0xf]
      %v386 = vld [vmem:[%s3 + $0x44] sm:$0xf]
      %v387 = vld [vmem:[%s3 + $0x48] sm:$0xf]
      %v388 = vld [vmem:[%s3 + $0x4c] sm:$0xf]
      %v389 = vld [vmem:[%s3 + $0x50] sm:$0xf]
      %v390 = vld [vmem:[%s3 + $0x54] sm:$0xf]
      %v391 = vld [vmem:[%s3 + $0x58] sm:$0xf]
      %v392 = vld [vmem:[%s3 + $0x5c] sm:$0xf]
      %v393 = vld [vmem:[%s3 + $0x60] sm:$0xf]
      %v394 = vld [vmem:[%s3 + $0x64] sm:$0xf]
      %v395 = vld [vmem:[%s3 + $0x68] sm:$0xf]
      %v396 = vld [vmem:[%s3 + $0x6c] sm:$0xf]
      %v397 = vld [vmem:[%s3 + $0x70] sm:$0xf]
      %v398 = vld [vmem:[%s3 + $0x74] sm:$0xf]
      %v399 = vld [vmem:[%s3 + $0x78] sm:$0xf]
      %v400 = vld [vmem:[%s3 + $0x7c] sm:$0xf]
      %v401 = vld [vmem:[%s3 + $0x80] sm:$0xf]
      %v402 = vld [vmem:[%s3 + $0x84] sm:$0xf]
      %v403 = vld [vmem:[%s3 + $0x88] sm:$0xf]
      %v404 = vld [vmem:[%s3 + $0x8c] sm:$0xf]
      %v405 = vld [vmem:[%s3 + $0x90] sm:$0xf]
      %v406 = vld [vmem:[%s3 + $0x94] sm:$0xf]
      %v407 = vld [vmem:[%s3 + $0x98] sm:$0xf]
      %v408 = vld [vmem:[%s3 + $0x9c] sm:$0xf]
      %v409 = vld [vmem:[%s3 + $0xa0] sm:$0xf]
      %v410 = vld [vmem:[%s3 + $0xa4] sm:$0xf]
      %v411 = vld [vmem:[%s3 + $0xa8] sm:$0xf]
      %v412 = vld [vmem:[%s3 + $0xac] sm:$0xf]
      %v413 = vld [vmem:[%s3 + $0xb0] sm:$0xf]
      %v414 = vld [vmem:[%s3 + $0xb4] sm:$0xf]
      %v415 = vld [vmem:[%s3 + $0xb8] sm:$0xf]
      %v416 = vld [vmem:[%s3 + $0xbc] sm:$0xf]
      %v417 = vld [vmem:[%s324] sm:$0xcc]
      %v418 = vld [vmem:[%s324 + $0x8] sm:$0xc]
      %v419 = vld [vmem:[%s324 + $0xc] sm:$0xff]
      %v420 = vld [vmem:[%s324 + $0x14] sm:$0xf]
      %v421 = vld [vmem:[%s324 + $0x18] sm:$0x33]
      %v422 = vld [vmem:[%s324 + $0x20] sm:$0x3]
      %s423 = scalar_lea.vmem %s3, 192
      %v424 = vld [vmem:[%s423] sm:$0xf]
      %v425 = vld [vmem:[%s423 + $0x4] sm:$0xf]
      %v426 = vld [vmem:[%s423 + $0x8] sm:$0xf]
      %v427 = vld [vmem:[%s423 + $0xc] sm:$0xf]
      %v428 = vld [vmem:[%s423 + $0x10] sm:$0xf]
      %v429 = vld [vmem:[%s423 + $0x14] sm:$0xf]
      %v430 = vld [vmem:[%s423 + $0x18] sm:$0xf]
      %v431 = vld [vmem:[%s423 + $0x1c] sm:$0xf]
      %v432 = vld [vmem:[%s423 + $0x20] sm:$0xf]
      %v433 = vld [vmem:[%s423 + $0x24] sm:$0xf]
      %v434 = vld [vmem:[%s423 + $0x28] sm:$0xf]
      %v435 = vld [vmem:[%s423 + $0x2c] sm:$0xf]
      %v436 = vld [vmem:[%s423 + $0x30] sm:$0xf]
      %v437 = vld [vmem:[%s423 + $0x34] sm:$0xf]
      %v438 = vld [vmem:[%s423 + $0x38] sm:$0xf]
      %v439 = vld [vmem:[%s423 + $0x3c] sm:$0xf]
      %v440 = vld [vmem:[%s423 + $0x40] sm:$0xf]
      %v441 = vld [vmem:[%s423 + $0x44] sm:$0xf]
      %v442 = vld [vmem:[%s423 + $0x48] sm:$0xf]
      %v443 = vld [vmem:[%s423 + $0x4c] sm:$0xf]
      %v444 = vld [vmem:[%s423 + $0x50] sm:$0xf]
      %v445 = vld [vmem:[%s423 + $0x54] sm:$0xf]
      %v446 = vld [vmem:[%s423 + $0x58] sm:$0xf]
      %v447 = vld [vmem:[%s423 + $0x5c] sm:$0xf]
      %v448 = vld [vmem:[%s423 + $0x60] sm:$0xf]
      %v449 = vld [vmem:[%s423 + $0x64] sm:$0xf]
      %v450 = vld [vmem:[%s423 + $0x68] sm:$0xf]
      %v451 = vld [vmem:[%s423 + $0x6c] sm:$0xf]
      %v452 = vld [vmem:[%s423 + $0x70] sm:$0xf]
      %v453 = vld [vmem:[%s423 + $0x74] sm:$0xf]
      %v454 = vld [vmem:[%s423 + $0x78] sm:$0xf]
      %v455 = vld [vmem:[%s423 + $0x7c] sm:$0xf]
      %v456 = vld [vmem:[%s423 + $0x80] sm:$0xf]
      %v457 = vld [vmem:[%s423 + $0x84] sm:$0xf]
      %v458 = vld [vmem:[%s423 + $0x88] sm:$0xf]
      %v459 = vld [vmem:[%s423 + $0x8c] sm:$0xf]
      %v460 = vld [vmem:[%s423 + $0x90] sm:$0xf]
      %v461 = vld [vmem:[%s423 + $0x94] sm:$0xf]
      %v462 = vld [vmem:[%s423 + $0x98] sm:$0xf]
      %v463 = vld [vmem:[%s423 + $0x9c] sm:$0xf]
      %v464 = vld [vmem:[%s423 + $0xa0] sm:$0xf]
      %v465 = vld [vmem:[%s423 + $0xa4] sm:$0xf]
      %v466 = vld [vmem:[%s423 + $0xa8] sm:$0xf]
      %v467 = vld [vmem:[%s423 + $0xac] sm:$0xf]
      %v468 = vld [vmem:[%s423 + $0xb0] sm:$0xf]
      %v469 = vld [vmem:[%s423 + $0xb4] sm:$0xf]
      %v470 = vld [vmem:[%s423 + $0xb8] sm:$0xf]
      %v471 = vld [vmem:[%s423 + $0xbc] sm:$0xf]
      %v478 = vunpack.c.l.b16 %v417
      %v479 = vunpack.c.h.b16 %v417
      %v480 = vunpack.c.l.b16 %v418
      %v481 = vunpack.c.l.b16 %v419
      %v482 = vunpack.c.h.b16 %v419
      %v483 = vunpack.c.l.b16 %v420
      %v484 = vunpack.c.l.b16 %v421
      %v485 = vunpack.c.h.b16 %v421
      %v486 = vunpack.c.l.b16 %v422
      %v487 = vpack.c.b16 %v481, %v478
      %v488 = vpack.c.b16 %v482, %v479
      %v489 = vpack.c.b16 %v483, %v480
      %v490 = vpack.c.b16 %v484, %v484
      %v491 = vpack.c.b16 %v485, %v485
      %v492 = vpack.c.b16 %v486, %v486
      %vm493 = vcmask 1045504
      %v494 = vrot.slane %v487, 2
      %v495 = vrot.slane %v490, 2
      %v496 = vsel %vm493, %v494, %v495
      %v497 = vrot.slane %v488, 2
      %v498 = vrot.slane %v491, 2
      %v499 = vsel %vm493, %v497, %v498
      %v500 = vrot.slane %v489, 2
      %v501 = vrot.slane %v492, 2
      %v502 = vsel %vm493, %v500, %v501
      %v554 = vunpack.c.l.b16 %v424
      %v555 = vunpack.c.l.b16 %v425
      %v556 = vunpack.c.l.b16 %v426
      %v557 = vunpack.c.l.b16 %v427
      %v558 = vunpack.c.l.b16 %v428
      %v559 = vunpack.c.l.b16 %v429
      %v560 = vunpack.c.l.b16 %v430
      %v561 = vunpack.c.l.b16 %v431
      %v562 = vunpack.c.l.b16 %v432
      %v563 = vunpack.c.l.b16 %v433
      %v564 = vunpack.c.l.b16 %v434
      %v565 = vunpack.c.l.b16 %v435
      %v566 = vunpack.c.l.b16 %v436
      %v567 = vunpack.c.l.b16 %v437
      %v568 = vunpack.c.l.b16 %v438
      %v569 = vunpack.c.l.b16 %v439
      %v570 = vunpack.c.l.b16 %v440
      %v571 = vunpack.c.l.b16 %v441
      %v572 = vunpack.c.l.b16 %v442
      %v573 = vunpack.c.l.b16 %v443
      %v574 = vunpack.c.l.b16 %v444
      %v575 = vunpack.c.l.b16 %v445
      %v576 = vunpack.c.l.b16 %v446
      %v577 = vunpack.c.l.b16 %v447
      %v578 = vunpack.c.l.b16 %v448
      %v579 = vunpack.c.l.b16 %v449
      %v580 = vunpack.c.l.b16 %v450
      %v581 = vunpack.c.l.b16 %v451
      %v582 = vunpack.c.l.b16 %v452
      %v583 = vunpack.c.l.b16 %v453
      %v584 = vunpack.c.l.b16 %v454
      %v585 = vunpack.c.l.b16 %v455
      %v586 = vunpack.c.l.b16 %v456
      %v587 = vunpack.c.l.b16 %v457
      %v588 = vunpack.c.l.b16 %v458
      %v589 = vunpack.c.l.b16 %v459
      %v590 = vunpack.c.l.b16 %v460
      %v591 = vunpack.c.l.b16 %v461
      %v592 = vunpack.c.l.b16 %v462
      %v593 = vunpack.c.l.b16 %v463
      %v594 = vunpack.c.l.b16 %v464
      %v595 = vunpack.c.l.b16 %v465
      %v596 = vunpack.c.l.b16 %v466
      %v597 = vunpack.c.l.b16 %v467
      %v598 = vunpack.c.l.b16 %v468
      %v599 = vunpack.c.l.b16 %v469
      %v600 = vunpack.c.l.b16 %v470
      %v601 = vunpack.c.l.b16 %v471
      %v602 = vpack.c.b16 %v555, %v554
      %v603 = vpack.c.b16 %v557, %v556
      %v604 = vpack.c.b16 %v559, %v558
      %v605 = vpack.c.b16 %v561, %v560
      %v606 = vpack.c.b16 %v563, %v562
      %v607 = vpack.c.b16 %v565, %v564
      %v608 = vpack.c.b16 %v567, %v566
      %v609 = vpack.c.b16 %v569, %v568
      %v610 = vpack.c.b16 %v571, %v570
      %v611 = vpack.c.b16 %v573, %v572
      %v612 = vpack.c.b16 %v575, %v574
      %v613 = vpack.c.b16 %v577, %v576
      %v614 = vpack.c.b16 %v579, %v578
      %v615 = vpack.c.b16 %v581, %v580
      %v616 = vpack.c.b16 %v583, %v582
      %v617 = vpack.c.b16 %v585, %v584
      %v618 = vpack.c.b16 %v587, %v586
      %v619 = vpack.c.b16 %v589, %v588
      %v620 = vpack.c.b16 %v591, %v590
      %v621 = vpack.c.b16 %v593, %v592
      %v622 = vpack.c.b16 %v595, %v594
      %v623 = vpack.c.b16 %v597, %v596
      %v624 = vpack.c.b16 %v599, %v598
      %v625 = vpack.c.b16 %v601, %v600
      %650 = vmatprep.subr.bf16.mxu0 0
      %651 = vmatpush1.bf16.msra.mxu0 %v602
      %652 = vmatprep.subr.bf16.mxu0 0
      %653 = vmatpush1.bf16.msra.mxu0 %v603
      %654 = vmatprep.subr.bf16.mxu0 0
      %655 = vmatpush1.bf16.msra.mxu0 %v604
      %656 = vmatprep.subr.bf16.mxu0 0
      %657 = vmatpush1.bf16.msra.mxu0 %v605
      %658 = vmatprep.subr.bf16.mxu0 0
      %659 = vmatpush1.bf16.msra.mxu0 %v606
      %660 = vmatprep.subr.bf16.mxu0 0
      %661 = vmatpush1.bf16.msra.mxu0 %v607
      %662 = vmatprep.subr.bf16.mxu0 0
      %663 = vmatpush1.bf16.msra.mxu0 %v608
      %664 = vmatprep.subr.bf16.mxu0 0
      %665 = vmatpush1.bf16.msra.mxu0 %v609
      %666 = vmatprep.subr.bf16.mxu0 0
      %667 = vmatpush1.bf16.msra.mxu0 %v610
      %668 = vmatprep.subr.bf16.mxu0 0
      %669 = vmatpush1.bf16.msra.mxu0 %v611
      %670 = vmatprep.subr.bf16.mxu0 0
      %671 = vmatpush1.bf16.msra.mxu0 %v612
      %672 = vmatprep.subr.bf16.mxu0 0
      %673 = vmatpush1.bf16.msra.mxu0 %v613
      %674 = vmatprep.subr.bf16.mxu0 0
      %675 = vmatpush1.bf16.msra.mxu0 %v614
      %676 = vmatprep.subr.bf16.mxu0 0
      %677 = vmatpush1.bf16.msra.mxu0 %v615
      %678 = vmatprep.subr.bf16.mxu0 0
      %679 = vmatpush1.bf16.msra.mxu0 %v616
      %680 = vmatprep.subr.bf16.mxu0 0
      %681 = vmatpush1.bf16.msra.mxu0 %v617
      %682 = vmatprep.mubr.bf16.mxu0 %v499
      %683 = vmatmul.mubr.bf16.gmra.mrb[0].mxu0 %v496
      %v684 = vpop.f32.mrb[0].mxu0
      %v685 = vadd.f32 0.0, %v684
      %v686 = vpop.f32.mrb[0].mxu0
      %v687 = vpop.f32.mrb[0].mxu0
      %v688 = vadd.f32 0.0, %v687
      %v689 = vpop.f32.mrb[0].mxu0
      %690 = vdwg.mxu0
      %691 = vmatprep.subr.bf16.mxu0 0
      %692 = vmatpush1.bf16.msra.mxu0 %v618
      %693 = vmatprep.subr.bf16.mxu0 0
      %694 = vmatpush1.bf16.msra.mxu0 %v619
      %695 = vmatprep.subr.bf16.mxu0 0
      %696 = vmatpush1.bf16.msra.mxu0 %v620
      %697 = vmatprep.subr.bf16.mxu0 0
      %698 = vmatpush1.bf16.msra.mxu0 %v621
      %699 = vmatprep.subr.bf16.mxu0 0
      %700 = vmatpush1.bf16.msra.mxu0 %v622
      %701 = vmatprep.subr.bf16.mxu0 0
      %702 = vmatpush1.bf16.msra.mxu0 %v623
      %703 = vmatprep.subr.bf16.mxu0 0
      %704 = vmatpush1.bf16.msra.mxu0 %v624
      %705 = vmatprep.subr.bf16.mxu0 0
      %706 = vmatpush1.bf16.msra.mxu0 %v625
      %707 = vmatprep.subr.bf16.mxu0 0
      %708 = vmatpush1.bf16.msra.mxu0 0
      %709 = vmatprep.subr.bf16.mxu0 0
      %710 = vmatpush1.bf16.msra.mxu0 0
      %711 = vmatprep.subr.bf16.mxu0 0
      %712 = vmatpush1.bf16.msra.mxu0 0
      %713 = vmatprep.subr.bf16.mxu0 0
      %714 = vmatpush1.bf16.msra.mxu0 0
      %715 = vmatprep.subr.bf16.mxu0 0
      %716 = vmatpush1.bf16.msra.mxu0 0
      %717 = vmatprep.subr.bf16.mxu0 0
      %718 = vmatpush1.bf16.msra.mxu0 0
      %719 = vmatprep.subr.bf16.mxu0 0
      %720 = vmatpush1.bf16.msra.mxu0 0
      %721 = vmatprep.subr.bf16.mxu0 0
      %722 = vmatpush1.bf16.msra.mxu0 0
      %723 = vmatprep.mubr.bf16.mxu0 0
      %724 = vmatmul.mubr.bf16.gmra.mrb[0].mxu0 %v502
      %v725 = vpop.f32.mrb[0].mxu0
      %v726 = vadd.f32 %v685, %v725
      %v727 = vpop.f32.mrb[0].mxu0
      %v728 = vpop.f32.mrb[0].mxu0
      %v729 = vadd.f32 %v688, %v728
      %v730 = vpop.f32.mrb[0].mxu0
      %731 = vdwg.mxu0
      %v736 = vunpack.c.l.b16 %v365
      %v737 = vunpack.c.h.b16 %v365
      %v738 = vunpack.c.l.b16 %v366
      %v739 = vunpack.c.l.b16 %v367
      %v740 = vunpack.c.h.b16 %v367
      %v741 = vunpack.c.l.b16 %v368
      %v742 = vpack.c.b16 %v739, %v736
      %v743 = vpack.c.b16 %v740, %v737
      %v744 = vpack.c.b16 %v741, %v738
      %v796 = vunpack.c.l.b16 %v369
      %v797 = vunpack.c.l.b16 %v370
      %v798 = vunpack.c.l.b16 %v371
      %v799 = vunpack.c.l.b16 %v372
      %v800 = vunpack.c.l.b16 %v373
      %v801 = vunpack.c.l.b16 %v374
      %v802 = vunpack.c.l.b16 %v375
      %v803 = vunpack.c.l.b16 %v376
      %v804 = vunpack.c.l.b16 %v377
      %v805 = vunpack.c.l.b16 %v378
      %v806 = vunpack.c.l.b16 %v379
      %v807 = vunpack.c.l.b16 %v380
      %v808 = vunpack.c.l.b16 %v381
      %v809 = vunpack.c.l.b16 %v382
      %v810 = vunpack.c.l.b16 %v383
      %v811 = vunpack.c.l.b16 %v384
      %v812 = vunpack.c.l.b16 %v385
      %v813 = vunpack.c.l.b16 %v386
      %v814 = vunpack.c.l.b16 %v387
      %v815 = vunpack.c.l.b16 %v388
      %v816 = vunpack.c.l.b16 %v389
      %v817 = vunpack.c.l.b16 %v390
      %v818 = vunpack.c.l.b16 %v391
      %v819 = vunpack.c.l.b16 %v392
      %v820 = vunpack.c.l.b16 %v393
      %v821 = vunpack.c.l.b16 %v394
      %v822 = vunpack.c.l.b16 %v395
      %v823 = vunpack.c.l.b16 %v396
      %v824 = vunpack.c.l.b16 %v397
      %v825 = vunpack.c.l.b16 %v398
      %v826 = vunpack.c.l.b16 %v399
      %v827 = vunpack.c.l.b16 %v400
      %v828 = vunpack.c.l.b16 %v401
      %v829 = vunpack.c.l.b16 %v402
      %v830 = vunpack.c.l.b16 %v403
      %v831 = vunpack.c.l.b16 %v404
      %v832 = vunpack.c.l.b16 %v405
      %v833 = vunpack.c.l.b16 %v406
      %v834 = vunpack.c.l.b16 %v407
      %v835 = vunpack.c.l.b16 %v408
      %v836 = vunpack.c.l.b16 %v409
      %v837 = vunpack.c.l.b16 %v410
      %v838 = vunpack.c.l.b16 %v411
      %v839 = vunpack.c.l.b16 %v412
      %v840 = vunpack.c.l.b16 %v413
      %v841 = vunpack.c.l.b16 %v414
      %v842 = vunpack.c.l.b16 %v415
      %v843 = vunpack.c.l.b16 %v416
      %v844 = vpack.c.b16 %v797, %v796
      %v845 = vpack.c.b16 %v799, %v798
      %v846 = vpack.c.b16 %v801, %v800
      %v847 = vpack.c.b16 %v803, %v802
      %v848 = vpack.c.b16 %v805, %v804
      %v849 = vpack.c.b16 %v807, %v806
      %v850 = vpack.c.b16 %v809, %v808
      %v851 = vpack.c.b16 %v811, %v810
      %v852 = vpack.c.b16 %v813, %v812
      %v853 = vpack.c.b16 %v815, %v814
      %v854 = vpack.c.b16 %v817, %v816
      %v855 = vpack.c.b16 %v819, %v818
      %v856 = vpack.c.b16 %v821, %v820
      %v857 = vpack.c.b16 %v823, %v822
      %v858 = vpack.c.b16 %v825, %v824
      %v859 = vpack.c.b16 %v827, %v826
      %v860 = vpack.c.b16 %v829, %v828
      %v861 = vpack.c.b16 %v831, %v830
      %v862 = vpack.c.b16 %v833, %v832
      %v863 = vpack.c.b16 %v835, %v834
      %v864 = vpack.c.b16 %v837, %v836
      %v865 = vpack.c.b16 %v839, %v838
      %v866 = vpack.c.b16 %v841, %v840
      %v867 = vpack.c.b16 %v843, %v842
      %892 = vmatprep.subr.bf16.mxu0 0
      %893 = vmatpush1.bf16.msra.mxu0 %v844
      %894 = vmatprep.subr.bf16.mxu0 0
      %895 = vmatpush1.bf16.msra.mxu0 %v845
      %896 = vmatprep.subr.bf16.mxu0 0
      %897 = vmatpush1.bf16.msra.mxu0 %v846
      %898 = vmatprep.subr.bf16.mxu0 0
      %899 = vmatpush1.bf16.msra.mxu0 %v847
      %900 = vmatprep.subr.bf16.mxu0 0
      %901 = vmatpush1.bf16.msra.mxu0 %v848
      %902 = vmatprep.subr.bf16.mxu0 0
      %903 = vmatpush1.bf16.msra.mxu0 %v849
      %904 = vmatprep.subr.bf16.mxu0 0
      %905 = vmatpush1.bf16.msra.mxu0 %v850
      %906 = vmatprep.subr.bf16.mxu0 0
      %907 = vmatpush1.bf16.msra.mxu0 %v851
      %908 = vmatprep.subr.bf16.mxu0 0
      %909 = vmatpush1.bf16.msra.mxu0 %v852
      %910 = vmatprep.subr.bf16.mxu0 0
      %911 = vmatpush1.bf16.msra.mxu0 %v853
      %912 = vmatprep.subr.bf16.mxu0 0
      %913 = vmatpush1.bf16.msra.mxu0 %v854
      %914 = vmatprep.subr.bf16.mxu0 0
      %915 = vmatpush1.bf16.msra.mxu0 %v855
      %916 = vmatprep.subr.bf16.mxu0 0
      %917 = vmatpush1.bf16.msra.mxu0 %v856
      %918 = vmatprep.subr.bf16.mxu0 0
      %919 = vmatpush1.bf16.msra.mxu0 %v857
      %920 = vmatprep.subr.bf16.mxu0 0
      %921 = vmatpush1.bf16.msra.mxu0 %v858
      %922 = vmatprep.subr.bf16.mxu0 0
      %923 = vmatpush1.bf16.msra.mxu0 %v859
      %924 = vmatprep.mubr.bf16.mxu0 %v743
      %925 = vmatmul.mubr.bf16.gmra.mrb[0].mxu0 %v742
      %v926 = vpop.f32.mrb[0].mxu0
      %v927 = vadd.f32 %v726, %v926
      %v928 = vpop.f32.mrb[0].mxu0
      %v929 = vpop.f32.mrb[0].mxu0
      %v930 = vadd.f32 %v729, %v929
      %v931 = vpop.f32.mrb[0].mxu0
      %932 = vdwg.mxu0
      %933 = vmatprep.subr.bf16.mxu0 0
      %934 = vmatpush1.bf16.msra.mxu0 %v860
      %935 = vmatprep.subr.bf16.mxu0 0
      %936 = vmatpush1.bf16.msra.mxu0 %v861
      %937 = vmatprep.subr.bf16.mxu0 0
      %938 = vmatpush1.bf16.msra.mxu0 %v862
      %939 = vmatprep.subr.bf16.mxu0 0
      %940 = vmatpush1.bf16.msra.mxu0 %v863
      %941 = vmatprep.subr.bf16.mxu0 0
      %942 = vmatpush1.bf16.msra.mxu0 %v864
      %943 = vmatprep.subr.bf16.mxu0 0
      %944 = vmatpush1.bf16.msra.mxu0 %v865
      %945 = vmatprep.subr.bf16.mxu0 0
      %946 = vmatpush1.bf16.msra.mxu0 %v866
      %947 = vmatprep.subr.bf16.mxu0 0
      %948 = vmatpush1.bf16.msra.mxu0 %v867
      %949 = vmatprep.subr.bf16.mxu0 0
      %950 = vmatpush1.bf16.msra.mxu0 0
      %951 = vmatprep.subr.bf16.mxu0 0
      %952 = vmatpush1.bf16.msra.mxu0 0
      %953 = vmatprep.subr.bf16.mxu0 0
      %954 = vmatpush1.bf16.msra.mxu0 0
      %955 = vmatprep.subr.bf16.mxu0 0
      %956 = vmatpush1.bf16.msra.mxu0 0
      %957 = vmatprep.subr.bf16.mxu0 0
      %958 = vmatpush1.bf16.msra.mxu0 0
      %959 = vmatprep.subr.bf16.mxu0 0
      %960 = vmatpush1.bf16.msra.mxu0 0
      %961 = vmatprep.subr.bf16.mxu0 0
      %962 = vmatpush1.bf16.msra.mxu0 0
      %963 = vmatprep.subr.bf16.mxu0 0
      %964 = vmatpush1.bf16.msra.mxu0 0
      %965 = vmatprep.mubr.bf16.mxu0 0
      %966 = vmatmul.mubr.bf16.gmra.mrb[0].mxu0 %v744
      %v967 = vpop.f32.mrb[0].mxu0
      %v968 = vadd.f32 %v927, %v967
      %v969 = vpop.f32.mrb[0].mxu0
      %v970 = vpop.f32.mrb[0].mxu0
      %v971 = vadd.f32 %v930, %v970
      %v972 = vpop.f32.mrb[0].mxu0
      %973 = vdwg.mxu0
      %v974 = vld [vmem:[%s324 + $0x18] sm:$0xff]
      %v975 = vld [vmem:[%s324 + $0x20] sm:$0xf]
      %s976 = scalar_lea.vmem %s3, 384
      %v977 = vld [vmem:[%s976] sm:$0xf]
      %v978 = vld [vmem:[%s976 + $0x4] sm:$0xf]
      %v979 = vld [vmem:[%s976 + $0x8] sm:$0xf]
      %v980 = vld [vmem:[%s976 + $0xc] sm:$0xf]
      %v981 = vld [vmem:[%s976 + $0x10] sm:$0xf]
      %v982 = vld [vmem:[%s976 + $0x14] sm:$0xf]
      %v983 = vld [vmem:[%s976 + $0x18] sm:$0xf]
      %v984 = vld [vmem:[%s976 + $0x1c] sm:$0xf]
      %v985 = vld [vmem:[%s976 + $0x20] sm:$0xf]
      %v986 = vld [vmem:[%s976 + $0x24] sm:$0xf]
      %v987 = vld [vmem:[%s976 + $0x28] sm:$0xf]
      %v988 = vld [vmem:[%s976 + $0x2c] sm:$0xf]
      %v989 = vld [vmem:[%s976 + $0x30] sm:$0xf]
      %v990 = vld [vmem:[%s976 + $0x34] sm:$0xf]
      %v991 = vld [vmem:[%s976 + $0x38] sm:$0xf]
      %v992 = vld [vmem:[%s976 + $0x3c] sm:$0xf]
      %v993 = vld [vmem:[%s976 + $0x40] sm:$0xf]
      %v994 = vld [vmem:[%s976 + $0x44] sm:$0xf]
      %v995 = vld [vmem:[%s976 + $0x48] sm:$0xf]
      %v996 = vld [vmem:[%s976 + $0x4c] sm:$0xf]
      %v997 = vld [vmem:[%s976 + $0x50] sm:$0xf]
      %v998 = vld [vmem:[%s976 + $0x54] sm:$0xf]
      %v999 = vld [vmem:[%s976 + $0x58] sm:$0xf]
      %v1000 = vld [vmem:[%s976 + $0x5c] sm:$0xf]
      %v1001 = vld [vmem:[%s976 + $0x60] sm:$0xf]
      %v1002 = vld [vmem:[%s976 + $0x64] sm:$0xf]
      %v1003 = vld [vmem:[%s976 + $0x68] sm:$0xf]
      %v1004 = vld [vmem:[%s976 + $0x6c] sm:$0xf]
      %v1005 = vld [vmem:[%s976 + $0x70] sm:$0xf]
      %v1006 = vld [vmem:[%s976 + $0x74] sm:$0xf]
      %v1007 = vld [vmem:[%s976 + $0x78] sm:$0xf]
      %v1008 = vld [vmem:[%s976 + $0x7c] sm:$0xf]
      %v1009 = vld [vmem:[%s976 + $0x80] sm:$0xf]
      %v1010 = vld [vmem:[%s976 + $0x84] sm:$0xf]
      %v1011 = vld [vmem:[%s976 + $0x88] sm:$0xf]
      %v1012 = vld [vmem:[%s976 + $0x8c] sm:$0xf]
      %v1013 = vld [vmem:[%s976 + $0x90] sm:$0xf]
      %v1014 = vld [vmem:[%s976 + $0x94] sm:$0xf]
      %v1015 = vld [vmem:[%s976 + $0x98] sm:$0xf]
      %v1016 = vld [vmem:[%s976 + $0x9c] sm:$0xf]
      %v1017 = vld [vmem:[%s976 + $0xa0] sm:$0xf]
      %v1018 = vld [vmem:[%s976 + $0xa4] sm:$0xf]
      %v1019 = vld [vmem:[%s976 + $0xa8] sm:$0xf]
      %v1020 = vld [vmem:[%s976 + $0xac] sm:$0xf]
      %v1021 = vld [vmem:[%s976 + $0xb0] sm:$0xf]
      %v1022 = vld [vmem:[%s976 + $0xb4] sm:$0xf]
      %v1023 = vld [vmem:[%s976 + $0xb8] sm:$0xf]
      %v1024 = vld [vmem:[%s976 + $0xbc] sm:$0xf]
      %v1027 = vunpack.c.l.b16 %v974
      %v1028 = vunpack.c.h.b16 %v974
      %v1029 = vunpack.c.l.b16 %v975
      %v1030 = vpack.c.b16 %v1027, %v481
      %v1031 = vpack.c.b16 %v1028, %v482
      %v1032 = vpack.c.b16 %v1029, %v483
      %v1084 = vunpack.c.l.b16 %v977
      %v1085 = vunpack.c.l.b16 %v978
      %v1086 = vunpack.c.l.b16 %v979
      %v1087 = vunpack.c.l.b16 %v980
      %v1088 = vunpack.c.l.b16 %v981
      %v1089 = vunpack.c.l.b16 %v982
      %v1090 = vunpack.c.l.b16 %v983
      %v1091 = vunpack.c.l.b16 %v984
      %v1092 = vunpack.c.l.b16 %v985
      %v1093 = vunpack.c.l.b16 %v986
      %v1094 = vunpack.c.l.b16 %v987
      %v1095 = vunpack.c.l.b16 %v988
      %v1096 = vunpack.c.l.b16 %v989
      %v1097 = vunpack.c.l.b16 %v990
      %v1098 = vunpack.c.l.b16 %v991
      %v1099 = vunpack.c.l.b16 %v992
      %v1100 = vunpack.c.l.b16 %v993
      %v1101 = vunpack.c.l.b16 %v994
      %v1102 = vunpack.c.l.b16 %v995
      %v1103 = vunpack.c.l.b16 %v996
      %v1104 = vunpack.c.l.b16 %v997
      %v1105 = vunpack.c.l.b16 %v998
      %v1106 = vunpack.c.l.b16 %v999
      %v1107 = vunpack.c.l.b16 %v1000
      %v1108 = vunpack.c.l.b16 %v1001
      %v1109 = vunpack.c.l.b16 %v1002
      %v1110 = vunpack.c.l.b16 %v1003
      %v1111 = vunpack.c.l.b16 %v1004
      %v1112 = vunpack.c.l.b16 %v1005
      %v1113 = vunpack.c.l.b16 %v1006
      %v1114 = vunpack.c.l.b16 %v1007
      %v1115 = vunpack.c.l.b16 %v1008
      %v1116 = vunpack.c.l.b16 %v1009
      %v1117 = vunpack.c.l.b16 %v1010
      %v1118 = vunpack.c.l.b16 %v1011
      %v1119 = vunpack.c.l.b16 %v1012
      %v1120 = vunpack.c.l.b16 %v1013
      %v1121 = vunpack.c.l.b16 %v1014
      %v1122 = vunpack.c.l.b16 %v1015
      %v1123 = vunpack.c.l.b16 %v1016
      %v1124 = vunpack.c.l.b16 %v1017
      %v1125 = vunpack.c.l.b16 %v1018
      %v1126 = vunpack.c.l.b16 %v1019
      %v1127 = vunpack.c.l.b16 %v1020
      %v1128 = vunpack.c.l.b16 %v1021
      %v1129 = vunpack.c.l.b16 %v1022
      %v1130 = vunpack.c.l.b16 %v1023
      %v1131 = vunpack.c.l.b16 %v1024
      %v1132 = vpack.c.b16 %v1085, %v1084
      %v1133 = vpack.c.b16 %v1087, %v1086
      %v1134 = vpack.c.b16 %v1089, %v1088
      %v1135 = vpack.c.b16 %v1091, %v1090
      %v1136 = vpack.c.b16 %v1093, %v1092
      %v1137 = vpack.c.b16 %v1095, %v1094
      %v1138 = vpack.c.b16 %v1097, %v1096
      %v1139 = vpack.c.b16 %v1099, %v1098
      %v1140 = vpack.c.b16 %v1101, %v1100
      %v1141 = vpack.c.b16 %v1103, %v1102
      %v1142 = vpack.c.b16 %v1105, %v1104
      %v1143 = vpack.c.b16 %v1107, %v1106
      %v1144 = vpack.c.b16 %v1109, %v1108
      %v1145 = vpack.c.b16 %v1111, %v1110
      %v1146 = vpack.c.b16 %v1113, %v1112
      %v1147 = vpack.c.b16 %v1115, %v1114
      %v1148 = vpack.c.b16 %v1117, %v1116
      %v1149 = vpack.c.b16 %v1119, %v1118
      %v1150 = vpack.c.b16 %v1121, %v1120
      %v1151 = vpack.c.b16 %v1123, %v1122
      %v1152 = vpack.c.b16 %v1125, %v1124
      %v1153 = vpack.c.b16 %v1127, %v1126
      %v1154 = vpack.c.b16 %v1129, %v1128
      %v1155 = vpack.c.b16 %v1131, %v1130
      %1180 = vmatprep.subr.bf16.mxu0 0
      %1181 = vmatpush1.bf16.msra.mxu0 %v1132
      %1182 = vmatprep.subr.bf16.mxu0 0
      %1183 = vmatpush1.bf16.msra.mxu0 %v1133
      %1184 = vmatprep.subr.bf16.mxu0 0
      %1185 = vmatpush1.bf16.msra.mxu0 %v1134
      %1186 = vmatprep.subr.bf16.mxu0 0
      %1187 = vmatpush1.bf16.msra.mxu0 %v1135
      %1188 = vmatprep.subr.bf16.mxu0 0
      %1189 = vmatpush1.bf16.msra.mxu0 %v1136
      %1190 = vmatprep.subr.bf16.mxu0 0
      %1191 = vmatpush1.bf16.msra.mxu0 %v1137
      %1192 = vmatprep.subr.bf16.mxu0 0
      %1193 = vmatpush1.bf16.msra.mxu0 %v1138
      %1194 = vmatprep.subr.bf16.mxu0 0
      %1195 = vmatpush1.bf16.msra.mxu0 %v1139
      %1196 = vmatprep.subr.bf16.mxu0 0
      %1197 = vmatpush1.bf16.msra.mxu0 %v1140
      %1198 = vmatprep.subr.bf16.mxu0 0
      %1199 = vmatpush1.bf16.msra.mxu0 %v1141
      %1200 = vmatprep.subr.bf16.mxu0 0
      %1201 = vmatpush1.bf16.msra.mxu0 %v1142
      %1202 = vmatprep.subr.bf16.mxu0 0
      %1203 = vmatpush1.bf16.msra.mxu0 %v1143
      %1204 = vmatprep.subr.bf16.mxu0 0
      %1205 = vmatpush1.bf16.msra.mxu0 %v1144
      %1206 = vmatprep.subr.bf16.mxu0 0
      %1207 = vmatpush1.bf16.msra.mxu0 %v1145
      %1208 = vmatprep.subr.bf16.mxu0 0
      %1209 = vmatpush1.bf16.msra.mxu0 %v1146
      %1210 = vmatprep.subr.bf16.mxu0 0
      %1211 = vmatpush1.bf16.msra.mxu0 %v1147
      %1212 = vmatprep.mubr.bf16.mxu0 %v1031
      %1213 = vmatmul.mubr.bf16.gmra.mrb[0].mxu0 %v1030
      %v1214 = vpop.f32.mrb[0].mxu0
      %v1215 = vadd.f32 0.0, %v1214
      %v1216 = vpop.f32.mrb[0].mxu0
      %v1217 = vpop.f32.mrb[0].mxu0
      %v1218 = vadd.f32 0.0, %v1217
      %v1219 = vpop.f32.mrb[0].mxu0
      %1220 = vdwg.mxu0
      %1221 = vmatprep.subr.bf16.mxu0 0
      %1222 = vmatpush1.bf16.msra.mxu0 %v1148
      %1223 = vmatprep.subr.bf16.mxu0 0
      %1224 = vmatpush1.bf16.msra.mxu0 %v1149
      %1225 = vmatprep.subr.bf16.mxu0 0
      %1226 = vmatpush1.bf16.msra.mxu0 %v1150
      %1227 = vmatprep.subr.bf16.mxu0 0
      %1228 = vmatpush1.bf16.msra.mxu0 %v1151
      %1229 = vmatprep.subr.bf16.mxu0 0
      %1230 = vmatpush1.bf16.msra.mxu0 %v1152
      %1231 = vmatprep.subr.bf16.mxu0 0
      %1232 = vmatpush1.bf16.msra.mxu0 %v1153
      %1233 = vmatprep.subr.bf16.mxu0 0
      %1234 = vmatpush1.bf16.msra.mxu0 %v1154
      %1235 = vmatprep.subr.bf16.mxu0 0
      %1236 = vmatpush1.bf16.msra.mxu0 %v1155
      %1237 = vmatprep.subr.bf16.mxu0 0
      %1238 = vmatpush1.bf16.msra.mxu0 0
      %1239 = vmatprep.subr.bf16.mxu0 0
      %1240 = vmatpush1.bf16.msra.mxu0 0
      %1241 = vmatprep.subr.bf16.mxu0 0
      %1242 = vmatpush1.bf16.msra.mxu0 0
      %1243 = vmatprep.subr.bf16.mxu0 0
      %1244 = vmatpush1.bf16.msra.mxu0 0
      %1245 = vmatprep.subr.bf16.mxu0 0
      %1246 = vmatpush1.bf16.msra.mxu0 0
      %1247 = vmatprep.subr.bf16.mxu0 0
      %1248 = vmatpush1.bf16.msra.mxu0 0
      %1249 = vmatprep.subr.bf16.mxu0 0
      %1250 = vmatpush1.bf16.msra.mxu0 0
      %1251 = vmatprep.subr.bf16.mxu0 0
      %1252 = vmatpush1.bf16.msra.mxu0 0
      %1253 = vmatprep.mubr.bf16.mxu0 0
      %1254 = vmatmul.mubr.bf16.gmra.mrb[0].mxu0 %v1032
      %v1255 = vpop.f32.mrb[0].mxu0
      %v1256 = vadd.f32 %v1215, %v1255
      %v1257 = vpop.f32.mrb[0].mxu0
      %v1258 = vpop.f32.mrb[0].mxu0
      %v1259 = vadd.f32 %v1218, %v1258
      %v1260 = vpop.f32.mrb[0].mxu0
      %1261 = vdwg.mxu0
      %v1262 = vadd.f32 %v968, %v1256
      %v1263 = vadd.f32 %v971, %v1259
      %v1264 = vld [vmem:[%s334] sm:$0xff]
      %v1265 = vld [vmem:[%s334 + $0x8] sm:$0xf]
      %v1266 = vld [vmem:[%s334 + $0xc] sm:$0xff]
      %v1267 = vld [vmem:[%s334 + $0x14] sm:$0xf]
      %s1268 = scalar_lea.vmem %s3, 576
      %v1269 = vld [vmem:[%s1268] sm:$0xf]
      %v1270 = vld [vmem:[%s1268 + $0x4] sm:$0xf]
      %v1271 = vld [vmem:[%s1268 + $0x8] sm:$0xf]
      %v1272 = vld [vmem:[%s1268 + $0xc] sm:$0xf]
      %v1273 = vld [vmem:[%s1268 + $0x10] sm:$0xf]
      %v1274 = vld [vmem:[%s1268 + $0x14] sm:$0xf]
      %v1275 = vld [vmem:[%s1268 + $0x18] sm:$0xf]
      %v1276 = vld [vmem:[%s1268 + $0x1c] sm:$0xf]
      %v1277 = vld [vmem:[%s1268 + $0x20] sm:$0xf]
      %v1278 = vld [vmem:[%s1268 + $0x24] sm:$0xf]
      %v1279 = vld [vmem:[%s1268 + $0x28] sm:$0xf]
      %v1280 = vld [vmem:[%s1268 + $0x2c] sm:$0xf]
      %v1281 = vld [vmem:[%s1268 + $0x30] sm:$0xf]
      %v1282 = vld [vmem:[%s1268 + $0x34] sm:$0xf]
      %v1283 = vld [vmem:[%s1268 + $0x38] sm:$0xf]
      %v1284 = vld [vmem:[%s1268 + $0x3c] sm:$0xf]
      %v1285 = vld [vmem:[%s1268 + $0x40] sm:$0xf]
      %v1286 = vld [vmem:[%s1268 + $0x44] sm:$0xf]
      %v1287 = vld [vmem:[%s1268 + $0x48] sm:$0xf]
      %v1288 = vld [vmem:[%s1268 + $0x4c] sm:$0xf]
      %v1289 = vld [vmem:[%s1268 + $0x50] sm:$0xf]
      %v1290 = vld [vmem:[%s1268 + $0x54] sm:$0xf]
      %v1291 = vld [vmem:[%s1268 + $0x58] sm:$0xf]
      %v1292 = vld [vmem:[%s1268 + $0x5c] sm:$0xf]
      %v1293 = vld [vmem:[%s1268 + $0x60] sm:$0xf]
      %v1294 = vld [vmem:[%s1268 + $0x64] sm:$0xf]
      %v1295 = vld [vmem:[%s1268 + $0x68] sm:$0xf]
      %v1296 = vld [vmem:[%s1268 + $0x6c] sm:$0xf]
      %v1297 = vld [vmem:[%s1268 + $0x70] sm:$0xf]
      %v1298 = vld [vmem:[%s1268 + $0x74] sm:$0xf]
      %v1299 = vld [vmem:[%s1268 + $0x78] sm:$0xf]
      %v1300 = vld [vmem:[%s1268 + $0x7c] sm:$0xf]
      %v1301 = vld [vmem:[%s1268 + $0x80] sm:$0xf]
      %v1302 = vld [vmem:[%s1268 + $0x84] sm:$0xf]
      %v1303 = vld [vmem:[%s1268 + $0x88] sm:$0xf]
      %v1304 = vld [vmem:[%s1268 + $0x8c] sm:$0xf]
      %v1305 = vld [vmem:[%s1268 + $0x90] sm:$0xf]
      %v1306 = vld [vmem:[%s1268 + $0x94] sm:$0xf]
      %v1307 = vld [vmem:[%s1268 + $0x98] sm:$0xf]
      %v1308 = vld [vmem:[%s1268 + $0x9c] sm:$0xf]
      %v1309 = vld [vmem:[%s1268 + $0xa0] sm:$0xf]
      %v1310 = vld [vmem:[%s1268 + $0xa4] sm:$0xf]
      %v1311 = vld [vmem:[%s1268 + $0xa8] sm:$0xf]
      %v1312 = vld [vmem:[%s1268 + $0xac] sm:$0xf]
      %v1313 = vld [vmem:[%s1268 + $0xb0] sm:$0xf]
      %v1314 = vld [vmem:[%s1268 + $0xb4] sm:$0xf]
      %v1315 = vld [vmem:[%s1268 + $0xb8] sm:$0xf]
      %v1316 = vld [vmem:[%s1268 + $0xbc] sm:$0xf]
      %v1321 = vunpack.c.l.b16 %v1264
      %v1322 = vunpack.c.h.b16 %v1264
      %v1323 = vunpack.c.l.b16 %v1265
      %v1324 = vunpack.c.l.b16 %v1266
      %v1325 = vunpack.c.h.b16 %v1266
      %v1326 = vunpack.c.l.b16 %v1267
      %v1327 = vpack.c.b16 %v1324, %v1321
      %v1328 = vpack.c.b16 %v1325, %v1322
      %v1329 = vpack.c.b16 %v1326, %v1323
      %v1381 = vunpack.c.l.b16 %v1269
      %v1382 = vunpack.c.l.b16 %v1270
      %v1383 = vunpack.c.l.b16 %v1271
      %v1384 = vunpack.c.l.b16 %v1272
      %v1385 = vunpack.c.l.b16 %v1273
      %v1386 = vunpack.c.l.b16 %v1274
      %v1387 = vunpack.c.l.b16 %v1275
      %v1388 = vunpack.c.l.b16 %v1276
      %v1389 = vunpack.c.l.b16 %v1277
      %v1390 = vunpack.c.l.b16 %v1278
      %v1391 = vunpack.c.l.b16 %v1279
      %v1392 = vunpack.c.l.b16 %v1280
      %v1393 = vunpack.c.l.b16 %v1281
      %v1394 = vunpack.c.l.b16 %v1282
      %v1395 = vunpack.c.l.b16 %v1283
      %v1396 = vunpack.c.l.b16 %v1284
      %v1397 = vunpack.c.l.b16 %v1285
      %v1398 = vunpack.c.l.b16 %v1286
      %v1399 = vunpack.c.l.b16 %v1287
      %v1400 = vunpack.c.l.b16 %v1288
      %v1401 = vunpack.c.l.b16 %v1289
      %v1402 = vunpack.c.l.b16 %v1290
      %v1403 = vunpack.c.l.b16 %v1291
      %v1404 = vunpack.c.l.b16 %v1292
      %v1405 = vunpack.c.l.b16 %v1293
      %v1406 = vunpack.c.l.b16 %v1294
      %v1407 = vunpack.c.l.b16 %v1295
      %v1408 = vunpack.c.l.b16 %v1296
      %v1409 = vunpack.c.l.b16 %v1297
      %v1410 = vunpack.c.l.b16 %v1298
      %v1411 = vunpack.c.l.b16 %v1299
      %v1412 = vunpack.c.l.b16 %v1300
      %v1413 = vunpack.c.l.b16 %v1301
      %v1414 = vunpack.c.l.b16 %v1302
      %v1415 = vunpack.c.l.b16 %v1303
      %v1416 = vunpack.c.l.b16 %v1304
      %v1417 = vunpack.c.l.b16 %v1305
      %v1418 = vunpack.c.l.b16 %v1306
      %v1419 = vunpack.c.l.b16 %v1307
      %v1420 = vunpack.c.l.b16 %v1308
      %v1421 = vunpack.c.l.b16 %v1309
      %v1422 = vunpack.c.l.b16 %v1310
      %v1423 = vunpack.c.l.b16 %v1311
      %v1424 = vunpack.c.l.b16 %v1312
      %v1425 = vunpack.c.l.b16 %v1313
      %v1426 = vunpack.c.l.b16 %v1314
      %v1427 = vunpack.c.l.b16 %v1315
      %v1428 = vunpack.c.l.b16 %v1316
      %v1429 = vpack.c.b16 %v1382, %v1381
      %v1430 = vpack.c.b16 %v1384, %v1383
      %v1431 = vpack.c.b16 %v1386, %v1385
      %v1432 = vpack.c.b16 %v1388, %v1387
      %v1433 = vpack.c.b16 %v1390, %v1389
      %v1434 = vpack.c.b16 %v1392, %v1391
      %v1435 = vpack.c.b16 %v1394, %v1393
      %v1436 = vpack.c.b16 %v1396, %v1395
      %v1437 = vpack.c.b16 %v1398, %v1397
      %v1438 = vpack.c.b16 %v1400, %v1399
      %v1439 = vpack.c.b16 %v1402, %v1401
      %v1440 = vpack.c.b16 %v1404, %v1403
      %v1441 = vpack.c.b16 %v1406, %v1405
      %v1442 = vpack.c.b16 %v1408, %v1407
      %v1443 = vpack.c.b16 %v1410, %v1409
      %v1444 = vpack.c.b16 %v1412, %v1411
      %v1445 = vpack.c.b16 %v1414, %v1413
      %v1446 = vpack.c.b16 %v1416, %v1415
      %v1447 = vpack.c.b16 %v1418, %v1417
      %v1448 = vpack.c.b16 %v1420, %v1419
      %v1449 = vpack.c.b16 %v1422, %v1421
      %v1450 = vpack.c.b16 %v1424, %v1423
      %v1451 = vpack.c.b16 %v1426, %v1425
      %v1452 = vpack.c.b16 %v1428, %v1427
      %1477 = vmatprep.subr.bf16.mxu0 0
      %1478 = vmatpush1.bf16.msra.mxu0 %v1429
      %1479 = vmatprep.subr.bf16.mxu0 0
      %1480 = vmatpush1.bf16.msra.mxu0 %v1430
      %1481 = vmatprep.subr.bf16.mxu0 0
      %1482 = vmatpush1.bf16.msra.mxu0 %v1431
      %1483 = vmatprep.subr.bf16.mxu0 0
      %1484 = vmatpush1.bf16.msra.mxu0 %v1432
      %1485 = vmatprep.subr.bf16.mxu0 0
      %1486 = vmatpush1.bf16.msra.mxu0 %v1433
      %1487 = vmatprep.subr.bf16.mxu0 0
      %1488 = vmatpush1.bf16.msra.mxu0 %v1434
      %1489 = vmatprep.subr.bf16.mxu0 0
      %1490 = vmatpush1.bf16.msra.mxu0 %v1435
      %1491 = vmatprep.subr.bf16.mxu0 0
      %1492 = vmatpush1.bf16.msra.mxu0 %v1436
      %1493 = vmatprep.subr.bf16.mxu0 0
      %1494 = vmatpush1.bf16.msra.mxu0 %v1437
      %1495 = vmatprep.subr.bf16.mxu0 0
      %1496 = vmatpush1.bf16.msra.mxu0 %v1438
      %1497 = vmatprep.subr.bf16.mxu0 0
      %1498 = vmatpush1.bf16.msra.mxu0 %v1439
      %1499 = vmatprep.subr.bf16.mxu0 0
      %1500 = vmatpush1.bf16.msra.mxu0 %v1440
      %1501 = vmatprep.subr.bf16.mxu0 0
      %1502 = vmatpush1.bf16.msra.mxu0 %v1441
      %1503 = vmatprep.subr.bf16.mxu0 0
      %1504 = vmatpush1.bf16.msra.mxu0 %v1442
      %1505 = vmatprep.subr.bf16.mxu0 0
      %1506 = vmatpush1.bf16.msra.mxu0 %v1443
      %1507 = vmatprep.subr.bf16.mxu0 0
      %1508 = vmatpush1.bf16.msra.mxu0 %v1444
      %1509 = vmatprep.mubr.bf16.mxu0 %v1328
      %1510 = vmatmul.mubr.bf16.gmra.mrb[0].mxu0 %v1327
      %v1511 = vpop.f32.mrb[0].mxu0
      %v1512 = vadd.f32 0.0, %v1511
      %v1513 = vpop.f32.mrb[0].mxu0
      %v1514 = vpop.f32.mrb[0].mxu0
      %v1515 = vadd.f32 0.0, %v1514
      %v1516 = vpop.f32.mrb[0].mxu0
      %1517 = vdwg.mxu0
      %1518 = vmatprep.subr.bf16.mxu0 0
      %1519 = vmatpush1.bf16.msra.mxu0 %v1445
      %1520 = vmatprep.subr.bf16.mxu0 0
      %1521 = vmatpush1.bf16.msra.mxu0 %v1446
      %1522 = vmatprep.subr.bf16.mxu0 0
      %1523 = vmatpush1.bf16.msra.mxu0 %v1447
      %1524 = vmatprep.subr.bf16.mxu0 0
      %1525 = vmatpush1.bf16.msra.mxu0 %v1448
      %1526 = vmatprep.subr.bf16.mxu0 0
      %1527 = vmatpush1.bf16.msra.mxu0 %v1449
      %1528 = vmatprep.subr.bf16.mxu0 0
      %1529 = vmatpush1.bf16.msra.mxu0 %v1450
      %1530 = vmatprep.subr.bf16.mxu0 0
      %1531 = vmatpush1.bf16.msra.mxu0 %v1451
      %1532 = vmatprep.subr.bf16.mxu0 0
      %1533 = vmatpush1.bf16.msra.mxu0 %v1452
      %1534 = vmatprep.subr.bf16.mxu0 0
      %1535 = vmatpush1.bf16.msra.mxu0 0
      %1536 = vmatprep.subr.bf16.mxu0 0
      %1537 = vmatpush1.bf16.msra.mxu0 0
      %1538 = vmatprep.subr.bf16.mxu0 0
      %1539 = vmatpush1.bf16.msra.mxu0 0
      %1540 = vmatprep.subr.bf16.mxu0 0
      %1541 = vmatpush1.bf16.msra.mxu0 0
      %1542 = vmatprep.subr.bf16.mxu0 0
      %1543 = vmatpush1.bf16.msra.mxu0 0
      %1544 = vmatprep.subr.bf16.mxu0 0
      %1545 = vmatpush1.bf16.msra.mxu0 0
      %1546 = vmatprep.subr.bf16.mxu0 0
      %1547 = vmatpush1.bf16.msra.mxu0 0
      %1548 = vmatprep.subr.bf16.mxu0 0
      %1549 = vmatpush1.bf16.msra.mxu0 0
      %1550 = vmatprep.mubr.bf16.mxu0 0
      %1551 = vmatmul.mubr.bf16.gmra.mrb[0].mxu0 %v1329
      %v1552 = vpop.f32.mrb[0].mxu0
      %v1553 = vadd.f32 %v1512, %v1552
      %v1554 = vpop.f32.mrb[0].mxu0
      %v1555 = vpop.f32.mrb[0].mxu0
      %v1556 = vadd.f32 %v1515, %v1555
      %v1557 = vpop.f32.mrb[0].mxu0
      %1558 = vdwg.mxu0
      %v1559 = vadd.f32 %v1262, %v1553
      %v1560 = vadd.f32 %v1263, %v1556
      %v1561 = vld [vmem:[%s334] sm:$0xcc]
      %v1562 = vld [vmem:[%s334 + $0x8] sm:$0xc]
      %v1563 = vld [vmem:[%s334 + $0xc] sm:$0xff]
      %v1564 = vld [vmem:[%s334 + $0x14] sm:$0xf]
      %v1565 = vld [vmem:[%s334 + $0x18] sm:$0x33]
      %v1566 = vld [vmem:[%s334 + $0x20] sm:$0x3]
      %s1567 = scalar_lea.vmem %s3, 768
      %v1568 = vld [vmem:[%s1567] sm:$0xf]
      %v1569 = vld [vmem:[%s1567 + $0x4] sm:$0xf]
      %v1570 = vld [vmem:[%s1567 + $0x8] sm:$0xf]
      %v1571 = vld [vmem:[%s1567 + $0xc] sm:$0xf]
      %v1572 = vld [vmem:[%s1567 + $0x10] sm:$0xf]
      %v1573 = vld [vmem:[%s1567 + $0x14] sm:$0xf]
      %v1574 = vld [vmem:[%s1567 + $0x18] sm:$0xf]
      %v1575 = vld [vmem:[%s1567 + $0x1c] sm:$0xf]
      %v1576 = vld [vmem:[%s1567 + $0x20] sm:$0xf]
      %v1577 = vld [vmem:[%s1567 + $0x24] sm:$0xf]
      %v1578 = vld [vmem:[%s1567 + $0x28] sm:$0xf]
      %v1579 = vld [vmem:[%s1567 + $0x2c] sm:$0xf]
      %v1580 = vld [vmem:[%s1567 + $0x30] sm:$0xf]
      %v1581 = vld [vmem:[%s1567 + $0x34] sm:$0xf]
      %v1582 = vld [vmem:[%s1567 + $0x38] sm:$0xf]
      %v1583 = vld [vmem:[%s1567 + $0x3c] sm:$0xf]
      %v1584 = vld [vmem:[%s1567 + $0x40] sm:$0xf]
      %v1585 = vld [vmem:[%s1567 + $0x44] sm:$0xf]
      %v1586 = vld [vmem:[%s1567 + $0x48] sm:$0xf]
      %v1587 = vld [vmem:[%s1567 + $0x4c] sm:$0xf]
      %v1588 = vld [vmem:[%s1567 + $0x50] sm:$0xf]
      %v1589 = vld [vmem:[%s1567 + $0x54] sm:$0xf]
      %v1590 = vld [vmem:[%s1567 + $0x58] sm:$0xf]
      %v1591 = vld [vmem:[%s1567 + $0x5c] sm:$0xf]
      %v1592 = vld [vmem:[%s1567 + $0x60] sm:$0xf]
      %v1593 = vld [vmem:[%s1567 + $0x64] sm:$0xf]
      %v1594 = vld [vmem:[%s1567 + $0x68] sm:$0xf]
      %v1595 = vld [vmem:[%s1567 + $0x6c] sm:$0xf]
      %v1596 = vld [vmem:[%s1567 + $0x70] sm:$0xf]
      %v1597 = vld [vmem:[%s1567 + $0x74] sm:$0xf]
      %v1598 = vld [vmem:[%s1567 + $0x78] sm:$0xf]
      %v1599 = vld [vmem:[%s1567 + $0x7c] sm:$0xf]
      %v1600 = vld [vmem:[%s1567 + $0x80] sm:$0xf]
      %v1601 = vld [vmem:[%s1567 + $0x84] sm:$0xf]
      %v1602 = vld [vmem:[%s1567 + $0x88] sm:$0xf]
      %v1603 = vld [vmem:[%s1567 + $0x8c] sm:$0xf]
      %v1604 = vld [vmem:[%s1567 + $0x90] sm:$0xf]
      %v1605 = vld [vmem:[%s1567 + $0x94] sm:$0xf]
      %v1606 = vld [vmem:[%s1567 + $0x98] sm:$0xf]
      %v1607 = vld [vmem:[%s1567 + $0x9c] sm:$0xf]
      %v1608 = vld [vmem:[%s1567 + $0xa0] sm:$0xf]
      %v1609 = vld [vmem:[%s1567 + $0xa4] sm:$0xf]
      %v1610 = vld [vmem:[%s1567 + $0xa8] sm:$0xf]
      %v1611 = vld [vmem:[%s1567 + $0xac] sm:$0xf]
      %v1612 = vld [vmem:[%s1567 + $0xb0] sm:$0xf]
      %v1613 = vld [vmem:[%s1567 + $0xb4] sm:$0xf]
      %v1614 = vld [vmem:[%s1567 + $0xb8] sm:$0xf]
      %v1615 = vld [vmem:[%s1567 + $0xbc] sm:$0xf]
      %v1622 = vunpack.c.l.b16 %v1561
      %v1623 = vunpack.c.h.b16 %v1561
      %v1624 = vunpack.c.l.b16 %v1562
      %v1625 = vunpack.c.l.b16 %v1563
      %v1626 = vunpack.c.h.b16 %v1563
      %v1627 = vunpack.c.l.b16 %v1564
      %v1628 = vunpack.c.l.b16 %v1565
      %v1629 = vunpack.c.h.b16 %v1565
      %v1630 = vunpack.c.l.b16 %v1566
      %v1631 = vpack.c.b16 %v1625, %v1622
      %v1632 = vpack.c.b16 %v1626, %v1623
      %v1633 = vpack.c.b16 %v1627, %v1624
      %v1634 = vpack.c.b16 %v1628, %v1628
      %v1635 = vpack.c.b16 %v1629, %v1629
      %v1636 = vpack.c.b16 %v1630, %v1630
      %v1637 = vrot.slane %v1631, 2
      %v1638 = vrot.slane %v1634, 2
      %v1639 = vsel %vm493, %v1637, %v1638
      %v1640 = vrot.slane %v1632, 2
      %v1641 = vrot.slane %v1635, 2
      %v1642 = vsel %vm493, %v1640, %v1641
      %v1643 = vrot.slane %v1633, 2
      %v1644 = vrot.slane %v1636, 2
      %v1645 = vsel %vm493, %v1643, %v1644
      %v1697 = vunpack.c.l.b16 %v1568
      %v1698 = vunpack.c.l.b16 %v1569
      %v1699 = vunpack.c.l.b16 %v1570
      %v1700 = vunpack.c.l.b16 %v1571
      %v1701 = vunpack.c.l.b16 %v1572
      %v1702 = vunpack.c.l.b16 %v1573
      %v1703 = vunpack.c.l.b16 %v1574
      %v1704 = vunpack.c.l.b16 %v1575
      %v1705 = vunpack.c.l.b16 %v1576
      %v1706 = vunpack.c.l.b16 %v1577
      %v1707 = vunpack.c.l.b16 %v1578
      %v1708 = vunpack.c.l.b16 %v1579
      %v1709 = vunpack.c.l.b16 %v1580
      %v1710 = vunpack.c.l.b16 %v1581
      %v1711 = vunpack.c.l.b16 %v1582
      %v1712 = vunpack.c.l.b16 %v1583
      %v1713 = vunpack.c.l.b16 %v1584
      %v1714 = vunpack.c.l.b16 %v1585
      %v1715 = vunpack.c.l.b16 %v1586
      %v1716 = vunpack.c.l.b16 %v1587
      %v1717 = vunpack.c.l.b16 %v1588
      %v1718 = vunpack.c.l.b16 %v1589
      %v1719 = vunpack.c.l.b16 %v1590
      %v1720 = vunpack.c.l.b16 %v1591
      %v1721 = vunpack.c.l.b16 %v1592
      %v1722 = vunpack.c.l.b16 %v1593
      %v1723 = vunpack.c.l.b16 %v1594
      %v1724 = vunpack.c.l.b16 %v1595
      %v1725 = vunpack.c.l.b16 %v1596
      %v1726 = vunpack.c.l.b16 %v1597
      %v1727 = vunpack.c.l.b16 %v1598
      %v1728 = vunpack.c.l.b16 %v1599
      %v1729 = vunpack.c.l.b16 %v1600
      %v1730 = vunpack.c.l.b16 %v1601
      %v1731 = vunpack.c.l.b16 %v1602
      %v1732 = vunpack.c.l.b16 %v1603
      %v1733 = vunpack.c.l.b16 %v1604
      %v1734 = vunpack.c.l.b16 %v1605
      %v1735 = vunpack.c.l.b16 %v1606
      %v1736 = vunpack.c.l.b16 %v1607
      %v1737 = vunpack.c.l.b16 %v1608
      %v1738 = vunpack.c.l.b16 %v1609
      %v1739 = vunpack.c.l.b16 %v1610
      %v1740 = vunpack.c.l.b16 %v1611
      %v1741 = vunpack.c.l.b16 %v1612
      %v1742 = vunpack.c.l.b16 %v1613
      %v1743 = vunpack.c.l.b16 %v1614
      %v1744 = vunpack.c.l.b16 %v1615
      %v1745 = vpack.c.b16 %v1698, %v1697
      %v1746 = vpack.c.b16 %v1700, %v1699
      %v1747 = vpack.c.b16 %v1702, %v1701
      %v1748 = vpack.c.b16 %v1704, %v1703
      %v1749 = vpack.c.b16 %v1706, %v1705
      %v1750 = vpack.c.b16 %v1708, %v1707
      %v1751 = vpack.c.b16 %v1710, %v1709
      %v1752 = vpack.c.b16 %v1712, %v1711
      %v1753 = vpack.c.b16 %v1714, %v1713
      %v1754 = vpack.c.b16 %v1716, %v1715
      %v1755 = vpack.c.b16 %v1718, %v1717
      %v1756 = vpack.c.b16 %v1720, %v1719
      %v1757 = vpack.c.b16 %v1722, %v1721
      %v1758 = vpack.c.b16 %v1724, %v1723
      %v1759 = vpack.c.b16 %v1726, %v1725
      %v1760 = vpack.c.b16 %v1728, %v1727
      %v1761 = vpack.c.b16 %v1730, %v1729
      %v1762 = vpack.c.b16 %v1732, %v1731
      %v1763 = vpack.c.b16 %v1734, %v1733
      %v1764 = vpack.c.b16 %v1736, %v1735
      %v1765 = vpack.c.b16 %v1738, %v1737
      %v1766 = vpack.c.b16 %v1740, %v1739
      %v1767 = vpack.c.b16 %v1742, %v1741
      %v1768 = vpack.c.b16 %v1744, %v1743
      %1793 = vmatprep.subr.bf16.mxu0 0
      %1794 = vmatpush1.bf16.msra.mxu0 %v1745
      %1795 = vmatprep.subr.bf16.mxu0 0
      %1796 = vmatpush1.bf16.msra.mxu0 %v1746
      %1797 = vmatprep.subr.bf16.mxu0 0
      %1798 = vmatpush1.bf16.msra.mxu0 %v1747
      %1799 = vmatprep.subr.bf16.mxu0 0
      %1800 = vmatpush1.bf16.msra.mxu0 %v1748
      %1801 = vmatprep.subr.bf16.mxu0 0
      %1802 = vmatpush1.bf16.msra.mxu0 %v1749
      %1803 = vmatprep.subr.bf16.mxu0 0
      %1804 = vmatpush1.bf16.msra.mxu0 %v1750
      %1805 = vmatprep.subr.bf16.mxu0 0
      %1806 = vmatpush1.bf16.msra.mxu0 %v1751
      %1807 = vmatprep.subr.bf16.mxu0 0
      %1808 = vmatpush1.bf16.msra.mxu0 %v1752
      %1809 = vmatprep.subr.bf16.mxu0 0
      %1810 = vmatpush1.bf16.msra.mxu0 %v1753
      %1811 = vmatprep.subr.bf16.mxu0 0
      %1812 = vmatpush1.bf16.msra.mxu0 %v1754
      %1813 = vmatprep.subr.bf16.mxu0 0
      %1814 = vmatpush1.bf16.msra.mxu0 %v1755
      %1815 = vmatprep.subr.bf16.mxu0 0
      %1816 = vmatpush1.bf16.msra.mxu0 %v1756
      %1817 = vmatprep.subr.bf16.mxu0 0
      %1818 = vmatpush1.bf16.msra.mxu0 %v1757
      %1819 = vmatprep.subr.bf16.mxu0 0
      %1820 = vmatpush1.bf16.msra.mxu0 %v1758
      %1821 = vmatprep.subr.bf16.mxu0 0
      %1822 = vmatpush1.bf16.msra.mxu0 %v1759
      %1823 = vmatprep.subr.bf16.mxu0 0
      %1824 = vmatpush1.bf16.msra.mxu0 %v1760
      %1825 = vmatprep.mubr.bf16.mxu0 %v1642
      %1826 = vmatmul.mubr.bf16.gmra.mrb[0].mxu0 %v1639
      %v1827 = vpop.f32.mrb[0].mxu0
      %v1828 = vadd.f32 0.0, %v1827
      %v1829 = vpop.f32.mrb[0].mxu0
      %v1830 = vpop.f32.mrb[0].mxu0
      %v1831 = vadd.f32 0.0, %v1830
      %v1832 = vpop.f32.mrb[0].mxu0
      %1833 = vdwg.mxu0
      %1834 = vmatprep.subr.bf16.mxu0 0
      %1835 = vmatpush1.bf16.msra.mxu0 %v1761
      %1836 = vmatprep.subr.bf16.mxu0 0
      %1837 = vmatpush1.bf16.msra.mxu0 %v1762
      %1838 = vmatprep.subr.bf16.mxu0 0
      %1839 = vmatpush1.bf16.msra.mxu0 %v1763
      %1840 = vmatprep.subr.bf16.mxu0 0
      %1841 = vmatpush1.bf16.msra.mxu0 %v1764
      %1842 = vmatprep.subr.bf16.mxu0 0
      %1843 = vmatpush1.bf16.msra.mxu0 %v1765
      %1844 = vmatprep.subr.bf16.mxu0 0
      %1845 = vmatpush1.bf16.msra.mxu0 %v1766
      %1846 = vmatprep.subr.bf16.mxu0 0
      %1847 = vmatpush1.bf16.msra.mxu0 %v1767
      %1848 = vmatprep.subr.bf16.mxu0 0
      %1849 = vmatpush1.bf16.msra.mxu0 %v1768
      %1850 = vmatprep.subr.bf16.mxu0 0
      %1851 = vmatpush1.bf16.msra.mxu0 0
      %1852 = vmatprep.subr.bf16.mxu0 0
      %1853 = vmatpush1.bf16.msra.mxu0 0
      %1854 = vmatprep.subr.bf16.mxu0 0
      %1855 = vmatpush1.bf16.msra.mxu0 0
      %1856 = vmatprep.subr.bf16.mxu0 0
      %1857 = vmatpush1.bf16.msra.mxu0 0
      %1858 = vmatprep.subr.bf16.mxu0 0
      %1859 = vmatpush1.bf16.msra.mxu0 0
      %1860 = vmatprep.subr.bf16.mxu0 0
      %1861 = vmatpush1.bf16.msra.mxu0 0
      %1862 = vmatprep.subr.bf16.mxu0 0
      %1863 = vmatpush1.bf16.msra.mxu0 0
      %1864 = vmatprep.subr.bf16.mxu0 0
      %1865 = vmatpush1.bf16.msra.mxu0 0
      %1866 = vmatprep.mubr.bf16.mxu0 0
      %1867 = vmatmul.mubr.bf16.gmra.mrb[0].mxu0 %v1645
      %v1868 = vpop.f32.mrb[0].mxu0
      %v1869 = vadd.f32 %v1828, %v1868
      %v1870 = vpop.f32.mrb[0].mxu0
      %v1871 = vpop.f32.mrb[0].mxu0
      %v1872 = vadd.f32 %v1831, %v1871
      %v1873 = vpop.f32.mrb[0].mxu0
      %1874 = vdwg.mxu0
      %v1875 = vadd.f32 %v1559, %v1869
      %v1876 = vadd.f32 %v1560, %v1872
      %v1877 = vld [vmem:[%s334 + $0x18] sm:$0xff]
      %v1878 = vld [vmem:[%s334 + $0x20] sm:$0xf]
      %s1879 = scalar_lea.vmem %s3, 960
      %v1880 = vld [vmem:[%s1879] sm:$0xf]
      %v1881 = vld [vmem:[%s1879 + $0x4] sm:$0xf]
      %v1882 = vld [vmem:[%s1879 + $0x8] sm:$0xf]
      %v1883 = vld [vmem:[%s1879 + $0xc] sm:$0xf]
      %v1884 = vld [vmem:[%s1879 + $0x10] sm:$0xf]
      %v1885 = vld [vmem:[%s1879 + $0x14] sm:$0xf]
      %v1886 = vld [vmem:[%s1879 + $0x18] sm:$0xf]
      %v1887 = vld [vmem:[%s1879 + $0x1c] sm:$0xf]
      %v1888 = vld [vmem:[%s1879 + $0x20] sm:$0xf]
      %v1889 = vld [vmem:[%s1879 + $0x24] sm:$0xf]
      %v1890 = vld [vmem:[%s1879 + $0x28] sm:$0xf]
      %v1891 = vld [vmem:[%s1879 + $0x2c] sm:$0xf]
      %v1892 = vld [vmem:[%s1879 + $0x30] sm:$0xf]
      %v1893 = vld [vmem:[%s1879 + $0x34] sm:$0xf]
      %v1894 = vld [vmem:[%s1879 + $0x38] sm:$0xf]
      %v1895 = vld [vmem:[%s1879 + $0x3c] sm:$0xf]
      %v1896 = vld [vmem:[%s1879 + $0x40] sm:$0xf]
      %v1897 = vld [vmem:[%s1879 + $0x44] sm:$0xf]
      %v1898 = vld [vmem:[%s1879 + $0x48] sm:$0xf]
      %v1899 = vld [vmem:[%s1879 + $0x4c] sm:$0xf]
      %v1900 = vld [vmem:[%s1879 + $0x50] sm:$0xf]
      %v1901 = vld [vmem:[%s1879 + $0x54] sm:$0xf]
      %v1902 = vld [vmem:[%s1879 + $0x58] sm:$0xf]
      %v1903 = vld [vmem:[%s1879 + $0x5c] sm:$0xf]
      %v1904 = vld [vmem:[%s1879 + $0x60] sm:$0xf]
      %v1905 = vld [vmem:[%s1879 + $0x64] sm:$0xf]
      %v1906 = vld [vmem:[%s1879 + $0x68] sm:$0xf]
      %v1907 = vld [vmem:[%s1879 + $0x6c] sm:$0xf]
      %v1908 = vld [vmem:[%s1879 + $0x70] sm:$0xf]
      %v1909 = vld [vmem:[%s1879 + $0x74] sm:$0xf]
      %v1910 = vld [vmem:[%s1879 + $0x78] sm:$0xf]
      %v1911 = vld [vmem:[%s1879 + $0x7c] sm:$0xf]
      %v1912 = vld [vmem:[%s1879 + $0x80] sm:$0xf]
      %v1913 = vld [vmem:[%s1879 + $0x84] sm:$0xf]
      %v1914 = vld [vmem:[%s1879 + $0x88] sm:$0xf]
      %v1915 = vld [vmem:[%s1879 + $0x8c] sm:$0xf]
      %v1916 = vld [vmem:[%s1879 + $0x90] sm:$0xf]
      %v1917 = vld [vmem:[%s1879 + $0x94] sm:$0xf]
      %v1918 = vld [vmem:[%s1879 + $0x98] sm:$0xf]
      %v1919 = vld [vmem:[%s1879 + $0x9c] sm:$0xf]
      %v1920 = vld [vmem:[%s1879 + $0xa0] sm:$0xf]
      %v1921 = vld [vmem:[%s1879 + $0xa4] sm:$0xf]
      %v1922 = vld [vmem:[%s1879 + $0xa8] sm:$0xf]
      %v1923 = vld [vmem:[%s1879 + $0xac] sm:$0xf]
      %v1924 = vld [vmem:[%s1879 + $0xb0] sm:$0xf]
      %v1925 = vld [vmem:[%s1879 + $0xb4] sm:$0xf]
      %v1926 = vld [vmem:[%s1879 + $0xb8] sm:$0xf]
      %v1927 = vld [vmem:[%s1879 + $0xbc] sm:$0xf]
      %v1930 = vunpack.c.l.b16 %v1877
      %v1931 = vunpack.c.h.b16 %v1877
      %v1932 = vunpack.c.l.b16 %v1878
      %v1933 = vpack.c.b16 %v1930, %v1625
      %v1934 = vpack.c.b16 %v1931, %v1626
      %v1935 = vpack.c.b16 %v1932, %v1627
      %v1987 = vunpack.c.l.b16 %v1880
      %v1988 = vunpack.c.l.b16 %v1881
      %v1989 = vunpack.c.l.b16 %v1882
      %v1990 = vunpack.c.l.b16 %v1883
      %v1991 = vunpack.c.l.b16 %v1884
      %v1992 = vunpack.c.l.b16 %v1885
      %v1993 = vunpack.c.l.b16 %v1886
      %v1994 = vunpack.c.l.b16 %v1887
      %v1995 = vunpack.c.l.b16 %v1888
      %v1996 = vunpack.c.l.b16 %v1889
      %v1997 = vunpack.c.l.b16 %v1890
      %v1998 = vunpack.c.l.b16 %v1891
      %v1999 = vunpack.c.l.b16 %v1892
      %v2000 = vunpack.c.l.b16 %v1893
      %v2001 = vunpack.c.l.b16 %v1894
      %v2002 = vunpack.c.l.b16 %v1895
      %v2003 = vunpack.c.l.b16 %v1896
      %v2004 = vunpack.c.l.b16 %v1897
      %v2005 = vunpack.c.l.b16 %v1898
      %v2006 = vunpack.c.l.b16 %v1899
      %v2007 = vunpack.c.l.b16 %v1900
      %v2008 = vunpack.c.l.b16 %v1901
      %v2009 = vunpack.c.l.b16 %v1902
      %v2010 = vunpack.c.l.b16 %v1903
      %v2011 = vunpack.c.l.b16 %v1904
      %v2012 = vunpack.c.l.b16 %v1905
      %v2013 = vunpack.c.l.b16 %v1906
      %v2014 = vunpack.c.l.b16 %v1907
      %v2015 = vunpack.c.l.b16 %v1908
      %v2016 = vunpack.c.l.b16 %v1909
      %v2017 = vunpack.c.l.b16 %v1910
      %v2018 = vunpack.c.l.b16 %v1911
      %v2019 = vunpack.c.l.b16 %v1912
      %v2020 = vunpack.c.l.b16 %v1913
      %v2021 = vunpack.c.l.b16 %v1914
      %v2022 = vunpack.c.l.b16 %v1915
      %v2023 = vunpack.c.l.b16 %v1916
      %v2024 = vunpack.c.l.b16 %v1917
      %v2025 = vunpack.c.l.b16 %v1918
      %v2026 = vunpack.c.l.b16 %v1919
      %v2027 = vunpack.c.l.b16 %v1920
      %v2028 = vunpack.c.l.b16 %v1921
      %v2029 = vunpack.c.l.b16 %v1922
      %v2030 = vunpack.c.l.b16 %v1923
      %v2031 = vunpack.c.l.b16 %v1924
      %v2032 = vunpack.c.l.b16 %v1925
      %v2033 = vunpack.c.l.b16 %v1926
      %v2034 = vunpack.c.l.b16 %v1927
      %v2035 = vpack.c.b16 %v1988, %v1987
      %v2036 = vpack.c.b16 %v1990, %v1989
      %v2037 = vpack.c.b16 %v1992, %v1991
      %v2038 = vpack.c.b16 %v1994, %v1993
      %v2039 = vpack.c.b16 %v1996, %v1995
      %v2040 = vpack.c.b16 %v1998, %v1997
      %v2041 = vpack.c.b16 %v2000, %v1999
      %v2042 = vpack.c.b16 %v2002, %v2001
      %v2043 = vpack.c.b16 %v2004, %v2003
      %v2044 = vpack.c.b16 %v2006, %v2005
      %v2045 = vpack.c.b16 %v2008, %v2007
      %v2046 = vpack.c.b16 %v2010, %v2009
      %v2047 = vpack.c.b16 %v2012, %v2011
      %v2048 = vpack.c.b16 %v2014, %v2013
      %v2049 = vpack.c.b16 %v2016, %v2015
      %v2050 = vpack.c.b16 %v2018, %v2017
      %v2051 = vpack.c.b16 %v2020, %v2019
      %v2052 = vpack.c.b16 %v2022, %v2021
      %v2053 = vpack.c.b16 %v2024, %v2023
      %v2054 = vpack.c.b16 %v2026, %v2025
      %v2055 = vpack.c.b16 %v2028, %v2027
      %v2056 = vpack.c.b16 %v2030, %v2029
      %v2057 = vpack.c.b16 %v2032, %v2031
      %v2058 = vpack.c.b16 %v2034, %v2033
      %2083 = vmatprep.subr.bf16.mxu0 0
      %2084 = vmatpush1.bf16.msra.mxu0 %v2035
      %2085 = vmatprep.subr.bf16.mxu0 0
      %2086 = vmatpush1.bf16.msra.mxu0 %v2036
      %2087 = vmatprep.subr.bf16.mxu0 0
      %2088 = vmatpush1.bf16.msra.mxu0 %v2037
      %2089 = vmatprep.subr.bf16.mxu0 0
      %2090 = vmatpush1.bf16.msra.mxu0 %v2038
      %2091 = vmatprep.subr.bf16.mxu0 0
      %2092 = vmatpush1.bf16.msra.mxu0 %v2039
      %2093 = vmatprep.subr.bf16.mxu0 0
      %2094 = vmatpush1.bf16.msra.mxu0 %v2040
      %2095 = vmatprep.subr.bf16.mxu0 0
      %2096 = vmatpush1.bf16.msra.mxu0 %v2041
      %2097 = vmatprep.subr.bf16.mxu0 0
      %2098 = vmatpush1.bf16.msra.mxu0 %v2042
      %2099 = vmatprep.subr.bf16.mxu0 0
      %2100 = vmatpush1.bf16.msra.mxu0 %v2043
      %2101 = vmatprep.subr.bf16.mxu0 0
      %2102 = vmatpush1.bf16.msra.mxu0 %v2044
      %2103 = vmatprep.subr.bf16.mxu0 0
      %2104 = vmatpush1.bf16.msra.mxu0 %v2045
      %2105 = vmatprep.subr.bf16.mxu0 0
      %2106 = vmatpush1.bf16.msra.mxu0 %v2046
      %2107 = vmatprep.subr.bf16.mxu0 0
      %2108 = vmatpush1.bf16.msra.mxu0 %v2047
      %2109 = vmatprep.subr.bf16.mxu0 0
      %2110 = vmatpush1.bf16.msra.mxu0 %v2048
      %2111 = vmatprep.subr.bf16.mxu0 0
      %2112 = vmatpush1.bf16.msra.mxu0 %v2049
      %2113 = vmatprep.subr.bf16.mxu0 0
      %2114 = vmatpush1.bf16.msra.mxu0 %v2050
      %2115 = vmatprep.mubr.bf16.mxu0 %v1934
      %2116 = vmatmul.mubr.bf16.gmra.mrb[0].mxu0 %v1933
      %v2117 = vpop.f32.mrb[0].mxu0
      %v2118 = vadd.f32 0.0, %v2117
      %v2119 = vpop.f32.mrb[0].mxu0
      %v2120 = vpop.f32.mrb[0].mxu0
      %v2121 = vadd.f32 0.0, %v2120
      %v2122 = vpop.f32.mrb[0].mxu0
      %2123 = vdwg.mxu0
      %2124 = vmatprep.subr.bf16.mxu0 0
      %2125 = vmatpush1.bf16.msra.mxu0 %v2051
      %2126 = vmatprep.subr.bf16.mxu0 0
      %2127 = vmatpush1.bf16.msra.mxu0 %v2052
      %2128 = vmatprep.subr.bf16.mxu0 0
      %2129 = vmatpush1.bf16.msra.mxu0 %v2053
      %2130 = vmatprep.subr.bf16.mxu0 0
      %2131 = vmatpush1.bf16.msra.mxu0 %v2054
      %2132 = vmatprep.subr.bf16.mxu0 0
      %2133 = vmatpush1.bf16.msra.mxu0 %v2055
      %2134 = vmatprep.subr.bf16.mxu0 0
      %2135 = vmatpush1.bf16.msra.mxu0 %v2056
      %2136 = vmatprep.subr.bf16.mxu0 0
      %2137 = vmatpush1.bf16.msra.mxu0 %v2057
      %2138 = vmatprep.subr.bf16.mxu0 0
      %2139 = vmatpush1.bf16.msra.mxu0 %v2058
      %2140 = vmatprep.subr.bf16.mxu0 0
      %2141 = vmatpush1.bf16.msra.mxu0 0
      %2142 = vmatprep.subr.bf16.mxu0 0
      %2143 = vmatpush1.bf16.msra.mxu0 0
      %2144 = vmatprep.subr.bf16.mxu0 0
      %2145 = vmatpush1.bf16.msra.mxu0 0
      %2146 = vmatprep.subr.bf16.mxu0 0
      %2147 = vmatpush1.bf16.msra.mxu0 0
      %2148 = vmatprep.subr.bf16.mxu0 0
      %2149 = vmatpush1.bf16.msra.mxu0 0
      %2150 = vmatprep.subr.bf16.mxu0 0
      %2151 = vmatpush1.bf16.msra.mxu0 0
      %2152 = vmatprep.subr.bf16.mxu0 0
      %2153 = vmatpush1.bf16.msra.mxu0 0
      %2154 = vmatprep.subr.bf16.mxu0 0
      %2155 = vmatpush1.bf16.msra.mxu0 0
      %2156 = vmatprep.mubr.bf16.mxu0 0
      %2157 = vmatmul.mubr.bf16.gmra.mrb[0].mxu0 %v1935
      %v2158 = vpop.f32.mrb[0].mxu0
      %v2159 = vadd.f32 %v2118, %v2158
      %v2160 = vpop.f32.mrb[0].mxu0
      %v2161 = vpop.f32.mrb[0].mxu0
      %v2162 = vadd.f32 %v2121, %v2161
      %v2163 = vpop.f32.mrb[0].mxu0
      %2164 = vdwg.mxu0
      %v2165 = vadd.f32 %v1875, %v2159
      %v2166 = vadd.f32 %v1876, %v2162
      %v2167 = vld [vmem:[%s345] sm:$0xff]
      %v2168 = vld [vmem:[%s345 + $0x8] sm:$0xf]
      %v2169 = vld [vmem:[%s345 + $0xc] sm:$0xff]
      %v2170 = vld [vmem:[%s345 + $0x14] sm:$0xf]
      %s2171 = scalar_lea.vmem %s3, 1152
      %v2172 = vld [vmem:[%s2171] sm:$0xf]
      %v2173 = vld [vmem:[%s2171 + $0x4] sm:$0xf]
      %v2174 = vld [vmem:[%s2171 + $0x8] sm:$0xf]
      %v2175 = vld [vmem:[%s2171 + $0xc] sm:$0xf]
      %v2176 = vld [vmem:[%s2171 + $0x10] sm:$0xf]
      %v2177 = vld [vmem:[%s2171 + $0x14] sm:$0xf]
      %v2178 = vld [vmem:[%s2171 + $0x18] sm:$0xf]
      %v2179 = vld [vmem:[%s2171 + $0x1c] sm:$0xf]
      %v2180 = vld [vmem:[%s2171 + $0x20] sm:$0xf]
      %v2181 = vld [vmem:[%s2171 + $0x24] sm:$0xf]
      %v2182 = vld [vmem:[%s2171 + $0x28] sm:$0xf]
      %v2183 = vld [vmem:[%s2171 + $0x2c] sm:$0xf]
      %v2184 = vld [vmem:[%s2171 + $0x30] sm:$0xf]
      %v2185 = vld [vmem:[%s2171 + $0x34] sm:$0xf]
      %v2186 = vld [vmem:[%s2171 + $0x38] sm:$0xf]
      %v2187 = vld [vmem:[%s2171 + $0x3c] sm:$0xf]
      %v2188 = vld [vmem:[%s2171 + $0x40] sm:$0xf]
      %v2189 = vld [vmem:[%s2171 + $0x44] sm:$0xf]
      %v2190 = vld [vmem:[%s2171 + $0x48] sm:$0xf]
      %v2191 = vld [vmem:[%s2171 + $0x4c] sm:$0xf]
      %v2192 = vld [vmem:[%s2171 + $0x50] sm:$0xf]
      %v2193 = vld [vmem:[%s2171 + $0x54] sm:$0xf]
      %v2194 = vld [vmem:[%s2171 + $0x58] sm:$0xf]
      %v2195 = vld [vmem:[%s2171 + $0x5c] sm:$0xf]
      %v2196 = vld [vmem:[%s2171 + $0x60] sm:$0xf]
      %v2197 = vld [vmem:[%s2171 + $0x64] sm:$0xf]
      %v2198 = vld [vmem:[%s2171 + $0x68] sm:$0xf]
      %v2199 = vld [vmem:[%s2171 + $0x6c] sm:$0xf]
      %v2200 = vld [vmem:[%s2171 + $0x70] sm:$0xf]
      %v2201 = vld [vmem:[%s2171 + $0x74] sm:$0xf]
      %v2202 = vld [vmem:[%s2171 + $0x78] sm:$0xf]
      %v2203 = vld [vmem:[%s2171 + $0x7c] sm:$0xf]
      %v2204 = vld [vmem:[%s2171 + $0x80] sm:$0xf]
      %v2205 = vld [vmem:[%s2171 + $0x84] sm:$0xf]
      %v2206 = vld [vmem:[%s2171 + $0x88] sm:$0xf]
      %v2207 = vld [vmem:[%s2171 + $0x8c] sm:$0xf]
      %v2208 = vld [vmem:[%s2171 + $0x90] sm:$0xf]
      %v2209 = vld [vmem:[%s2171 + $0x94] sm:$0xf]
      %v2210 = vld [vmem:[%s2171 + $0x98] sm:$0xf]
      %v2211 = vld [vmem:[%s2171 + $0x9c] sm:$0xf]
      %v2212 = vld [vmem:[%s2171 + $0xa0] sm:$0xf]
      %v2213 = vld [vmem:[%s2171 + $0xa4] sm:$0xf]
      %v2214 = vld [vmem:[%s2171 + $0xa8] sm:$0xf]
      %v2215 = vld [vmem:[%s2171 + $0xac] sm:$0xf]
      %v2216 = vld [vmem:[%s2171 + $0xb0] sm:$0xf]
      %v2217 = vld [vmem:[%s2171 + $0xb4] sm:$0xf]
      %v2218 = vld [vmem:[%s2171 + $0xb8] sm:$0xf]
      %v2219 = vld [vmem:[%s2171 + $0xbc] sm:$0xf]
      %v2224 = vunpack.c.l.b16 %v2167
      %v2225 = vunpack.c.h.b16 %v2167
      %v2226 = vunpack.c.l.b16 %v2168
      %v2227 = vunpack.c.l.b16 %v2169
      %v2228 = vunpack.c.h.b16 %v2169
      %v2229 = vunpack.c.l.b16 %v2170
      %v2230 = vpack.c.b16 %v2227, %v2224
      %v2231 = vpack.c.b16 %v2228, %v2225
      %v2232 = vpack.c.b16 %v2229, %v2226
      %v2284 = vunpack.c.l.b16 %v2172
      %v2285 = vunpack.c.l.b16 %v2173
      %v2286 = vunpack.c.l.b16 %v2174
      %v2287 = vunpack.c.l.b16 %v2175
      %v2288 = vunpack.c.l.b16 %v2176
      %v2289 = vunpack.c.l.b16 %v2177
      %v2290 = vunpack.c.l.b16 %v2178
      %v2291 = vunpack.c.l.b16 %v2179
      %v2292 = vunpack.c.l.b16 %v2180
      %v2293 = vunpack.c.l.b16 %v2181
      %v2294 = vunpack.c.l.b16 %v2182
      %v2295 = vunpack.c.l.b16 %v2183
      %v2296 = vunpack.c.l.b16 %v2184
      %v2297 = vunpack.c.l.b16 %v2185
      %v2298 = vunpack.c.l.b16 %v2186
      %v2299 = vunpack.c.l.b16 %v2187
      %v2300 = vunpack.c.l.b16 %v2188
      %v2301 = vunpack.c.l.b16 %v2189
      %v2302 = vunpack.c.l.b16 %v2190
      %v2303 = vunpack.c.l.b16 %v2191
      %v2304 = vunpack.c.l.b16 %v2192
      %v2305 = vunpack.c.l.b16 %v2193
      %v2306 = vunpack.c.l.b16 %v2194
      %v2307 = vunpack.c.l.b16 %v2195
      %v2308 = vunpack.c.l.b16 %v2196
      %v2309 = vunpack.c.l.b16 %v2197
      %v2310 = vunpack.c.l.b16 %v2198
      %v2311 = vunpack.c.l.b16 %v2199
      %v2312 = vunpack.c.l.b16 %v2200
      %v2313 = vunpack.c.l.b16 %v2201
      %v2314 = vunpack.c.l.b16 %v2202
      %v2315 = vunpack.c.l.b16 %v2203
      %v2316 = vunpack.c.l.b16 %v2204
      %v2317 = vunpack.c.l.b16 %v2205
      %v2318 = vunpack.c.l.b16 %v2206
      %v2319 = vunpack.c.l.b16 %v2207
      %v2320 = vunpack.c.l.b16 %v2208
      %v2321 = vunpack.c.l.b16 %v2209
      %v2322 = vunpack.c.l.b16 %v2210
      %v2323 = vunpack.c.l.b16 %v2211
      %v2324 = vunpack.c.l.b16 %v2212
      %v2325 = vunpack.c.l.b16 %v2213
      %v2326 = vunpack.c.l.b16 %v2214
      %v2327 = vunpack.c.l.b16 %v2215
      %v2328 = vunpack.c.l.b16 %v2216
      %v2329 = vunpack.c.l.b16 %v2217
      %v2330 = vunpack.c.l.b16 %v2218
      %v2331 = vunpack.c.l.b16 %v2219
      %v2332 = vpack.c.b16 %v2285, %v2284
      %v2333 = vpack.c.b16 %v2287, %v2286
      %v2334 = vpack.c.b16 %v2289, %v2288
      %v2335 = vpack.c.b16 %v2291, %v2290
      %v2336 = vpack.c.b16 %v2293, %v2292
      %v2337 = vpack.c.b16 %v2295, %v2294
      %v2338 = vpack.c.b16 %v2297, %v2296
      %v2339 = vpack.c.b16 %v2299, %v2298
      %v2340 = vpack.c.b16 %v2301, %v2300
      %v2341 = vpack.c.b16 %v2303, %v2302
      %v2342 = vpack.c.b16 %v2305, %v2304
      %v2343 = vpack.c.b16 %v2307, %v2306
      %v2344 = vpack.c.b16 %v2309, %v2308
      %v2345 = vpack.c.b16 %v2311, %v2310
      %v2346 = vpack.c.b16 %v2313, %v2312
      %v2347 = vpack.c.b16 %v2315, %v2314
      %v2348 = vpack.c.b16 %v2317, %v2316
      %v2349 = vpack.c.b16 %v2319, %v2318
      %v2350 = vpack.c.b16 %v2321, %v2320
      %v2351 = vpack.c.b16 %v2323, %v2322
      %v2352 = vpack.c.b16 %v2325, %v2324
      %v2353 = vpack.c.b16 %v2327, %v2326
      %v2354 = vpack.c.b16 %v2329, %v2328
      %v2355 = vpack.c.b16 %v2331, %v2330
      %2380 = vmatprep.subr.bf16.mxu0 0
      %2381 = vmatpush1.bf16.msra.mxu0 %v2332
      %2382 = vmatprep.subr.bf16.mxu0 0
      %2383 = vmatpush1.bf16.msra.mxu0 %v2333
      %2384 = vmatprep.subr.bf16.mxu0 0
      %2385 = vmatpush1.bf16.msra.mxu0 %v2334
      %2386 = vmatprep.subr.bf16.mxu0 0
      %2387 = vmatpush1.bf16.msra.mxu0 %v2335
      %2388 = vmatprep.subr.bf16.mxu0 0
      %2389 = vmatpush1.bf16.msra.mxu0 %v2336
      %2390 = vmatprep.subr.bf16.mxu0 0
      %2391 = vmatpush1.bf16.msra.mxu0 %v2337
      %2392 = vmatprep.subr.bf16.mxu0 0
      %2393 = vmatpush1.bf16.msra.mxu0 %v2338
      %2394 = vmatprep.subr.bf16.mxu0 0
      %2395 = vmatpush1.bf16.msra.mxu0 %v2339
      %2396 = vmatprep.subr.bf16.mxu0 0
      %2397 = vmatpush1.bf16.msra.mxu0 %v2340
      %2398 = vmatprep.subr.bf16.mxu0 0
      %2399 = vmatpush1.bf16.msra.mxu0 %v2341
      %2400 = vmatprep.subr.bf16.mxu0 0
      %2401 = vmatpush1.bf16.msra.mxu0 %v2342
      %2402 = vmatprep.subr.bf16.mxu0 0
      %2403 = vmatpush1.bf16.msra.mxu0 %v2343
      %2404 = vmatprep.subr.bf16.mxu0 0
      %2405 = vmatpush1.bf16.msra.mxu0 %v2344
      %2406 = vmatprep.subr.bf16.mxu0 0
      %2407 = vmatpush1.bf16.msra.mxu0 %v2345
      %2408 = vmatprep.subr.bf16.mxu0 0
      %2409 = vmatpush1.bf16.msra.mxu0 %v2346
      %2410 = vmatprep.subr.bf16.mxu0 0
      %2411 = vmatpush1.bf16.msra.mxu0 %v2347
      %2412 = vmatprep.mubr.bf16.mxu0 %v2231
      %2413 = vmatmul.mubr.bf16.gmra.mrb[0].mxu0 %v2230
      %v2414 = vpop.f32.mrb[0].mxu0
      %v2415 = vadd.f32 0.0, %v2414
      %v2416 = vpop.f32.mrb[0].mxu0
      %v2417 = vpop.f32.mrb[0].mxu0
      %v2418 = vadd.f32 0.0, %v2417
      %v2419 = vpop.f32.mrb[0].mxu0
      %2420 = vdwg.mxu0
      %2421 = vmatprep.subr.bf16.mxu0 0
      %2422 = vmatpush1.bf16.msra.mxu0 %v2348
      %2423 = vmatprep.subr.bf16.mxu0 0
      %2424 = vmatpush1.bf16.msra.mxu0 %v2349
      %2425 = vmatprep.subr.bf16.mxu0 0
      %2426 = vmatpush1.bf16.msra.mxu0 %v2350
      %2427 = vmatprep.subr.bf16.mxu0 0
      %2428 = vmatpush1.bf16.msra.mxu0 %v2351
      %2429 = vmatprep.subr.bf16.mxu0 0
      %2430 = vmatpush1.bf16.msra.mxu0 %v2352
      %2431 = vmatprep.subr.bf16.mxu0 0
      %2432 = vmatpush1.bf16.msra.mxu0 %v2353
      %2433 = vmatprep.subr.bf16.mxu0 0
      %2434 = vmatpush1.bf16.msra.mxu0 %v2354
      %2435 = vmatprep.subr.bf16.mxu0 0
      %2436 = vmatpush1.bf16.msra.mxu0 %v2355
      %2437 = vmatprep.subr.bf16.mxu0 0
      %2438 = vmatpush1.bf16.msra.mxu0 0
      %2439 = vmatprep.subr.bf16.mxu0 0
      %2440 = vmatpush1.bf16.msra.mxu0 0
      %2441 = vmatprep.subr.bf16.mxu0 0
      %2442 = vmatpush1.bf16.msra.mxu0 0
      %2443 = vmatprep.subr.bf16.mxu0 0
      %2444 = vmatpush1.bf16.msra.mxu0 0
      %2445 = vmatprep.subr.bf16.mxu0 0
      %2446 = vmatpush1.bf16.msra.mxu0 0
      %2447 = vmatprep.subr.bf16.mxu0 0
      %2448 = vmatpush1.bf16.msra.mxu0 0
      %2449 = vmatprep.subr.bf16.mxu0 0
      %2450 = vmatpush1.bf16.msra.mxu0 0
      %2451 = vmatprep.subr.bf16.mxu0 0
      %2452 = vmatpush1.bf16.msra.mxu0 0
      %2453 = vmatprep.mubr.bf16.mxu0 0
      %2454 = vmatmul.mubr.bf16.gmra.mrb[0].mxu0 %v2232
      %v2455 = vpop.f32.mrb[0].mxu0
      %v2456 = vadd.f32 %v2415, %v2455
      %v2457 = vpop.f32.mrb[0].mxu0
      %v2458 = vpop.f32.mrb[0].mxu0
      %v2459 = vadd.f32 %v2418, %v2458
      %v2460 = vpop.f32.mrb[0].mxu0
      %2461 = vdwg.mxu0
      %v2462 = vadd.f32 %v2165, %v2456
      %v2463 = vadd.f32 %v2166, %v2459
      %v2464 = vld [vmem:[%s345] sm:$0xcc]
      %v2465 = vld [vmem:[%s345 + $0x8] sm:$0xc]
      %v2466 = vld [vmem:[%s345 + $0xc] sm:$0xff]
      %v2467 = vld [vmem:[%s345 + $0x14] sm:$0xf]
      %v2468 = vld [vmem:[%s345 + $0x18] sm:$0x33]
      %v2469 = vld [vmem:[%s345 + $0x20] sm:$0x3]
      %s2470 = scalar_lea.vmem %s3, 1344
      %v2471 = vld [vmem:[%s2470] sm:$0xf]
      %v2472 = vld [vmem:[%s2470 + $0x4] sm:$0xf]
      %v2473 = vld [vmem:[%s2470 + $0x8] sm:$0xf]
      %v2474 = vld [vmem:[%s2470 + $0xc] sm:$0xf]
      %v2475 = vld [vmem:[%s2470 + $0x10] sm:$0xf]
      %v2476 = vld [vmem:[%s2470 + $0x14] sm:$0xf]
      %v2477 = vld [vmem:[%s2470 + $0x18] sm:$0xf]
      %v2478 = vld [vmem:[%s2470 + $0x1c] sm:$0xf]
      %v2479 = vld [vmem:[%s2470 + $0x20] sm:$0xf]
      %v2480 = vld [vmem:[%s2470 + $0x24] sm:$0xf]
      %v2481 = vld [vmem:[%s2470 + $0x28] sm:$0xf]
      %v2482 = vld [vmem:[%s2470 + $0x2c] sm:$0xf]
      %v2483 = vld [vmem:[%s2470 + $0x30] sm:$0xf]
      %v2484 = vld [vmem:[%s2470 + $0x34] sm:$0xf]
      %v2485 = vld [vmem:[%s2470 + $0x38] sm:$0xf]
      %v2486 = vld [vmem:[%s2470 + $0x3c] sm:$0xf]
      %v2487 = vld [vmem:[%s2470 + $0x40] sm:$0xf]
      %v2488 = vld [vmem:[%s2470 + $0x44] sm:$0xf]
      %v2489 = vld [vmem:[%s2470 + $0x48] sm:$0xf]
      %v2490 = vld [vmem:[%s2470 + $0x4c] sm:$0xf]
      %v2491 = vld [vmem:[%s2470 + $0x50] sm:$0xf]
      %v2492 = vld [vmem:[%s2470 + $0x54] sm:$0xf]
      %v2493 = vld [vmem:[%s2470 + $0x58] sm:$0xf]
      %v2494 = vld [vmem:[%s2470 + $0x5c] sm:$0xf]
      %v2495 = vld [vmem:[%s2470 + $0x60] sm:$0xf]
      %v2496 = vld [vmem:[%s2470 + $0x64] sm:$0xf]
      %v2497 = vld [vmem:[%s2470 + $0x68] sm:$0xf]
      %v2498 = vld [vmem:[%s2470 + $0x6c] sm:$0xf]
      %v2499 = vld [vmem:[%s2470 + $0x70] sm:$0xf]
      %v2500 = vld [vmem:[%s2470 + $0x74] sm:$0xf]
      %v2501 = vld [vmem:[%s2470 + $0x78] sm:$0xf]
      %v2502 = vld [vmem:[%s2470 + $0x7c] sm:$0xf]
      %v2503 = vld [vmem:[%s2470 + $0x80] sm:$0xf]
      %v2504 = vld [vmem:[%s2470 + $0x84] sm:$0xf]
      %v2505 = vld [vmem:[%s2470 + $0x88] sm:$0xf]
      %v2506 = vld [vmem:[%s2470 + $0x8c] sm:$0xf]
      %v2507 = vld [vmem:[%s2470 + $0x90] sm:$0xf]
      %v2508 = vld [vmem:[%s2470 + $0x94] sm:$0xf]
      %v2509 = vld [vmem:[%s2470 + $0x98] sm:$0xf]
      %v2510 = vld [vmem:[%s2470 + $0x9c] sm:$0xf]
      %v2511 = vld [vmem:[%s2470 + $0xa0] sm:$0xf]
      %v2512 = vld [vmem:[%s2470 + $0xa4] sm:$0xf]
      %v2513 = vld [vmem:[%s2470 + $0xa8] sm:$0xf]
      %v2514 = vld [vmem:[%s2470 + $0xac] sm:$0xf]
      %v2515 = vld [vmem:[%s2470 + $0xb0] sm:$0xf]
      %v2516 = vld [vmem:[%s2470 + $0xb4] sm:$0xf]
      %v2517 = vld [vmem:[%s2470 + $0xb8] sm:$0xf]
      %v2518 = vld [vmem:[%s2470 + $0xbc] sm:$0xf]
      %v2525 = vunpack.c.l.b16 %v2464
      %v2526 = vunpack.c.h.b16 %v2464
      %v2527 = vunpack.c.l.b16 %v2465
      %v2528 = vunpack.c.l.b16 %v2466
      %v2529 = vunpack.c.h.b16 %v2466
      %v2530 = vunpack.c.l.b16 %v2467
      %v2531 = vunpack.c.l.b16 %v2468
      %v2532 = vunpack.c.h.b16 %v2468
      %v2533 = vunpack.c.l.b16 %v2469
      %v2534 = vpack.c.b16 %v2528, %v2525
      %v2535 = vpack.c.b16 %v2529, %v2526
      %v2536 = vpack.c.b16 %v2530, %v2527
      %v2537 = vpack.c.b16 %v2531, %v2531
      %v2538 = vpack.c.b16 %v2532, %v2532
      %v2539 = vpack.c.b16 %v2533, %v2533
      %v2540 = vrot.slane %v2534, 2
      %v2541 = vrot.slane %v2537, 2
      %v2542 = vsel %vm493, %v2540, %v2541
      %v2543 = vrot.slane %v2535, 2
      %v2544 = vrot.slane %v2538, 2
      %v2545 = vsel %vm493, %v2543, %v2544
      %v2546 = vrot.slane %v2536, 2
      %v2547 = vrot.slane %v2539, 2
      %v2548 = vsel %vm493, %v2546, %v2547
      %v2600 = vunpack.c.l.b16 %v2471
      %v2601 = vunpack.c.l.b16 %v2472
      %v2602 = vunpack.c.l.b16 %v2473
      %v2603 = vunpack.c.l.b16 %v2474
      %v2604 = vunpack.c.l.b16 %v2475
      %v2605 = vunpack.c.l.b16 %v2476
      %v2606 = vunpack.c.l.b16 %v2477
      %v2607 = vunpack.c.l.b16 %v2478
      %v2608 = vunpack.c.l.b16 %v2479
      %v2609 = vunpack.c.l.b16 %v2480
      %v2610 = vunpack.c.l.b16 %v2481
      %v2611 = vunpack.c.l.b16 %v2482
      %v2612 = vunpack.c.l.b16 %v2483
      %v2613 = vunpack.c.l.b16 %v2484
      %v2614 = vunpack.c.l.b16 %v2485
      %v2615 = vunpack.c.l.b16 %v2486
      %v2616 = vunpack.c.l.b16 %v2487
      %v2617 = vunpack.c.l.b16 %v2488
      %v2618 = vunpack.c.l.b16 %v2489
      %v2619 = vunpack.c.l.b16 %v2490
      %v2620 = vunpack.c.l.b16 %v2491
      %v2621 = vunpack.c.l.b16 %v2492
      %v2622 = vunpack.c.l.b16 %v2493
      %v2623 = vunpack.c.l.b16 %v2494
      %v2624 = vunpack.c.l.b16 %v2495
      %v2625 = vunpack.c.l.b16 %v2496
      %v2626 = vunpack.c.l.b16 %v2497
      %v2627 = vunpack.c.l.b16 %v2498
      %v2628 = vunpack.c.l.b16 %v2499
      %v2629 = vunpack.c.l.b16 %v2500
      %v2630 = vunpack.c.l.b16 %v2501
      %v2631 = vunpack.c.l.b16 %v2502
      %v2632 = vunpack.c.l.b16 %v2503
      %v2633 = vunpack.c.l.b16 %v2504
      %v2634 = vunpack.c.l.b16 %v2505
      %v2635 = vunpack.c.l.b16 %v2506
      %v2636 = vunpack.c.l.b16 %v2507
      %v2637 = vunpack.c.l.b16 %v2508
      %v2638 = vunpack.c.l.b16 %v2509
      %v2639 = vunpack.c.l.b16 %v2510
      %v2640 = vunpack.c.l.b16 %v2511
      %v2641 = vunpack.c.l.b16 %v2512
      %v2642 = vunpack.c.l.b16 %v2513
      %v2643 = vunpack.c.l.b16 %v2514
      %v2644 = vunpack.c.l.b16 %v2515
      %v2645 = vunpack.c.l.b16 %v2516
      %v2646 = vunpack.c.l.b16 %v2517
      %v2647 = vunpack.c.l.b16 %v2518
      %v2648 = vpack.c.b16 %v2601, %v2600
      %v2649 = vpack.c.b16 %v2603, %v2602
      %v2650 = vpack.c.b16 %v2605, %v2604
      %v2651 = vpack.c.b16 %v2607, %v2606
      %v2652 = vpack.c.b16 %v2609, %v2608
      %v2653 = vpack.c.b16 %v2611, %v2610
      %v2654 = vpack.c.b16 %v2613, %v2612
      %v2655 = vpack.c.b16 %v2615, %v2614
      %v2656 = vpack.c.b16 %v2617, %v2616
      %v2657 = vpack.c.b16 %v2619, %v2618
      %v2658 = vpack.c.b16 %v2621, %v2620
      %v2659 = vpack.c.b16 %v2623, %v2622
      %v2660 = vpack.c.b16 %v2625, %v2624
      %v2661 = vpack.c.b16 %v2627, %v2626
      %v2662 = vpack.c.b16 %v2629, %v2628
      %v2663 = vpack.c.b16 %v2631, %v2630
      %v2664 = vpack.c.b16 %v2633, %v2632
      %v2665 = vpack.c.b16 %v2635, %v2634
      %v2666 = vpack.c.b16 %v2637, %v2636
      %v2667 = vpack.c.b16 %v2639, %v2638
      %v2668 = vpack.c.b16 %v2641, %v2640
      %v2669 = vpack.c.b16 %v2643, %v2642
      %v2670 = vpack.c.b16 %v2645, %v2644
      %v2671 = vpack.c.b16 %v2647, %v2646
      %2696 = vmatprep.subr.bf16.mxu0 0
      %2697 = vmatpush1.bf16.msra.mxu0 %v2648
      %2698 = vmatprep.subr.bf16.mxu0 0
      %2699 = vmatpush1.bf16.msra.mxu0 %v2649
      %2700 = vmatprep.subr.bf16.mxu0 0
      %2701 = vmatpush1.bf16.msra.mxu0 %v2650
      %2702 = vmatprep.subr.bf16.mxu0 0
      %2703 = vmatpush1.bf16.msra.mxu0 %v2651
      %2704 = vmatprep.subr.bf16.mxu0 0
      %2705 = vmatpush1.bf16.msra.mxu0 %v2652
      %2706 = vmatprep.subr.bf16.mxu0 0
      %2707 = vmatpush1.bf16.msra.mxu0 %v2653
      %2708 = vmatprep.subr.bf16.mxu0 0
      %2709 = vmatpush1.bf16.msra.mxu0 %v2654
      %2710 = vmatprep.subr.bf16.mxu0 0
      %2711 = vmatpush1.bf16.msra.mxu0 %v2655
      %2712 = vmatprep.subr.bf16.mxu0 0
      %2713 = vmatpush1.bf16.msra.mxu0 %v2656
      %2714 = vmatprep.subr.bf16.mxu0 0
      %2715 = vmatpush1.bf16.msra.mxu0 %v2657
      %2716 = vmatprep.subr.bf16.mxu0 0
      %2717 = vmatpush1.bf16.msra.mxu0 %v2658
      %2718 = vmatprep.subr.bf16.mxu0 0
      %2719 = vmatpush1.bf16.msra.mxu0 %v2659
      %2720 = vmatprep.subr.bf16.mxu0 0
      %2721 = vmatpush1.bf16.msra.mxu0 %v2660
      %2722 = vmatprep.subr.bf16.mxu0 0
      %2723 = vmatpush1.bf16.msra.mxu0 %v2661
      %2724 = vmatprep.subr.bf16.mxu0 0
      %2725 = vmatpush1.bf16.msra.mxu0 %v2662
      %2726 = vmatprep.subr.bf16.mxu0 0
      %2727 = vmatpush1.bf16.msra.mxu0 %v2663
      %2728 = vmatprep.mubr.bf16.mxu0 %v2545
      %2729 = vmatmul.mubr.bf16.gmra.mrb[0].mxu0 %v2542
      %v2730 = vpop.f32.mrb[0].mxu0
      %v2731 = vadd.f32 0.0, %v2730
      %v2732 = vpop.f32.mrb[0].mxu0
      %v2733 = vpop.f32.mrb[0].mxu0
      %v2734 = vadd.f32 0.0, %v2733
      %v2735 = vpop.f32.mrb[0].mxu0
      %2736 = vdwg.mxu0
      %2737 = vmatprep.subr.bf16.mxu0 0
      %2738 = vmatpush1.bf16.msra.mxu0 %v2664
      %2739 = vmatprep.subr.bf16.mxu0 0
      %2740 = vmatpush1.bf16.msra.mxu0 %v2665
      %2741 = vmatprep.subr.bf16.mxu0 0
      %2742 = vmatpush1.bf16.msra.mxu0 %v2666
      %2743 = vmatprep.subr.bf16.mxu0 0
      %2744 = vmatpush1.bf16.msra.mxu0 %v2667
      %2745 = vmatprep.subr.bf16.mxu0 0
      %2746 = vmatpush1.bf16.msra.mxu0 %v2668
      %2747 = vmatprep.subr.bf16.mxu0 0
      %2748 = vmatpush1.bf16.msra.mxu0 %v2669
      %2749 = vmatprep.subr.bf16.mxu0 0
      %2750 = vmatpush1.bf16.msra.mxu0 %v2670
      %2751 = vmatprep.subr.bf16.mxu0 0
      %2752 = vmatpush1.bf16.msra.mxu0 %v2671
      %2753 = vmatprep.subr.bf16.mxu0 0
      %2754 = vmatpush1.bf16.msra.mxu0 0
      %2755 = vmatprep.subr.bf16.mxu0 0
      %2756 = vmatpush1.bf16.msra.mxu0 0
      %2757 = vmatprep.subr.bf16.mxu0 0
      %2758 = vmatpush1.bf16.msra.mxu0 0
      %2759 = vmatprep.subr.bf16.mxu0 0
      %2760 = vmatpush1.bf16.msra.mxu0 0
      %2761 = vmatprep.subr.bf16.mxu0 0
      %2762 = vmatpush1.bf16.msra.mxu0 0
      %2763 = vmatprep.subr.bf16.mxu0 0
      %2764 = vmatpush1.bf16.msra.mxu0 0
      %2765 = vmatprep.subr.bf16.mxu0 0
      %2766 = vmatpush1.bf16.msra.mxu0 0
      %2767 = vmatprep.subr.bf16.mxu0 0
      %2768 = vmatpush1.bf16.msra.mxu0 0
      %2769 = vmatprep.mubr.bf16.mxu0 0
      %2770 = vmatmul.mubr.bf16.gmra.mrb[0].mxu0 %v2548
      %v2771 = vpop.f32.mrb[0].mxu0
      %v2772 = vadd.f32 %v2731, %v2771
      %v2773 = vpop.f32.mrb[0].mxu0
      %v2774 = vpop.f32.mrb[0].mxu0
      %v2775 = vadd.f32 %v2734, %v2774
      %v2776 = vpop.f32.mrb[0].mxu0
      %2777 = vdwg.mxu0
      %v2778 = vadd.f32 %v2462, %v2772
      %v2779 = vadd.f32 %v2463, %v2775
      %v2780 = vld [vmem:[%s345 + $0x18] sm:$0xff]
      %v2781 = vld [vmem:[%s345 + $0x20] sm:$0xf]
      %s2782 = scalar_lea.vmem %s3, 1536
      %v2783 = vld [vmem:[%s2782] sm:$0xf]
      %v2784 = vld [vmem:[%s2782 + $0x4] sm:$0xf]
      %v2785 = vld [vmem:[%s2782 + $0x8] sm:$0xf]
      %v2786 = vld [vmem:[%s2782 + $0xc] sm:$0xf]
      %v2787 = vld [vmem:[%s2782 + $0x10] sm:$0xf]
      %v2788 = vld [vmem:[%s2782 + $0x14] sm:$0xf]
      %v2789 = vld [vmem:[%s2782 + $0x18] sm:$0xf]
      %v2790 = vld [vmem:[%s2782 + $0x1c] sm:$0xf]
      %v2791 = vld [vmem:[%s2782 + $0x20] sm:$0xf]
      %v2792 = vld [vmem:[%s2782 + $0x24] sm:$0xf]
      %v2793 = vld [vmem:[%s2782 + $0x28] sm:$0xf]
      %v2794 = vld [vmem:[%s2782 + $0x2c] sm:$0xf]
      %v2795 = vld [vmem:[%s2782 + $0x30] sm:$0xf]
      %v2796 = vld [vmem:[%s2782 + $0x34] sm:$0xf]
      %v2797 = vld [vmem:[%s2782 + $0x38] sm:$0xf]
      %v2798 = vld [vmem:[%s2782 + $0x3c] sm:$0xf]
      %v2799 = vld [vmem:[%s2782 + $0x40] sm:$0xf]
      %v2800 = vld [vmem:[%s2782 + $0x44] sm:$0xf]
      %v2801 = vld [vmem:[%s2782 + $0x48] sm:$0xf]
      %v2802 = vld [vmem:[%s2782 + $0x4c] sm:$0xf]
      %v2803 = vld [vmem:[%s2782 + $0x50] sm:$0xf]
      %v2804 = vld [vmem:[%s2782 + $0x54] sm:$0xf]
      %v2805 = vld [vmem:[%s2782 + $0x58] sm:$0xf]
      %v2806 = vld [vmem:[%s2782 + $0x5c] sm:$0xf]
      %v2807 = vld [vmem:[%s2782 + $0x60] sm:$0xf]
      %v2808 = vld [vmem:[%s2782 + $0x64] sm:$0xf]
      %v2809 = vld [vmem:[%s2782 + $0x68] sm:$0xf]
      %v2810 = vld [vmem:[%s2782 + $0x6c] sm:$0xf]
      %v2811 = vld [vmem:[%s2782 + $0x70] sm:$0xf]
      %v2812 = vld [vmem:[%s2782 + $0x74] sm:$0xf]
      %v2813 = vld [vmem:[%s2782 + $0x78] sm:$0xf]
      %v2814 = vld [vmem:[%s2782 + $0x7c] sm:$0xf]
      %v2815 = vld [vmem:[%s2782 + $0x80] sm:$0xf]
      %v2816 = vld [vmem:[%s2782 + $0x84] sm:$0xf]
      %v2817 = vld [vmem:[%s2782 + $0x88] sm:$0xf]
      %v2818 = vld [vmem:[%s2782 + $0x8c] sm:$0xf]
      %v2819 = vld [vmem:[%s2782 + $0x90] sm:$0xf]
      %v2820 = vld [vmem:[%s2782 + $0x94] sm:$0xf]
      %v2821 = vld [vmem:[%s2782 + $0x98] sm:$0xf]
      %v2822 = vld [vmem:[%s2782 + $0x9c] sm:$0xf]
      %v2823 = vld [vmem:[%s2782 + $0xa0] sm:$0xf]
      %v2824 = vld [vmem:[%s2782 + $0xa4] sm:$0xf]
      %v2825 = vld [vmem:[%s2782 + $0xa8] sm:$0xf]
      %v2826 = vld [vmem:[%s2782 + $0xac] sm:$0xf]
      %v2827 = vld [vmem:[%s2782 + $0xb0] sm:$0xf]
      %v2828 = vld [vmem:[%s2782 + $0xb4] sm:$0xf]
      %v2829 = vld [vmem:[%s2782 + $0xb8] sm:$0xf]
      %v2830 = vld [vmem:[%s2782 + $0xbc] sm:$0xf]
      %v2833 = vunpack.c.l.b16 %v2780
      %v2834 = vunpack.c.h.b16 %v2780
      %v2835 = vunpack.c.l.b16 %v2781
      %v2836 = vpack.c.b16 %v2833, %v2528
      %v2837 = vpack.c.b16 %v2834, %v2529
      %v2838 = vpack.c.b16 %v2835, %v2530
      %v2890 = vunpack.c.l.b16 %v2783
      %v2891 = vunpack.c.l.b16 %v2784
      %v2892 = vunpack.c.l.b16 %v2785
      %v2893 = vunpack.c.l.b16 %v2786
      %v2894 = vunpack.c.l.b16 %v2787
      %v2895 = vunpack.c.l.b16 %v2788
      %v2896 = vunpack.c.l.b16 %v2789
      %v2897 = vunpack.c.l.b16 %v2790
      %v2898 = vunpack.c.l.b16 %v2791
      %v2899 = vunpack.c.l.b16 %v2792
      %v2900 = vunpack.c.l.b16 %v2793
      %v2901 = vunpack.c.l.b16 %v2794
      %v2902 = vunpack.c.l.b16 %v2795
      %v2903 = vunpack.c.l.b16 %v2796
      %v2904 = vunpack.c.l.b16 %v2797
      %v2905 = vunpack.c.l.b16 %v2798
      %v2906 = vunpack.c.l.b16 %v2799
      %v2907 = vunpack.c.l.b16 %v2800
      %v2908 = vunpack.c.l.b16 %v2801
      %v2909 = vunpack.c.l.b16 %v2802
      %v2910 = vunpack.c.l.b16 %v2803
      %v2911 = vunpack.c.l.b16 %v2804
      %v2912 = vunpack.c.l.b16 %v2805
      %v2913 = vunpack.c.l.b16 %v2806
      %v2914 = vunpack.c.l.b16 %v2807
      %v2915 = vunpack.c.l.b16 %v2808
      %v2916 = vunpack.c.l.b16 %v2809
      %v2917 = vunpack.c.l.b16 %v2810
      %v2918 = vunpack.c.l.b16 %v2811
      %v2919 = vunpack.c.l.b16 %v2812
      %v2920 = vunpack.c.l.b16 %v2813
      %v2921 = vunpack.c.l.b16 %v2814
      %v2922 = vunpack.c.l.b16 %v2815
      %v2923 = vunpack.c.l.b16 %v2816
      %v2924 = vunpack.c.l.b16 %v2817
      %v2925 = vunpack.c.l.b16 %v2818
      %v2926 = vunpack.c.l.b16 %v2819
      %v2927 = vunpack.c.l.b16 %v2820
      %v2928 = vunpack.c.l.b16 %v2821
      %v2929 = vunpack.c.l.b16 %v2822
      %v2930 = vunpack.c.l.b16 %v2823
      %v2931 = vunpack.c.l.b16 %v2824
      %v2932 = vunpack.c.l.b16 %v2825
      %v2933 = vunpack.c.l.b16 %v2826
      %v2934 = vunpack.c.l.b16 %v2827
      %v2935 = vunpack.c.l.b16 %v2828
      %v2936 = vunpack.c.l.b16 %v2829
      %v2937 = vunpack.c.l.b16 %v2830
      %v2938 = vpack.c.b16 %v2891, %v2890
      %v2939 = vpack.c.b16 %v2893, %v2892
      %v2940 = vpack.c.b16 %v2895, %v2894
      %v2941 = vpack.c.b16 %v2897, %v2896
      %v2942 = vpack.c.b16 %v2899, %v2898
      %v2943 = vpack.c.b16 %v2901, %v2900
      %v2944 = vpack.c.b16 %v2903, %v2902
      %v2945 = vpack.c.b16 %v2905, %v2904
      %v2946 = vpack.c.b16 %v2907, %v2906
      %v2947 = vpack.c.b16 %v2909, %v2908
      %v2948 = vpack.c.b16 %v2911, %v2910
      %v2949 = vpack.c.b16 %v2913, %v2912
      %v2950 = vpack.c.b16 %v2915, %v2914
      %v2951 = vpack.c.b16 %v2917, %v2916
      %v2952 = vpack.c.b16 %v2919, %v2918
      %v2953 = vpack.c.b16 %v2921, %v2920
      %v2954 = vpack.c.b16 %v2923, %v2922
      %v2955 = vpack.c.b16 %v2925, %v2924
      %v2956 = vpack.c.b16 %v2927, %v2926
      %v2957 = vpack.c.b16 %v2929, %v2928
      %v2958 = vpack.c.b16 %v2931, %v2930
      %v2959 = vpack.c.b16 %v2933, %v2932
      %v2960 = vpack.c.b16 %v2935, %v2934
      %v2961 = vpack.c.b16 %v2937, %v2936
      %2986 = vmatprep.subr.bf16.mxu0 0
      %2987 = vmatpush1.bf16.msra.mxu0 %v2938
      %2988 = vmatprep.subr.bf16.mxu0 0
      %2989 = vmatpush1.bf16.msra.mxu0 %v2939
      %2990 = vmatprep.subr.bf16.mxu0 0
      %2991 = vmatpush1.bf16.msra.mxu0 %v2940
      %2992 = vmatprep.subr.bf16.mxu0 0
      %2993 = vmatpush1.bf16.msra.mxu0 %v2941
      %2994 = vmatprep.subr.bf16.mxu0 0
      %2995 = vmatpush1.bf16.msra.mxu0 %v2942
      %2996 = vmatprep.subr.bf16.mxu0 0
      %2997 = vmatpush1.bf16.msra.mxu0 %v2943
      %2998 = vmatprep.subr.bf16.mxu0 0
      %2999 = vmatpush1.bf16.msra.mxu0 %v2944
      %3000 = vmatprep.subr.bf16.mxu0 0
      %3001 = vmatpush1.bf16.msra.mxu0 %v2945
      %3002 = vmatprep.subr.bf16.mxu0 0
      %3003 = vmatpush1.bf16.msra.mxu0 %v2946
      %3004 = vmatprep.subr.bf16.mxu0 0
      %3005 = vmatpush1.bf16.msra.mxu0 %v2947
      %3006 = vmatprep.subr.bf16.mxu0 0
      %3007 = vmatpush1.bf16.msra.mxu0 %v2948
      %3008 = vmatprep.subr.bf16.mxu0 0
      %3009 = vmatpush1.bf16.msra.mxu0 %v2949
      %3010 = vmatprep.subr.bf16.mxu0 0
      %3011 = vmatpush1.bf16.msra.mxu0 %v2950
      %3012 = vmatprep.subr.bf16.mxu0 0
      %3013 = vmatpush1.bf16.msra.mxu0 %v2951
      %3014 = vmatprep.subr.bf16.mxu0 0
      %3015 = vmatpush1.bf16.msra.mxu0 %v2952
      %3016 = vmatprep.subr.bf16.mxu0 0
      %3017 = vmatpush1.bf16.msra.mxu0 %v2953
      %3018 = vmatprep.mubr.bf16.mxu0 %v2837
      %3019 = vmatmul.mubr.bf16.gmra.mrb[0].mxu0 %v2836
      %v3020 = vpop.f32.mrb[0].mxu0
      %v3021 = vadd.f32 0.0, %v3020
      %v3022 = vpop.f32.mrb[0].mxu0
      %v3023 = vpop.f32.mrb[0].mxu0
      %v3024 = vadd.f32 0.0, %v3023
      %v3025 = vpop.f32.mrb[0].mxu0
      %3026 = vdwg.mxu0
      %3027 = vmatprep.subr.bf16.mxu0 0
      %3028 = vmatpush1.bf16.msra.mxu0 %v2954
      %3029 = vmatprep.subr.bf16.mxu0 0
      %3030 = vmatpush1.bf16.msra.mxu0 %v2955
      %3031 = vmatprep.subr.bf16.mxu0 0
      %3032 = vmatpush1.bf16.msra.mxu0 %v2956
      %3033 = vmatprep.subr.bf16.mxu0 0
      %3034 = vmatpush1.bf16.msra.mxu0 %v2957
      %3035 = vmatprep.subr.bf16.mxu0 0
      %3036 = vmatpush1.bf16.msra.mxu0 %v2958
      %3037 = vmatprep.subr.bf16.mxu0 0
      %3038 = vmatpush1.bf16.msra.mxu0 %v2959
      %3039 = vmatprep.subr.bf16.mxu0 0
      %3040 = vmatpush1.bf16.msra.mxu0 %v2960
      %3041 = vmatprep.subr.bf16.mxu0 0
      %3042 = vmatpush1.bf16.msra.mxu0 %v2961
      %3043 = vmatprep.subr.bf16.mxu0 0
      %3044 = vmatpush1.bf16.msra.mxu0 0
      %3045 = vmatprep.subr.bf16.mxu0 0
      %3046 = vmatpush1.bf16.msra.mxu0 0
      %3047 = vmatprep.subr.bf16.mxu0 0
      %3048 = vmatpush1.bf16.msra.mxu0 0
      %3049 = vmatprep.subr.bf16.mxu0 0
      %3050 = vmatpush1.bf16.msra.mxu0 0
      %3051 = vmatprep.subr.bf16.mxu0 0
      %3052 = vmatpush1.bf16.msra.mxu0 0
      %3053 = vmatprep.subr.bf16.mxu0 0
      %3054 = vmatpush1.bf16.msra.mxu0 0
      %3055 = vmatprep.subr.bf16.mxu0 0
      %3056 = vmatpush1.bf16.msra.mxu0 0
      %3057 = vmatprep.subr.bf16.mxu0 0
      %3058 = vmatpush1.bf16.msra.mxu0 0
      %3059 = vmatprep.mubr.bf16.mxu0 0
      %3060 = vmatmul.mubr.bf16.gmra.mrb[0].mxu0 %v2838
      %v3061 = vpop.f32.mrb[0].mxu0
      %v3062 = vadd.f32 %v3021, %v3061
      %v3063 = vpop.f32.mrb[0].mxu0
      %v3064 = vpop.f32.mrb[0].mxu0
      %v3065 = vadd.f32 %v3024, %v3064
      %v3066 = vpop.f32.mrb[0].mxu0
      %3067 = vdwg.mxu0
      %v3068 = vadd.f32 %v2778, %v3062
      %v3069 = vadd.f32 %v2779, %v3065
      %v3070 = vpack.c.bf16 %v3069, %v3068
      %v3072 = vunpack.c.l.b16 %v3070
      %v3073 = vunpack.c.h.b16 %v3070
      %v3074 = vpack.c.b16 %v3072, %v3072
      %v3075 = vpack.c.b16 %v3073, %v3073
      %3078 = vst [vmem:[%s355] sm:$0xf] %v3074
      %3079 = vst [vmem:[%s355 + $0x4] sm:$0xf] %v3075
      %v3080 = vadd.f32 %v3068, %v3069
      %v3081 = vrot.slane %v3080, 4
      %v3082 = vadd.f32 %v3080, %v3081
      %v3083 = vrot.slane %v3082, 2
      %v3084 = vadd.f32 %v3082, %v3083
      %v3085 = vrot.slane %v3084, 1
      %v3086 = vadd.f32 %v3084, %v3085
      %3087 = vst [vmem:[%s363] sm:$0x1] %v3086
      %v3088 = vmul.f32 %v3068, %v3068
      %v3089 = vmul.f32 %v3069, %v3069
      %v3090 = vadd.f32 %v3088, %v3089
      %v3091 = vrot.slane %v3090, 4
      %v3092 = vadd.f32 %v3090, %v3091
      %v3093 = vrot.slane %v3092, 2
      %v3094 = vadd.f32 %v3092, %v3093
      %v3095 = vrot.slane %v3094, 1
      %v3096 = vadd.f32 %v3094, %v3095
      %3097 = vst [vmem:[%s363 + $0x1] sm:$0x1] %v3096
      %p3098 = scmp.lt.s32.totalorder %s21, 1
      %s3099 = scalar_select %p3098, %s21, 1
      %p3100 = scmp.lt.s32.totalorder %s22, 3
      %s3101 = scalar_select %p3100, %s22, 3
      %s3102 = smul.addr %s3101, 2
      %s3103 = smul.addr %s3099, 8
      %s3104 = sadd.s32 %s3102, %s3103
      %s3105 = smul.addr %s3104, 4
      %s3106 = scalar_lea.vmem %s4, %s3105
      %p3107 = scmp.lt.s32.totalorder %s21, 1
      %s3108 = scalar_select %p3107, %s21, 1
      %p3109 = scmp.lt.s32.totalorder %s22, 3
      %s3110 = scalar_select %p3109, %s22, 3
      %s3111 = smul.addr %s3108, 4
      %s3112 = sadd.s32 %s3110, %s3111
      %s3113 = smul.addr %s3112, 2
      %s3114 = scalar_lea.vmem %s5, %s3113
      // Predicated region
      $region37: #{resblock_forward.10} parent=35 // pred_check
        %p3115 = pneg %p158
      $region38: #{resblock_forward.10} parent=35 // pred_check_branch
        %3117 = sbr.rel (%p3115) target = $region40
      $region39: #{resblock_forward.10} parent=35 // pred_region
        _
      $region40: #{resblock_forward.10} parent=35 // pred_fallthru
        _
      // Predicated region
      $region41: #{resblock_forward.10} parent=35 // pred_check
        %p3118 = pneg %p186
      $region42: #{resblock_forward.10} parent=35 // pred_check_branch
        %3120 = sbr.rel (%p3118) target = $region44
      $region43: #{resblock_forward.10} parent=35 // pred_region
        _
      $region44: #{resblock_forward.10} parent=35 // pred_fallthru
        _
    $region36: #{resblock_forward.10} parent=5 // pred_fallthru
      _
    %p3121 = scmp.le.s32.totalorder 2, %s12
    // Predicated region
    $region45: #{resblock_forward.10} parent=5 // pred_check
      %p3122 = pneg %p3121
    $region46: #{resblock_forward.10} parent=5 // pred_check_branch
      %3124 = sbr.rel (%p3122) target = $region48
    $region47: #{resblock_forward.10} parent=5 // pred_region
      %s3125 = ssub.s32 %s12, 2
      // Predicated region
      $region49: #{resblock_forward.10} parent=47 // pred_check
        %p3126 = pneg %p164
      $region50: #{resblock_forward.10} parent=47 // pred_check_branch
        %3128 = sbr.rel (%p3126) target = $region52
      $region51: #{resblock_forward.10} parent=47 // pred_region
        %p3129 = scmp.lt.s32.totalorder %s23, 1
        %s3130 = scalar_select %p3129, %s23, 1
        %p3131 = scmp.lt.s32.totalorder %s24, 3
        %s3132 = scalar_select %p3131, %s24, 3
        %s3133 = smul.addr %s3132, 2
        %s3134 = smul.addr %s3130, 8
        %s3135 = sadd.s32 %s3133, %s3134
        %s3136 = smul.addr %s3135, 4
        %s3137 = scalar_lea.vmem %s4, %s3136
      $region52: #{resblock_forward.10} parent=47 // pred_fallthru
        _
      // Predicated region
      $region53: #{resblock_forward.10} parent=47 // pred_check
        %p3138 = pneg %p192
      $region54: #{resblock_forward.10} parent=47 // pred_check_branch
        %3140 = sbr.rel (%p3138) target = $region56
      $region55: #{resblock_forward.10} parent=47 // pred_region
        %p3141 = scmp.lt.s32.totalorder %s23, 1
        %s3142 = scalar_select %p3141, %s23, 1
        %p3143 = scmp.lt.s32.totalorder %s24, 3
        %s3144 = scalar_select %p3143, %s24, 3
        %s3145 = smul.addr %s3142, 4
        %s3146 = sadd.s32 %s3144, %s3145
        %s3147 = smul.addr %s3146, 2
        %s3148 = scalar_lea.vmem %s5, %s3147
      $region56: #{resblock_forward.10} parent=47 // pred_fallthru
        _
    $region48: #{resblock_forward.10} parent=5 // pred_fallthru
      _
  $region6: #{resblock_forward.10} parent=0 // loop_footer
    %s16 = sadd.s32 1, %s12
  $region7: #{resblock_forward.10} parent=0 // loop_footer_branch
    %11 = sbr.rel target = $region3
  $region8: #{resblock_forward.10} parent=0 // loop_exit
    _

</llo_original>
